<compile_context>
chip_gen: v5e
topology: v5e:2x2
jax: 0.10.0
libtpu: 0.0.40
codegen_flags: <defaults>
</compile_context>

<pallas_src>
import functools

import jax
import jax.numpy as jnp
from jax.experimental import pallas as pl
from jax.experimental.pallas import tpu as pltpu


@functools.lru_cache(maxsize=None)
def _vmem_limit():
    # Generation-aware scoped-VMEM cap: ~75% of physical (96 MiB on v5e/v6e, ~48 MiB on v7x).
    try:
        cap = getattr(pltpu.get_tpu_info(), "vmem_capacity_bytes", None)
        if cap:
            return max(32 << 20, min(int(cap) * 3 // 4, 96 << 20))
    except Exception:
        pass
    return 48 << 20  # safe on every generation


def _cparams(dims):
    return pltpu.CompilerParams(dimension_semantics=dims,
                                vmem_limit_bytes=_vmem_limit())


def _tile_sub(dim, pref):
    # sublane-axis tile: multiple of 8 that divides dim, else the full extent
    for t in (pref, 1024, 512, 256, 128, 64, 32, 16, 8):
        if t <= dim and dim % t == 0:
            return t
    return dim


def _tile_lane(dim, pref):
    # lane-axis tile: multiple of 128 that divides dim, else the full extent
    for t in (pref, 2048, 1024, 512, 256, 128):
        if t <= dim and dim % t == 0:
            return t
    return dim


# ------------------ fused RMSNorm + QKV projection + bias + RoPE ------------------

def _rmsnorm_qkv_rope_kernel(x_ref, g_ref, wq_ref, wk_ref, wv_ref,
                             bq_ref, bk_ref, bv_ref, cos_ref, sin_ref,
                             q_ref, k_ref, v_ref, *, eps, num_heads, scale):
    x = x_ref[...]                                              # (tm, D) f32
    ms = jnp.mean(x * x, axis=-1, keepdims=True)
    h = (x * jax.lax.rsqrt(ms + eps) * g_ref[...]).astype(jnp.bfloat16)

    q = jnp.dot(h, wq_ref[...], preferred_element_type=jnp.float32) + bq_ref[...]
    k = jnp.dot(h, wk_ref[...], preferred_element_type=jnp.float32) + bk_ref[...]
    v = jnp.dot(h, wv_ref[...], preferred_element_type=jnp.float32) + bv_ref[...]

    cos = cos_ref[...]                                          # (tm, hd) f32
    sin = sin_ref[...]                                          # (tm, hd) f32, sign folded
    D = q.shape[-1]
    hd = D // num_heads
    half = hd // 2

    q_heads, k_heads = [], []
    for hh in range(num_heads):
        sl = slice(hh * hd, (hh + 1) * hd)
        qh, kh = q[:, sl], k[:, sl]
        # rotate_half(t) = concat(-t[half:], t[:half]); the -1 lives in sin_signed.
        q_ri = jnp.concatenate([qh[:, half:], qh[:, :half]], axis=-1)
        k_ri = jnp.concatenate([kh[:, half:], kh[:, :half]], axis=-1)
        q_heads.append(qh * cos + q_ri * sin)
        k_heads.append(kh * cos + k_ri * sin)

    # 1/sqrt(hd) softmax scale folded into q here, once per token.
    q_ref[...] = (jnp.concatenate(q_heads, axis=-1) * scale).astype(q_ref.dtype)
    k_ref[...] = jnp.concatenate(k_heads, axis=-1).astype(k_ref.dtype)
    v_ref[...] = v.astype(v_ref.dtype)


def rmsnorm_qkv_rope(x2d, gamma, wq, wk, wv, bq, bk, bv, cos_m, sin_m,
                     num_heads, eps=1e-8):
    M, D = x2d.shape
    hd = D // num_heads
    tm = _tile_sub(M, 512)
    grid = (M // tm,)
    row = pl.BlockSpec((tm, D), lambda i: (i, 0))
    wfull = pl.BlockSpec((D, D), lambda i: (0, 0))      # constant index -> loaded once
    vec = pl.BlockSpec((1, D), lambda i: (0, 0))
    rope = pl.BlockSpec((tm, hd), lambda i: (i, 0))
    out = jax.ShapeDtypeStruct((M, D), jnp.bfloat16)
    return pl.pallas_call(
        functools.partial(_rmsnorm_qkv_rope_kernel, eps=eps, num_heads=num_heads,
                          scale=1.0 / (hd ** 0.5)),
        grid=grid,
        in_specs=[row, vec, wfull, wfull, wfull, vec, vec, vec, rope, rope],
        out_specs=[row, row, row],
        out_shape=(out, out, out),
        compiler_params=_cparams(("parallel",)),
    )(x2d, gamma.reshape(1, D), wq, wk, wv,
      bq.reshape(1, D), bk.reshape(1, D), bv.reshape(1, D), cos_m, sin_m)


# --------------------- flash-style causal attention (RoPE pre-applied) ---------------------

def _flash_attn_kernel(q_ref, k_ref, v_ref, o_ref, m_scr, l_scr, acc_scr, *, num_heads):
    i = pl.program_id(1)
    j = pl.program_id(2)
    tq = q_ref.shape[1]
    tkv = k_ref.shape[1]
    D = q_ref.shape[2]
    hd = D // num_heads

    @pl.when(j == 0)
    def _():
        m_scr[...] = jnp.full_like(m_scr, -1e30)
        l_scr[...] = jnp.zeros_like(l_scr)
        acc_scr[...] = jnp.zeros_like(acc_scr)

    # kv tiles strictly above the diagonal contribute nothing (tq == tkv -> j <= i).
    @pl.when(j <= i)
    def _():
        qb = q_ref[0]                                     # (tq, D) bf16, rotated & scaled
        kb = k_ref[0]                                     # (tkv, D) bf16, rotated
        vb = v_ref[0]                                     # (tkv, D) bf16
        row = i * tq + jax.lax.broadcasted_iota(jnp.int32, (tq, tkv), 0)
        col = j * tkv + jax.lax.broadcasted_iota(jnp.int32, (tq, tkv), 1)
        bias = jnp.where(col <= row, 0.0, -1e30).astype(jnp.float32)

        for h in range(num_heads):
            sl = slice(h * hd, (h + 1) * hd)
            s = jax.lax.dot_general(                      # (tq, tkv), no K transpose
                qb[:, sl], kb[:, sl],
                dimension_numbers=(((1,), (1,)), ((), ())),
                preferred_element_type=jnp.float32) + bias
            m_prev = m_scr[h]                             # (tq, 1)
            m_new = jnp.maximum(m_prev, jnp.max(s, axis=-1, keepdims=True))
            alpha = jnp.exp(m_prev - m_new)               # f32 softmax math
            p = jnp.exp(s - m_new)
            l_scr[h] = alpha * l_scr[h] + jnp.sum(p, axis=-1, keepdims=True)
            pv = jnp.dot(p.astype(jnp.bfloat16), vb[:, sl],
                         preferred_element_type=jnp.float32)  # (tq, hd)
            acc_scr[h] = alpha * acc_scr[h] + pv
            m_scr[h] = m_new

    # last contributing kv tile for this q tile is j == i: normalize and store once.
    @pl.when(j == i)
    def _():
        outs = []
        for h in range(num_heads):
            inv_l = pl.reciprocal(l_scr[h], approx=True)
            outs.append(acc_scr[h] * inv_l)
        o_ref[0] = jnp.concatenate(outs, axis=-1).astype(o_ref.dtype)


def causal_attention(q, k, v, num_heads):
    # q, k, v: (B, S, D) bf16, head h in columns [h*hd, (h+1)*hd), RoPE already applied.
    B, S, D = q.shape
    hd = D // num_heads
    tq = _tile_sub(S, 256)
    tkv = tq                                              # keep tq == tkv (causal skip)
    grid = (B, S // tq, S // tkv)
    q_spec = pl.BlockSpec((1, tq, D), lambda b, i, j: (b, i, 0))
    # Tiles above the diagonal map to the already-resident block -> no wasted DMA.
    kv_spec = pl.BlockSpec((1, tkv, D), lambda b, i, j: (b, jnp.minimum(j, i), 0))
    return pl.pallas_call(
        functools.partial(_flash_attn_kernel, num_heads=num_heads),
        grid=grid,
        in_specs=[q_spec, kv_spec, kv_spec],
        out_specs=pl.BlockSpec((1, tq, D), lambda b, i, j: (b, i, 0)),
        out_shape=jax.ShapeDtypeStruct((B, S, D), jnp.bfloat16),
        scratch_shapes=[
            pltpu.VMEM((num_heads, tq, 1), jnp.float32),   # running max
            pltpu.VMEM((num_heads, tq, 1), jnp.float32),   # running sum
            pltpu.VMEM((num_heads, tq, hd), jnp.float32),  # output accumulator
        ],
        compiler_params=_cparams(("parallel", "parallel", "arbitrary")),
    )(q, k, v)


# --------------------- attention output projection + residual ---------------------

def _proj_residual_kernel(r_ref, a_ref, w_ref, b_ref, o_ref):
    o_ref[...] = (r_ref[...]
                  + jnp.dot(a_ref[...], w_ref[...], preferred_element_type=jnp.float32)
                  + b_ref[...])


def proj_residual(resid2d, attn2d_bf16, w, b):
    M, D = resid2d.shape
    K = attn2d_bf16.shape[1]
    tm = _tile_sub(M, 512)
    grid = (M // tm,)
    row_f = pl.BlockSpec((tm, D), lambda i: (i, 0))
    return pl.pallas_call(
        _proj_residual_kernel,
        grid=grid,
        in_specs=[row_f,
                  pl.BlockSpec((tm, K), lambda i: (i, 0)),
                  pl.BlockSpec((K, D), lambda i: (0, 0)),   # weight loaded once
                  pl.BlockSpec((1, D), lambda i: (0, 0))],
        out_specs=row_f,
        out_shape=jax.ShapeDtypeStruct((M, D), jnp.float32),
        compiler_params=_cparams(("parallel",)),
    )(resid2d, attn2d_bf16, w, b.reshape(1, D))


# --------------------- fused RMSNorm + SwiGLU + residual ---------------------

def _rmsnorm_swiglu_residual_kernel(x_ref, g_ref, w1_ref, w3_ref, w2_ref,
                                    o_ref, h_scr, acc_ref, *, eps):
    f = pl.program_id(1)

    @pl.when(f == 0)
    def _():
        x = x_ref[...]                                    # (tm, D) f32 residual
        ms = jnp.mean(x * x, axis=-1, keepdims=True)
        h_scr[...] = (x * jax.lax.rsqrt(ms + eps) * g_ref[...]).astype(jnp.bfloat16)
        acc_ref[...] = jnp.zeros_like(acc_ref)

    h = h_scr[...]                                        # bf16, computed once per row tile
    a1 = jnp.dot(h, w1_ref[...], preferred_element_type=jnp.float32)
    a3 = jnp.dot(h, w3_ref[...], preferred_element_type=jnp.float32)
    gact = (jax.nn.silu(a1) * a3).astype(jnp.bfloat16)
    acc_ref[...] += jnp.dot(gact, w2_ref[...], preferred_element_type=jnp.float32)

    @pl.when(f == pl.num_programs(1) - 1)
    def _():
        o_ref[...] = x_ref[...] + acc_ref[...]            # residual fused in


def rmsnorm_swiglu_residual(x2d, gamma, w1, w3, w2, eps=1e-8):
    M, D = x2d.shape
    F = w1.shape[1]
    tm = _tile_sub(M, 512)
    tf = _tile_lane(F, 512)
    grid = (M // tm, F // tf)
    return pl.pallas_call(
        functools.partial(_rmsnorm_swiglu_residual_kernel, eps=eps),
        grid=grid,
        in_specs=[pl.BlockSpec((tm, D), lambda i, f: (i, 0)),
                  pl.BlockSpec((1, D), lambda i, f: (0, 0)),
                  pl.BlockSpec((D, tf), lambda i, f: (0, f)),
                  pl.BlockSpec((D, tf), lambda i, f: (0, f)),
                  pl.BlockSpec((tf, D), lambda i, f: (f, 0))],
        out_specs=pl.BlockSpec((tm, D), lambda i, f: (i, 0)),
        out_shape=jax.ShapeDtypeStruct((M, D), jnp.float32),
        scratch_shapes=[pltpu.VMEM((tm, D), jnp.bfloat16),   # cached normalized h
                        pltpu.VMEM((tm, D), jnp.float32)],   # down-proj accumulator
        compiler_params=_cparams(("parallel", "arbitrary")),
    )(x2d, gamma.reshape(1, D), w1, w3, w2)


# --------------------- fused final RMSNorm + tied lm_head ---------------------

def _rmsnorm_lmhead_kernel(x_ref, g_ref, wte_ref, o_ref, h_scr, *, eps):
    j = pl.program_id(1)

    @pl.when(j == 0)
    def _():
        x = x_ref[...]
        ms = jnp.mean(x * x, axis=-1, keepdims=True)
        h_scr[...] = (x * jax.lax.rsqrt(ms + eps) * g_ref[...]).astype(jnp.bfloat16)

    # contract the D axes directly: wte.T never materialized
    o_ref[...] = jax.lax.dot_general(
        h_scr[...], wte_ref[...],
        dimension_numbers=(((1,), (1,)), ((), ())),
        preferred_element_type=jnp.float32).astype(o_ref.dtype)


def rmsnorm_lmhead(x2d, gamma, wte, eps=1e-8):
    M, D = x2d.shape
    V = wte.shape[0]
    tm = _tile_sub(M, 512)
    tv = _tile_lane(V, 512)
    grid = (M // tm, V // tv)
    return pl.pallas_call(
        functools.partial(_rmsnorm_lmhead_kernel, eps=eps),
        grid=grid,
        in_specs=[pl.BlockSpec((tm, D), lambda i, j: (i, 0)),
                  pl.BlockSpec((1, D), lambda i, j: (0, 0)),
                  pl.BlockSpec((tv, D), lambda i, j: (j, 0))],
        out_specs=pl.BlockSpec((tm, tv), lambda i, j: (i, j)),
        out_shape=jax.ShapeDtypeStruct((M, V), jnp.bfloat16),    # bf16 logits: halves HBM store
        scratch_shapes=[pltpu.VMEM((tm, D), jnp.bfloat16)],
        compiler_params=_cparams(("parallel", "arbitrary")),
    )(x2d, gamma.reshape(1, D), wte)


# ----------------------------- Model glue (plain JAX) -----------------------------

def precompute_rope(head_dim, end, theta=10000.0):
    freqs = 1.0 / theta ** (jnp.arange(0, head_dim, 2, dtype=jnp.float32) / head_dim)
    freqs = jnp.outer(jnp.arange(end, dtype=jnp.float32), freqs)      # (end, hd/2)
    cos, sin = jnp.cos(freqs), jnp.sin(freqs)
    cos_sp = jnp.concatenate([cos, cos], axis=-1)                     # (end, hd)
    # rotate_half(t) = concat(-t[half:], t[:half]); fold the -1 into sin.
    sin_signed = jnp.concatenate([-sin, sin], axis=-1)                # (end, hd)
    return cos_sp, sin_signed


def init_params(key, cfg):
    D, V, L = cfg["d_model"], cfg["vocab_size"], cfg["num_layers"]
    std = 0.02
    std_scaled = 0.02 * (2 * L) ** (-0.5)             # NANOGPT_SCALE_INIT
    keys = iter(jax.random.split(key, 1 + 6 * L))

    def nrm(k, shape, s):
        # weights live in bf16 in HBM (halves MXU feed + HBM weight traffic)
        return (s * jax.random.normal(k, shape, dtype=jnp.float32)).astype(jnp.bfloat16)

    params = {
        "wte": nrm(next(keys), (V, D), std),          # tied with lm_head
        "lnf_w": jnp.ones((D,), jnp.float32),
        "blocks": [],
    }
    for _ in range(L):
        wqkv = nrm(next(keys), (D, 3 * D), std)       # split columns = chunk(3, dim=-1)
        params["blocks"].append(dict(
            ln1_w=jnp.ones((D,), jnp.float32),
            wq=wqkv[:, :D], wk=wqkv[:, D:2 * D], wv=wqkv[:, 2 * D:],
            bq=jnp.zeros((D,), jnp.float32),
            bk=jnp.zeros((D,), jnp.float32),
            bv=jnp.zeros((D,), jnp.float32),
            proj_w=nrm(next(keys), (D, D), std_scaled),
            proj_b=jnp.zeros((D,), jnp.float32),
            ln2_w=jnp.ones((D,), jnp.float32),
            w1=nrm(next(keys), (D, 4 * D), std),
            w3=nrm(next(keys), (D, 4 * D), std),
            w2=nrm(next(keys), (4 * D, D), std_scaled),
        ))
    hd = D // cfg["num_heads"]
    params["cos_sp"], params["sin_signed"] = precompute_rope(hd, cfg["block_size"])
    return params


def model_forward(params, tokens, cfg, y=None, return_logits=True):
    B, S = tokens.shape
    D = cfg["d_model"]
    H = cfg["num_heads"]
    # embedding gather (glue; weight tied with lm_head)
    x = jnp.take(params["wte"], tokens, axis=0).astype(jnp.float32)   # (B, S, D)
    # per-row RoPE tables (row = b*S + s), consumed by the fused QKV+RoPE kernel
    cos_m = jnp.tile(params["cos_sp"][:S], (B, 1))                    # (B*S, hd)
    sin_m = jnp.tile(params["sin_signed"][:S], (B, 1))                # (B*S, hd)

    x2d = x.reshape(B * S, D)
    for p in params["blocks"]:
        # ln_1 + QKV + bias + RoPE (+ softmax scale) fused; head-contiguous layout
        q2, k2, v2 = rmsnorm_qkv_rope(x2d, p["ln1_w"], p["wq"], p["wk"], p["wv"],
                                      p["bq"], p["bk"], p["bv"], cos_m, sin_m, H)
        y_attn = causal_attention(q2.reshape(B, S, D), k2.reshape(B, S, D),
                                  v2.reshape(B, S, D), H)             # (B, S, D) bf16
        # c_proj + residual fused
        x2d = proj_residual(x2d, y_attn.reshape(B * S, D), p["proj_w"], p["proj_b"])
        # ln_2 + SwiGLU + residual fused
        x2d = rmsnorm_swiglu_residual(x2d, p["ln2_w"], p["w1"], p["w3"], p["w2"])

    logits2d = rmsnorm_lmhead(x2d, params["lnf_w"], params["wte"])     # (B*S, V) bf16
    logits = logits2d.reshape(B, S, cfg["vocab_size"])

    loss = None
    if y is not None:
        # cross-entropy in plain JAX (reduction over V), f32 math
        lf = logits2d.astype(jnp.float32)
        logz = jax.nn.logsumexp(lf, axis=-1)
        tgt = jnp.take_along_axis(lf, y.reshape(-1, 1), axis=-1)[:, 0]
        loss = jnp.mean(logz - tgt)
    return (logits if return_logits else None), loss


if __name__ == "__main__":
    cfg = dict(vocab_size=128, d_model=64, num_heads=4, num_layers=2, block_size=16)
    key = jax.random.PRNGKey(0)
    params = init_params(key, cfg)
    tokens = jax.random.randint(
        jax.random.fold_in(key, 123), (2, 8), 0, cfg["vocab_size"], dtype=jnp.int32
    )
    targets = jax.random.randint(
        jax.random.fold_in(key, 7), (2, 8), 0, cfg["vocab_size"], dtype=jnp.int32
    )

    fwd = jax.jit(lambda p, t: model_forward(p, t, cfg))
    logits, loss = fwd(params, tokens)
    jax.block_until_ready(logits)
    assert logits.shape == (2, 8, cfg["vocab_size"]) and loss is None
    assert bool(jnp.isfinite(logits.astype(jnp.float32)).all())

    fwd_loss = jax.jit(lambda p, t, tgt: model_forward(p, t, cfg, y=tgt))
    _, loss2 = fwd_loss(params, tokens, targets)
    jax.block_until_ready(loss2)
    assert bool(jnp.isfinite(loss2))

    print("KERNEL_OK")
</pallas_src>

<mosaic_0001>
module attributes {stable_mosaic.version = 11 : i64} {
  func.func @_rmsnorm_qkv_rope_kernel(%arg0: i32, %arg1: memref<16x64xf32, #tpu.memory_space<vmem>>, %arg2: memref<1x64xf32, #tpu.memory_space<vmem>>, %arg3: memref<64x64xbf16, #tpu.memory_space<vmem>>, %arg4: memref<64x64xbf16, #tpu.memory_space<vmem>>, %arg5: memref<64x64xbf16, #tpu.memory_space<vmem>>, %arg6: memref<1x64xf32, #tpu.memory_space<vmem>>, %arg7: memref<1x64xf32, #tpu.memory_space<vmem>>, %arg8: memref<1x64xf32, #tpu.memory_space<vmem>>, %arg9: memref<16x16xf32, #tpu.memory_space<vmem>>, %arg10: memref<16x16xf32, #tpu.memory_space<vmem>>, %arg11: memref<16x64xbf16, #tpu.memory_space<vmem>>, %arg12: memref<16x64xbf16, #tpu.memory_space<vmem>>, %arg13: memref<16x64xbf16, #tpu.memory_space<vmem>>) attributes {dimension_semantics = [#tpu.dimension_semantics<parallel>], iteration_bounds = array<i64: 1>, scalar_prefetch = 0 : i64, scratch_operands = 0 : i64, tpu.core_type = #tpu.core_type<tc>, window_params = [{transform_indices = @transform_0, window_bounds = array<i64: 16, 64>}, {pipeline_mode = #tpu.pipeline_mode<synchronous>, transform_indices = @transform_1, window_bounds = array<i64: 1, 64>}, {pipeline_mode = #tpu.pipeline_mode<synchronous>, transform_indices = @transform_2, window_bounds = array<i64: 64, 64>}, {pipeline_mode = #tpu.pipeline_mode<synchronous>, transform_indices = @transform_3, window_bounds = array<i64: 64, 64>}, {pipeline_mode = #tpu.pipeline_mode<synchronous>, transform_indices = @transform_4, window_bounds = array<i64: 64, 64>}, {pipeline_mode = #tpu.pipeline_mode<synchronous>, transform_indices = @transform_5, window_bounds = array<i64: 1, 64>}, {pipeline_mode = #tpu.pipeline_mode<synchronous>, transform_indices = @transform_6, window_bounds = array<i64: 1, 64>}, {pipeline_mode = #tpu.pipeline_mode<synchronous>, transform_indices = @transform_7, window_bounds = array<i64: 1, 64>}, {transform_indices = @transform_8, window_bounds = array<i64: 16, 16>}, {transform_indices = @transform_9, window_bounds = array<i64: 16, 16>}, {transform_indices = @transform_10, window_bounds = array<i64: 16, 64>}, {transform_indices = @transform_11, window_bounds = array<i64: 16, 64>}, {transform_indices = @transform_12, window_bounds = array<i64: 16, 64>}]} {
    %c0 = arith.constant 0 : index
    %c0_0 = arith.constant 0 : index
    %0 = vector.load %arg1[%c0, %c0_0] : memref<16x64xf32, #tpu.memory_space<vmem>>, vector<16x64xf32>
    %1 = arith.mulf %0, %0 : vector<16x64xf32>
    %cst = arith.constant dense<0.000000e+00> : vector<16xf32>
    %2 = vector.multi_reduction <add>, %1, %cst [1] : vector<16x64xf32> to vector<16xf32>
    %3 = vector.shape_cast %2 : vector<16xf32> to vector<16x1xf32>
    %cst_1 = arith.constant 6.400000e+01 : f32
    %4 = vector.broadcast %cst_1 : f32 to vector<16x1xf32>
    %5 = arith.divf %3, %4 : vector<16x1xf32>
    %cst_2 = arith.constant 9.99999993E-9 : f32
    %6 = vector.broadcast %cst_2 : f32 to vector<16x1xf32>
    %7 = arith.addf %5, %6 : vector<16x1xf32>
    %8 = math.rsqrt %7 : vector<16x1xf32>
    %9 = vector.broadcast %8 : vector<16x1xf32> to vector<16x64xf32>
    %10 = arith.mulf %0, %9 : vector<16x64xf32>
    %c0_3 = arith.constant 0 : index
    %c0_4 = arith.constant 0 : index
    %11 = vector.load %arg2[%c0_3, %c0_4] : memref<1x64xf32, #tpu.memory_space<vmem>>, vector<1x64xf32>
    %12 = vector.broadcast %11 : vector<1x64xf32> to vector<16x64xf32>
    %13 = arith.mulf %10, %12 : vector<16x64xf32>
    %14 = arith.truncf %13 : vector<16x64xf32> to vector<16x64xbf16>
    %c0_5 = arith.constant 0 : index
    %c0_6 = arith.constant 0 : index
    %15 = vector.load %arg3[%c0_5, %c0_6] : memref<64x64xbf16, #tpu.memory_space<vmem>>, vector<64x64xbf16>
    %cst_7 = arith.constant dense<0.000000e+00> : vector<16x64xf32>
    %16 = tpu.matmul %14, %15, %cst_7 {dimension_numbers = #tpu.dot_dimension_numbers<[1], [0], [0], [1], [0, 0, 1, 1], [], []>} : vector<16x64xbf16>, vector<64x64xbf16>, vector<16x64xf32> -> vector<16x64xf32>
    %c0_8 = arith.constant 0 : index
    %c0_9 = arith.constant 0 : index
    %17 = vector.load %arg6[%c0_8, %c0_9] : memref<1x64xf32, #tpu.memory_space<vmem>>, vector<1x64xf32>
    %18 = vector.broadcast %17 : vector<1x64xf32> to vector<16x64xf32>
    %19 = arith.addf %16, %18 : vector<16x64xf32>
    %c0_10 = arith.constant 0 : index
    %c0_11 = arith.constant 0 : index
    %20 = vector.load %arg4[%c0_10, %c0_11] : memref<64x64xbf16, #tpu.memory_space<vmem>>, vector<64x64xbf16>
    %cst_12 = arith.constant dense<0.000000e+00> : vector<16x64xf32>
    %21 = tpu.matmul %14, %20, %cst_12 {dimension_numbers = #tpu.dot_dimension_numbers<[1], [0], [0], [1], [0, 0, 1, 1], [], []>} : vector<16x64xbf16>, vector<64x64xbf16>, vector<16x64xf32> -> vector<16x64xf32>
    %c0_13 = arith.constant 0 : index
    %c0_14 = arith.constant 0 : index
    %22 = vector.load %arg7[%c0_13, %c0_14] : memref<1x64xf32, #tpu.memory_space<vmem>>, vector<1x64xf32>
    %23 = vector.broadcast %22 : vector<1x64xf32> to vector<16x64xf32>
    %24 = arith.addf %21, %23 : vector<16x64xf32>
    %c0_15 = arith.constant 0 : index
    %c0_16 = arith.constant 0 : index
    %25 = vector.load %arg5[%c0_15, %c0_16] : memref<64x64xbf16, #tpu.memory_space<vmem>>, vector<64x64xbf16>
    %cst_17 = arith.constant dense<0.000000e+00> : vector<16x64xf32>
    %26 = tpu.matmul %14, %25, %cst_17 {dimension_numbers = #tpu.dot_dimension_numbers<[1], [0], [0], [1], [0, 0, 1, 1], [], []>} : vector<16x64xbf16>, vector<64x64xbf16>, vector<16x64xf32> -> vector<16x64xf32>
    %c0_18 = arith.constant 0 : index
    %c0_19 = arith.constant 0 : index
    %27 = vector.load %arg8[%c0_18, %c0_19] : memref<1x64xf32, #tpu.memory_space<vmem>>, vector<1x64xf32>
    %28 = vector.broadcast %27 : vector<1x64xf32> to vector<16x64xf32>
    %29 = arith.addf %26, %28 : vector<16x64xf32>
    %c0_20 = arith.constant 0 : index
    %c0_21 = arith.constant 0 : index
    %30 = vector.load %arg9[%c0_20, %c0_21] : memref<16x16xf32, #tpu.memory_space<vmem>>, vector<16x16xf32>
    %c0_22 = arith.constant 0 : index
    %c0_23 = arith.constant 0 : index
    %31 = vector.load %arg10[%c0_22, %c0_23] : memref<16x16xf32, #tpu.memory_space<vmem>>, vector<16x16xf32>
    %32 = vector.extract_strided_slice %19 {offsets = [0, 0], sizes = [16, 16], strides = [1, 1]} : vector<16x64xf32> to vector<16x16xf32>
    %33 = vector.extract_strided_slice %24 {offsets = [0, 0], sizes = [16, 16], strides = [1, 1]} : vector<16x64xf32> to vector<16x16xf32>
    %34 = vector.extract_strided_slice %32 {offsets = [0, 8], sizes = [16, 8], strides = [1, 1]} : vector<16x16xf32> to vector<16x8xf32>
    %35 = vector.extract_strided_slice %32 {offsets = [0, 0], sizes = [16, 8], strides = [1, 1]} : vector<16x16xf32> to vector<16x8xf32>
    %36 = tpu.concatenate %34, %35 in 1 : vector<16x8xf32>, vector<16x8xf32> -> vector<16x16xf32>
    %37 = vector.extract_strided_slice %33 {offsets = [0, 8], sizes = [16, 8], strides = [1, 1]} : vector<16x16xf32> to vector<16x8xf32>
    %38 = vector.extract_strided_slice %33 {offsets = [0, 0], sizes = [16, 8], strides = [1, 1]} : vector<16x16xf32> to vector<16x8xf32>
    %39 = tpu.concatenate %37, %38 in 1 : vector<16x8xf32>, vector<16x8xf32> -> vector<16x16xf32>
    %40 = arith.mulf %32, %30 : vector<16x16xf32>
    %41 = arith.mulf %36, %31 : vector<16x16xf32>
    %42 = arith.addf %40, %41 : vector<16x16xf32>
    %43 = arith.mulf %33, %30 : vector<16x16xf32>
    %44 = arith.mulf %39, %31 : vector<16x16xf32>
    %45 = arith.addf %43, %44 : vector<16x16xf32>
    %46 = vector.extract_strided_slice %19 {offsets = [0, 16], sizes = [16, 16], strides = [1, 1]} : vector<16x64xf32> to vector<16x16xf32>
    %47 = vector.extract_strided_slice %24 {offsets = [0, 16], sizes = [16, 16], strides = [1, 1]} : vector<16x64xf32> to vector<16x16xf32>
    %48 = vector.extract_strided_slice %46 {offsets = [0, 8], sizes = [16, 8], strides = [1, 1]} : vector<16x16xf32> to vector<16x8xf32>
    %49 = vector.extract_strided_slice %46 {offsets = [0, 0], sizes = [16, 8], strides = [1, 1]} : vector<16x16xf32> to vector<16x8xf32>
    %50 = tpu.concatenate %48, %49 in 1 : vector<16x8xf32>, vector<16x8xf32> -> vector<16x16xf32>
    %51 = vector.extract_strided_slice %47 {offsets = [0, 8], sizes = [16, 8], strides = [1, 1]} : vector<16x16xf32> to vector<16x8xf32>
    %52 = vector.extract_strided_slice %47 {offsets = [0, 0], sizes = [16, 8], strides = [1, 1]} : vector<16x16xf32> to vector<16x8xf32>
    %53 = tpu.concatenate %51, %52 in 1 : vector<16x8xf32>, vector<16x8xf32> -> vector<16x16xf32>
    %54 = arith.mulf %46, %30 : vector<16x16xf32>
    %55 = arith.mulf %50, %31 : vector<16x16xf32>
    %56 = arith.addf %54, %55 : vector<16x16xf32>
    %57 = arith.mulf %47, %30 : vector<16x16xf32>
    %58 = arith.mulf %53, %31 : vector<16x16xf32>
    %59 = arith.addf %57, %58 : vector<16x16xf32>
    %60 = vector.extract_strided_slice %19 {offsets = [0, 32], sizes = [16, 16], strides = [1, 1]} : vector<16x64xf32> to vector<16x16xf32>
    %61 = vector.extract_strided_slice %24 {offsets = [0, 32], sizes = [16, 16], strides = [1, 1]} : vector<16x64xf32> to vector<16x16xf32>
    %62 = vector.extract_strided_slice %60 {offsets = [0, 8], sizes = [16, 8], strides = [1, 1]} : vector<16x16xf32> to vector<16x8xf32>
    %63 = vector.extract_strided_slice %60 {offsets = [0, 0], sizes = [16, 8], strides = [1, 1]} : vector<16x16xf32> to vector<16x8xf32>
    %64 = tpu.concatenate %62, %63 in 1 : vector<16x8xf32>, vector<16x8xf32> -> vector<16x16xf32>
    %65 = vector.extract_strided_slice %61 {offsets = [0, 8], sizes = [16, 8], strides = [1, 1]} : vector<16x16xf32> to vector<16x8xf32>
    %66 = vector.extract_strided_slice %61 {offsets = [0, 0], sizes = [16, 8], strides = [1, 1]} : vector<16x16xf32> to vector<16x8xf32>
    %67 = tpu.concatenate %65, %66 in 1 : vector<16x8xf32>, vector<16x8xf32> -> vector<16x16xf32>
    %68 = arith.mulf %60, %30 : vector<16x16xf32>
    %69 = arith.mulf %64, %31 : vector<16x16xf32>
    %70 = arith.addf %68, %69 : vector<16x16xf32>
    %71 = arith.mulf %61, %30 : vector<16x16xf32>
    %72 = arith.mulf %67, %31 : vector<16x16xf32>
    %73 = arith.addf %71, %72 : vector<16x16xf32>
    %74 = vector.extract_strided_slice %19 {offsets = [0, 48], sizes = [16, 16], strides = [1, 1]} : vector<16x64xf32> to vector<16x16xf32>
    %75 = vector.extract_strided_slice %24 {offsets = [0, 48], sizes = [16, 16], strides = [1, 1]} : vector<16x64xf32> to vector<16x16xf32>
    %76 = vector.extract_strided_slice %74 {offsets = [0, 8], sizes = [16, 8], strides = [1, 1]} : vector<16x16xf32> to vector<16x8xf32>
    %77 = vector.extract_strided_slice %74 {offsets = [0, 0], sizes = [16, 8], strides = [1, 1]} : vector<16x16xf32> to vector<16x8xf32>
    %78 = tpu.concatenate %76, %77 in 1 : vector<16x8xf32>, vector<16x8xf32> -> vector<16x16xf32>
    %79 = vector.extract_strided_slice %75 {offsets = [0, 8], sizes = [16, 8], strides = [1, 1]} : vector<16x16xf32> to vector<16x8xf32>
    %80 = vector.extract_strided_slice %75 {offsets = [0, 0], sizes = [16, 8], strides = [1, 1]} : vector<16x16xf32> to vector<16x8xf32>
    %81 = tpu.concatenate %79, %80 in 1 : vector<16x8xf32>, vector<16x8xf32> -> vector<16x16xf32>
    %82 = arith.mulf %74, %30 : vector<16x16xf32>
    %83 = arith.mulf %78, %31 : vector<16x16xf32>
    %84 = arith.addf %82, %83 : vector<16x16xf32>
    %85 = arith.mulf %75, %30 : vector<16x16xf32>
    %86 = arith.mulf %81, %31 : vector<16x16xf32>
    %87 = arith.addf %85, %86 : vector<16x16xf32>
    %88 = tpu.concatenate %42, %56, %70, %84 in 1 : vector<16x16xf32>, vector<16x16xf32>, vector<16x16xf32>, vector<16x16xf32> -> vector<16x64xf32>
    %cst_24 = arith.constant 2.500000e-01 : f32
    %89 = vector.broadcast %cst_24 : f32 to vector<16x64xf32>
    %90 = arith.mulf %88, %89 : vector<16x64xf32>
    %91 = arith.truncf %90 : vector<16x64xf32> to vector<16x64xbf16>
    %c0_25 = arith.constant 0 : index
    %c0_26 = arith.constant 0 : index
    %92 = vector.load %arg11[%c0_25, %c0_26] : memref<16x64xbf16, #tpu.memory_space<vmem>>, vector<16x64xbf16>
    tpu.vector_store %arg11[%c0_25, %c0_26], %91 {strides = array<i32>} : memref<16x64xbf16, #tpu.memory_space<vmem>>, vector<16x64xbf16>,
    %93 = tpu.concatenate %45, %59, %73, %87 in 1 : vector<16x16xf32>, vector<16x16xf32>, vector<16x16xf32>, vector<16x16xf32> -> vector<16x64xf32>
    %94 = arith.truncf %93 : vector<16x64xf32> to vector<16x64xbf16>
    %c0_27 = arith.constant 0 : index
    %c0_28 = arith.constant 0 : index
    %95 = vector.load %arg12[%c0_27, %c0_28] : memref<16x64xbf16, #tpu.memory_space<vmem>>, vector<16x64xbf16>
    tpu.vector_store %arg12[%c0_27, %c0_28], %94 {strides = array<i32>} : memref<16x64xbf16, #tpu.memory_space<vmem>>, vector<16x64xbf16>,
    %96 = arith.truncf %29 : vector<16x64xf32> to vector<16x64xbf16>
    %c0_29 = arith.constant 0 : index
    %c0_30 = arith.constant 0 : index
    %97 = vector.load %arg13[%c0_29, %c0_30] : memref<16x64xbf16, #tpu.memory_space<vmem>>, vector<16x64xbf16>
    tpu.vector_store %arg13[%c0_29, %c0_30], %96 {strides = array<i32>} : memref<16x64xbf16, #tpu.memory_space<vmem>>, vector<16x64xbf16>,
    return
  }
  func.func @transform_0(%arg0: i32) -> (i32, i32) {
    %c0_i32 = arith.constant 0 : i32
    %c0_i32_0 = arith.constant 0 : i32
    return %arg0, %c0_i32 : i32, i32
  }
  func.func @transform_1(%arg0: i32) -> (i32, i32) {
    %c0_i32 = arith.constant 0 : i32
    %c0_i32_0 = arith.constant 0 : i32
    %c0_i32_1 = arith.constant 0 : i32
    return %c0_i32, %c0_i32_0 : i32, i32
  }
  func.func @transform_2(%arg0: i32) -> (i32, i32) {
    %c0_i32 = arith.constant 0 : i32
    %c0_i32_0 = arith.constant 0 : i32
    %c0_i32_1 = arith.constant 0 : i32
    return %c0_i32, %c0_i32_0 : i32, i32
  }
  func.func @transform_3(%arg0: i32) -> (i32, i32) {
    %c0_i32 = arith.constant 0 : i32
    %c0_i32_0 = arith.constant 0 : i32
    %c0_i32_1 = arith.constant 0 : i32
    return %c0_i32, %c0_i32_0 : i32, i32
  }
  func.func @transform_4(%arg0: i32) -> (i32, i32) {
    %c0_i32 = arith.constant 0 : i32
    %c0_i32_0 = arith.constant 0 : i32
    %c0_i32_1 = arith.constant 0 : i32
    return %c0_i32, %c0_i32_0 : i32, i32
  }
  func.func @transform_5(%arg0: i32) -> (i32, i32) {
    %c0_i32 = arith.constant 0 : i32
    %c0_i32_0 = arith.constant 0 : i32
    %c0_i32_1 = arith.constant 0 : i32
    return %c0_i32, %c0_i32_0 : i32, i32
  }
  func.func @transform_6(%arg0: i32) -> (i32, i32) {
    %c0_i32 = arith.constant 0 : i32
    %c0_i32_0 = arith.constant 0 : i32
    %c0_i32_1 = arith.constant 0 : i32
    return %c0_i32, %c0_i32_0 : i32, i32
  }
  func.func @transform_7(%arg0: i32) -> (i32, i32) {
    %c0_i32 = arith.constant 0 : i32
    %c0_i32_0 = arith.constant 0 : i32
    %c0_i32_1 = arith.constant 0 : i32
    return %c0_i32, %c0_i32_0 : i32, i32
  }
  func.func @transform_8(%arg0: i32) -> (i32, i32) {
    %c0_i32 = arith.constant 0 : i32
    %c0_i32_0 = arith.constant 0 : i32
    return %arg0, %c0_i32 : i32, i32
  }
  func.func @transform_9(%arg0: i32) -> (i32, i32) {
    %c0_i32 = arith.constant 0 : i32
    %c0_i32_0 = arith.constant 0 : i32
    return %arg0, %c0_i32 : i32, i32
  }
  func.func @transform_10(%arg0: i32) -> (i32, i32) {
    %c0_i32 = arith.constant 0 : i32
    %c0_i32_0 = arith.constant 0 : i32
    return %arg0, %c0_i32 : i32, i32
  }
  func.func @transform_11(%arg0: i32) -> (i32, i32) {
    %c0_i32 = arith.constant 0 : i32
    %c0_i32_0 = arith.constant 0 : i32
    return %arg0, %c0_i32 : i32, i32
  }
  func.func @transform_12(%arg0: i32) -> (i32, i32) {
    %c0_i32 = arith.constant 0 : i32
    %c0_i32_0 = arith.constant 0 : i32
    return %arg0, %c0_i32 : i32, i32
  }
}

module attributes {stable_mosaic.version = 11 : i64} {
  func.func @_proj_residual_kernel(%arg0: i32, %arg1: memref<16x64xf32, #tpu.memory_space<vmem>>, %arg2: memref<16x64xbf16, #tpu.memory_space<vmem>>, %arg3: memref<64x64xbf16, #tpu.memory_space<vmem>>, %arg4: memref<1x64xf32, #tpu.memory_space<vmem>>, %arg5: memref<16x64xf32, #tpu.memory_space<vmem>>) attributes {dimension_semantics = [#tpu.dimension_semantics<parallel>], iteration_bounds = array<i64: 1>, scalar_prefetch = 0 : i64, scratch_operands = 0 : i64, tpu.core_type = #tpu.core_type<tc>, window_params = [{transform_indices = @transform_0, window_bounds = array<i64: 16, 64>}, {transform_indices = @transform_1, window_bounds = array<i64: 16, 64>}, {pipeline_mode = #tpu.pipeline_mode<synchronous>, transform_indices = @transform_2, window_bounds = array<i64: 64, 64>}, {pipeline_mode = #tpu.pipeline_mode<synchronous>, transform_indices = @transform_3, window_bounds = array<i64: 1, 64>}, {transform_indices = @transform_4, window_bounds = array<i64: 16, 64>}]} {
    %c0 = arith.constant 0 : index
    %c0_0 = arith.constant 0 : index
    %0 = vector.load %arg1[%c0, %c0_0] : memref<16x64xf32, #tpu.memory_space<vmem>>, vector<16x64xf32>
    %c0_1 = arith.constant 0 : index
    %c0_2 = arith.constant 0 : index
    %1 = vector.load %arg2[%c0_1, %c0_2] : memref<16x64xbf16, #tpu.memory_space<vmem>>, vector<16x64xbf16>
    %c0_3 = arith.constant 0 : index
    %c0_4 = arith.constant 0 : index
    %2 = vector.load %arg3[%c0_3, %c0_4] : memref<64x64xbf16, #tpu.memory_space<vmem>>, vector<64x64xbf16>
    %cst = arith.constant dense<0.000000e+00> : vector<16x64xf32>
    %3 = tpu.matmul %1, %2, %cst {dimension_numbers = #tpu.dot_dimension_numbers<[1], [0], [0], [1], [0, 0, 1, 1], [], []>} : vector<16x64xbf16>, vector<64x64xbf16>, vector<16x64xf32> -> vector<16x64xf32>
    %4 = arith.addf %0, %3 : vector<16x64xf32>
    %c0_5 = arith.constant 0 : index
    %c0_6 = arith.constant 0 : index
    %5 = vector.load %arg4[%c0_5, %c0_6] : memref<1x64xf32, #tpu.memory_space<vmem>>, vector<1x64xf32>
    %6 = vector.broadcast %5 : vector<1x64xf32> to vector<16x64xf32>
    %7 = arith.addf %4, %6 : vector<16x64xf32>
    %c0_7 = arith.constant 0 : index
    %c0_8 = arith.constant 0 : index
    %8 = vector.load %arg5[%c0_7, %c0_8] : memref<16x64xf32, #tpu.memory_space<vmem>>, vector<16x64xf32>
    tpu.vector_store %arg5[%c0_7, %c0_8], %7 {strides = array<i32>} : memref<16x64xf32, #tpu.memory_space<vmem>>, vector<16x64xf32>,
    return
  }
  func.func @transform_0(%arg0: i32) -> (i32, i32) {
    %c0_i32 = arith.constant 0 : i32
    %c0_i32_0 = arith.constant 0 : i32
    return %arg0, %c0_i32 : i32, i32
  }
  func.func @transform_1(%arg0: i32) -> (i32, i32) {
    %c0_i32 = arith.constant 0 : i32
    %c0_i32_0 = arith.constant 0 : i32
    return %arg0, %c0_i32 : i32, i32
  }
  func.func @transform_2(%arg0: i32) -> (i32, i32) {
    %c0_i32 = arith.constant 0 : i32
    %c0_i32_0 = arith.constant 0 : i32
    %c0_i32_1 = arith.constant 0 : i32
    return %c0_i32, %c0_i32_0 : i32, i32
  }
  func.func @transform_3(%arg0: i32) -> (i32, i32) {
    %c0_i32 = arith.constant 0 : i32
    %c0_i32_0 = arith.constant 0 : i32
    %c0_i32_1 = arith.constant 0 : i32
    return %c0_i32, %c0_i32_0 : i32, i32
  }
  func.func @transform_4(%arg0: i32) -> (i32, i32) {
    %c0_i32 = arith.constant 0 : i32
    %c0_i32_0 = arith.constant 0 : i32
    return %arg0, %c0_i32 : i32, i32
  }
}

module attributes {stable_mosaic.version = 11 : i64} {
  func.func @_flash_attn_kernel(%arg0: i32, %arg1: i32, %arg2: i32, %arg3: memref<1x8x64xbf16, #tpu.memory_space<vmem>>, %arg4: memref<1x8x64xbf16, #tpu.memory_space<vmem>>, %arg5: memref<1x8x64xbf16, #tpu.memory_space<vmem>>, %arg6: memref<1x8x64xbf16, #tpu.memory_space<vmem>>, %arg7: memref<4x8x1xf32, #tpu.memory_space<vmem>>, %arg8: memref<4x8x1xf32, #tpu.memory_space<vmem>>, %arg9: memref<4x8x16xf32, #tpu.memory_space<vmem>>) attributes {dimension_semantics = [#tpu.dimension_semantics<parallel>, #tpu.dimension_semantics<parallel>, #tpu.dimension_semantics<arbitrary>], iteration_bounds = array<i64: 2, 1, 1>, scalar_prefetch = 0 : i64, scratch_operands = 3 : i64, tpu.core_type = #tpu.core_type<tc>, window_params = [{transform_indices = @transform_0, window_bounds = array<i64: 1, 8, 64>}, {transform_indices = @transform_1, window_bounds = array<i64: 1, 8, 64>}, {transform_indices = @transform_2, window_bounds = array<i64: 1, 8, 64>}, {transform_indices = @transform_3, window_bounds = array<i64: 1, 8, 64>}]} {
    %c0_i32 = arith.constant 0 : i32
    %0 = arith.cmpi eq, %arg2, %c0_i32 : i32
    %1 = arith.extui %0 : i1 to i32
    %c0_i32_0 = arith.constant 0 : i32
    %2 = arith.cmpi ne, %1, %c0_i32_0 : i32
    scf.if %2 {
      %cst = arith.constant -1.000000e+30 : f32
      %9 = vector.broadcast %cst : f32 to vector<4x8x1xf32>
      %c0 = arith.constant 0 : index
      %c0_3 = arith.constant 0 : index
      %c0_4 = arith.constant 0 : index
      %10 = vector.load %arg7[%c0, %c0_3, %c0_4] : memref<4x8x1xf32, #tpu.memory_space<vmem>>, vector<4x8x1xf32>
      tpu.vector_store %arg7[%c0, %c0_3, %c0_4], %9 {strides = array<i32>} : memref<4x8x1xf32, #tpu.memory_space<vmem>>, vector<4x8x1xf32>,
      %cst_5 = arith.constant 0.000000e+00 : f32
      %11 = vector.broadcast %cst_5 : f32 to vector<4x8x1xf32>
      %c0_6 = arith.constant 0 : index
      %c0_7 = arith.constant 0 : index
      %c0_8 = arith.constant 0 : index
      %12 = vector.load %arg8[%c0_6, %c0_7, %c0_8] : memref<4x8x1xf32, #tpu.memory_space<vmem>>, vector<4x8x1xf32>
      tpu.vector_store %arg8[%c0_6, %c0_7, %c0_8], %11 {strides = array<i32>} : memref<4x8x1xf32, #tpu.memory_space<vmem>>, vector<4x8x1xf32>,
      %cst_9 = arith.constant 0.000000e+00 : f32
      %13 = vector.broadcast %cst_9 : f32 to vector<4x8x16xf32>
      %c0_10 = arith.constant 0 : index
      %c0_11 = arith.constant 0 : index
      %c0_12 = arith.constant 0 : index
      %14 = vector.load %arg9[%c0_10, %c0_11, %c0_12] : memref<4x8x16xf32, #tpu.memory_space<vmem>>, vector<4x8x16xf32>
      tpu.vector_store %arg9[%c0_10, %c0_11, %c0_12], %13 {strides = array<i32>} : memref<4x8x16xf32, #tpu.memory_space<vmem>>, vector<4x8x16xf32>,
    } else {
    }
    %3 = arith.cmpi sle, %arg2, %arg1 : i32
    %4 = arith.extui %3 : i1 to i32
    %c0_i32_1 = arith.constant 0 : i32
    %5 = arith.cmpi ne, %4, %c0_i32_1 : i32
    scf.if %5 {
      %c0 = arith.constant 0 : index
      %c0_3 = arith.constant 0 : index
      %c0_4 = arith.constant 0 : index
      %9 = vector.load %arg3[%c0, %c0_3, %c0_4] : memref<1x8x64xbf16, #tpu.memory_space<vmem>>, vector<1x8x64xbf16>
      %10 = vector.shape_cast %9 : vector<1x8x64xbf16> to vector<8x64xbf16>
      %c0_5 = arith.constant 0 : index
      %c0_6 = arith.constant 0 : index
      %c0_7 = arith.constant 0 : index
      %11 = vector.load %arg4[%c0_5, %c0_6, %c0_7] : memref<1x8x64xbf16, #tpu.memory_space<vmem>>, vector<1x8x64xbf16>
      %12 = vector.shape_cast %11 : vector<1x8x64xbf16> to vector<8x64xbf16>
      %c0_8 = arith.constant 0 : index
      %c0_9 = arith.constant 0 : index
      %c0_10 = arith.constant 0 : index
      %13 = vector.load %arg5[%c0_8, %c0_9, %c0_10] : memref<1x8x64xbf16, #tpu.memory_space<vmem>>, vector<1x8x64xbf16>
      %14 = vector.shape_cast %13 : vector<1x8x64xbf16> to vector<8x64xbf16>
      %c8_i32 = arith.constant 8 : i32
      %15 = arith.muli %arg1, %c8_i32 : i32
      %16 = tpu.iota {dimensions = array<i32: 0>} : vector<8x8xi32>
      %17 = vector.broadcast %15 : i32 to vector<8x8xi32>
      %18 = arith.addi %17, %16 : vector<8x8xi32>
      %c8_i32_11 = arith.constant 8 : i32
      %19 = arith.muli %arg2, %c8_i32_11 : i32
      %20 = tpu.iota {dimensions = array<i32: 1>} : vector<8x8xi32>
      %21 = vector.broadcast %19 : i32 to vector<8x8xi32>
      %22 = arith.addi %21, %20 : vector<8x8xi32>
      %23 = arith.cmpi sle, %22, %18 : vector<8x8xi32>
      %cst = arith.constant 0.000000e+00 : f32
      %cst_12 = arith.constant -1.000000e+30 : f32
      %24 = vector.broadcast %cst : f32 to vector<8x8xf32>
      %25 = vector.broadcast %cst_12 : f32 to vector<8x8xf32>
      %26 = arith.select %23, %24, %25 : vector<8x8xi1>, vector<8x8xf32>
      %27 = vector.extract_strided_slice %10 {offsets = [0, 0], sizes = [8, 16], strides = [1, 1]} : vector<8x64xbf16> to vector<8x16xbf16>
      %28 = vector.extract_strided_slice %12 {offsets = [0, 0], sizes = [8, 16], strides = [1, 1]} : vector<8x64xbf16> to vector<8x16xbf16>
      %cst_13 = arith.constant dense<0.000000e+00> : vector<8x8xf32>
      %29 = tpu.matmul %27, %28, %cst_13 {dimension_numbers = #tpu.dot_dimension_numbers<[1], [1], [0], [0], [0, 0, 1, 0], [], []>} : vector<8x16xbf16>, vector<8x16xbf16>, vector<8x8xf32> -> vector<8x8xf32>
      %30 = arith.addf %29, %26 : vector<8x8xf32>
      %c0_14 = arith.constant 0 : index
      %c0_15 = arith.constant 0 : index
      %c0_16 = arith.constant 0 : index
      %31 = vector.load %arg7[%c0_14, %c0_15, %c0_16] : memref<4x8x1xf32, #tpu.memory_space<vmem>>, vector<1x8x1xf32>
      %32 = vector.shape_cast %31 : vector<1x8x1xf32> to vector<8x1xf32>
      %cst_17 = arith.constant dense<0xFF800000> : vector<8xf32>
      %33 = vector.multi_reduction <maximumf>, %30, %cst_17 [1] : vector<8x8xf32> to vector<8xf32>
      %34 = vector.shape_cast %33 : vector<8xf32> to vector<8x1xf32>
      %35 = arith.maximumf %32, %34 : vector<8x1xf32>
      %36 = arith.subf %32, %35 : vector<8x1xf32>
      %37 = math.exp %36 : vector<8x1xf32>
      %38 = vector.broadcast %35 : vector<8x1xf32> to vector<8x8xf32>
      %39 = arith.subf %30, %38 : vector<8x8xf32>
      %40 = math.exp %39 : vector<8x8xf32>
      %c0_18 = arith.constant 0 : index
      %c0_19 = arith.constant 0 : index
      %c0_20 = arith.constant 0 : index
      %41 = vector.load %arg8[%c0_18, %c0_19, %c0_20] : memref<4x8x1xf32, #tpu.memory_space<vmem>>, vector<1x8x1xf32>
      %42 = vector.shape_cast %41 : vector<1x8x1xf32> to vector<8x1xf32>
      %43 = arith.mulf %37, %42 : vector<8x1xf32>
      %cst_21 = arith.constant dense<0.000000e+00> : vector<8xf32>
      %44 = vector.multi_reduction <add>, %40, %cst_21 [1] : vector<8x8xf32> to vector<8xf32>
      %45 = vector.shape_cast %44 : vector<8xf32> to vector<8x1xf32>
      %46 = arith.addf %43, %45 : vector<8x1xf32>
      %c0_22 = arith.constant 0 : index
      %c0_23 = arith.constant 0 : index
      %c0_24 = arith.constant 0 : index
      %47 = vector.load %arg8[%c0_22, %c0_23, %c0_24] : memref<4x8x1xf32, #tpu.memory_space<vmem>>, vector<1x8x1xf32>
      %48 = vector.shape_cast %47 : vector<1x8x1xf32> to vector<8x1xf32>
      %49 = vector.shape_cast %46 : vector<8x1xf32> to vector<1x8x1xf32>
      tpu.vector_store %arg8[%c0_22, %c0_23, %c0_24], %49 {strides = array<i32>} : memref<4x8x1xf32, #tpu.memory_space<vmem>>, vector<1x8x1xf32>,
      %50 = arith.truncf %40 : vector<8x8xf32> to vector<8x8xbf16>
      %51 = vector.extract_strided_slice %14 {offsets = [0, 0], sizes = [8, 16], strides = [1, 1]} : vector<8x64xbf16> to vector<8x16xbf16>
      %cst_25 = arith.constant dense<0.000000e+00> : vector<8x16xf32>
      %52 = tpu.matmul %50, %51, %cst_25 {dimension_numbers = #tpu.dot_dimension_numbers<[1], [0], [0], [1], [0, 0, 1, 1], [], []>} : vector<8x8xbf16>, vector<8x16xbf16>, vector<8x16xf32> -> vector<8x16xf32>
      %c0_26 = arith.constant 0 : index
      %c0_27 = arith.constant 0 : index
      %c0_28 = arith.constant 0 : index
      %53 = vector.load %arg9[%c0_26, %c0_27, %c0_28] : memref<4x8x16xf32, #tpu.memory_space<vmem>>, vector<1x8x16xf32>
      %54 = vector.shape_cast %53 : vector<1x8x16xf32> to vector<8x16xf32>
      %55 = vector.broadcast %37 : vector<8x1xf32> to vector<8x16xf32>
      %56 = arith.mulf %55, %54 : vector<8x16xf32>
      %57 = arith.addf %56, %52 : vector<8x16xf32>
      %c0_29 = arith.constant 0 : index
      %c0_30 = arith.constant 0 : index
      %c0_31 = arith.constant 0 : index
      %58 = vector.load %arg9[%c0_29, %c0_30, %c0_31] : memref<4x8x16xf32, #tpu.memory_space<vmem>>, vector<1x8x16xf32>
      %59 = vector.shape_cast %58 : vector<1x8x16xf32> to vector<8x16xf32>
      %60 = vector.shape_cast %57 : vector<8x16xf32> to vector<1x8x16xf32>
      tpu.vector_store %arg9[%c0_29, %c0_30, %c0_31], %60 {strides = array<i32>} : memref<4x8x16xf32, #tpu.memory_space<vmem>>, vector<1x8x16xf32>,
      %c0_32 = arith.constant 0 : index
      %c0_33 = arith.constant 0 : index
      %c0_34 = arith.constant 0 : index
      %61 = vector.load %arg7[%c0_32, %c0_33, %c0_34] : memref<4x8x1xf32, #tpu.memory_space<vmem>>, vector<1x8x1xf32>
      %62 = vector.shape_cast %61 : vector<1x8x1xf32> to vector<8x1xf32>
      %63 = vector.shape_cast %35 : vector<8x1xf32> to vector<1x8x1xf32>
      tpu.vector_store %arg7[%c0_32, %c0_33, %c0_34], %63 {strides = array<i32>} : memref<4x8x1xf32, #tpu.memory_space<vmem>>, vector<1x8x1xf32>,
      %64 = vector.extract_strided_slice %10 {offsets = [0, 16], sizes = [8, 16], strides = [1, 1]} : vector<8x64xbf16> to vector<8x16xbf16>
      %65 = vector.extract_strided_slice %12 {offsets = [0, 16], sizes = [8, 16], strides = [1, 1]} : vector<8x64xbf16> to vector<8x16xbf16>
      %cst_35 = arith.constant dense<0.000000e+00> : vector<8x8xf32>
      %66 = tpu.matmul %64, %65, %cst_35 {dimension_numbers = #tpu.dot_dimension_numbers<[1], [1], [0], [0], [0, 0, 1, 0], [], []>} : vector<8x16xbf16>, vector<8x16xbf16>, vector<8x8xf32> -> vector<8x8xf32>
      %67 = arith.addf %66, %26 : vector<8x8xf32>
      %c1 = arith.constant 1 : index
      %c0_36 = arith.constant 0 : index
      %c0_37 = arith.constant 0 : index
      %68 = vector.load %arg7[%c1, %c0_36, %c0_37] : memref<4x8x1xf32, #tpu.memory_space<vmem>>, vector<1x8x1xf32>
      %69 = vector.shape_cast %68 : vector<1x8x1xf32> to vector<8x1xf32>
      %cst_38 = arith.constant dense<0xFF800000> : vector<8xf32>
      %70 = vector.multi_reduction <maximumf>, %67, %cst_38 [1] : vector<8x8xf32> to vector<8xf32>
      %71 = vector.shape_cast %70 : vector<8xf32> to vector<8x1xf32>
      %72 = arith.maximumf %69, %71 : vector<8x1xf32>
      %73 = arith.subf %69, %72 : vector<8x1xf32>
      %74 = math.exp %73 : vector<8x1xf32>
      %75 = vector.broadcast %72 : vector<8x1xf32> to vector<8x8xf32>
      %76 = arith.subf %67, %75 : vector<8x8xf32>
      %77 = math.exp %76 : vector<8x8xf32>
      %c1_39 = arith.constant 1 : index
      %c0_40 = arith.constant 0 : index
      %c0_41 = arith.constant 0 : index
      %78 = vector.load %arg8[%c1_39, %c0_40, %c0_41] : memref<4x8x1xf32, #tpu.memory_space<vmem>>, vector<1x8x1xf32>
      %79 = vector.shape_cast %78 : vector<1x8x1xf32> to vector<8x1xf32>
      %80 = arith.mulf %74, %79 : vector<8x1xf32>
      %cst_42 = arith.constant dense<0.000000e+00> : vector<8xf32>
      %81 = vector.multi_reduction <add>, %77, %cst_42 [1] : vector<8x8xf32> to vector<8xf32>
      %82 = vector.shape_cast %81 : vector<8xf32> to vector<8x1xf32>
      %83 = arith.addf %80, %82 : vector<8x1xf32>
      %c1_43 = arith.constant 1 : index
      %c0_44 = arith.constant 0 : index
      %c0_45 = arith.constant 0 : index
      %84 = vector.load %arg8[%c1_43, %c0_44, %c0_45] : memref<4x8x1xf32, #tpu.memory_space<vmem>>, vector<1x8x1xf32>
      %85 = vector.shape_cast %84 : vector<1x8x1xf32> to vector<8x1xf32>
      %86 = vector.shape_cast %83 : vector<8x1xf32> to vector<1x8x1xf32>
      tpu.vector_store %arg8[%c1_43, %c0_44, %c0_45], %86 {strides = array<i32>} : memref<4x8x1xf32, #tpu.memory_space<vmem>>, vector<1x8x1xf32>,
      %87 = arith.truncf %77 : vector<8x8xf32> to vector<8x8xbf16>
      %88 = vector.extract_strided_slice %14 {offsets = [0, 16], sizes = [8, 16], strides = [1, 1]} : vector<8x64xbf16> to vector<8x16xbf16>
      %cst_46 = arith.constant dense<0.000000e+00> : vector<8x16xf32>
      %89 = tpu.matmul %87, %88, %cst_46 {dimension_numbers = #tpu.dot_dimension_numbers<[1], [0], [0], [1], [0, 0, 1, 1], [], []>} : vector<8x8xbf16>, vector<8x16xbf16>, vector<8x16xf32> -> vector<8x16xf32>
      %c1_47 = arith.constant 1 : index
      %c0_48 = arith.constant 0 : index
      %c0_49 = arith.constant 0 : index
      %90 = vector.load %arg9[%c1_47, %c0_48, %c0_49] : memref<4x8x16xf32, #tpu.memory_space<vmem>>, vector<1x8x16xf32>
      %91 = vector.shape_cast %90 : vector<1x8x16xf32> to vector<8x16xf32>
      %92 = vector.broadcast %74 : vector<8x1xf32> to vector<8x16xf32>
      %93 = arith.mulf %92, %91 : vector<8x16xf32>
      %94 = arith.addf %93, %89 : vector<8x16xf32>
      %c1_50 = arith.constant 1 : index
      %c0_51 = arith.constant 0 : index
      %c0_52 = arith.constant 0 : index
      %95 = vector.load %arg9[%c1_50, %c0_51, %c0_52] : memref<4x8x16xf32, #tpu.memory_space<vmem>>, vector<1x8x16xf32>
      %96 = vector.shape_cast %95 : vector<1x8x16xf32> to vector<8x16xf32>
      %97 = vector.shape_cast %94 : vector<8x16xf32> to vector<1x8x16xf32>
      tpu.vector_store %arg9[%c1_50, %c0_51, %c0_52], %97 {strides = array<i32>} : memref<4x8x16xf32, #tpu.memory_space<vmem>>, vector<1x8x16xf32>,
      %c1_53 = arith.constant 1 : index
      %c0_54 = arith.constant 0 : index
      %c0_55 = arith.constant 0 : index
      %98 = vector.load %arg7[%c1_53, %c0_54, %c0_55] : memref<4x8x1xf32, #tpu.memory_space<vmem>>, vector<1x8x1xf32>
      %99 = vector.shape_cast %98 : vector<1x8x1xf32> to vector<8x1xf32>
      %100 = vector.shape_cast %72 : vector<8x1xf32> to vector<1x8x1xf32>
      tpu.vector_store %arg7[%c1_53, %c0_54, %c0_55], %100 {strides = array<i32>} : memref<4x8x1xf32, #tpu.memory_space<vmem>>, vector<1x8x1xf32>,
      %101 = vector.extract_strided_slice %10 {offsets = [0, 32], sizes = [8, 16], strides = [1, 1]} : vector<8x64xbf16> to vector<8x16xbf16>
      %102 = vector.extract_strided_slice %12 {offsets = [0, 32], sizes = [8, 16], strides = [1, 1]} : vector<8x64xbf16> to vector<8x16xbf16>
      %cst_56 = arith.constant dense<0.000000e+00> : vector<8x8xf32>
      %103 = tpu.matmul %101, %102, %cst_56 {dimension_numbers = #tpu.dot_dimension_numbers<[1], [1], [0], [0], [0, 0, 1, 0], [], []>} : vector<8x16xbf16>, vector<8x16xbf16>, vector<8x8xf32> -> vector<8x8xf32>
      %104 = arith.addf %103, %26 : vector<8x8xf32>
      %c2 = arith.constant 2 : index
      %c0_57 = arith.constant 0 : index
      %c0_58 = arith.constant 0 : index
      %105 = vector.load %arg7[%c2, %c0_57, %c0_58] : memref<4x8x1xf32, #tpu.memory_space<vmem>>, vector<1x8x1xf32>
      %106 = vector.shape_cast %105 : vector<1x8x1xf32> to vector<8x1xf32>
      %cst_59 = arith.constant dense<0xFF800000> : vector<8xf32>
      %107 = vector.multi_reduction <maximumf>, %104, %cst_59 [1] : vector<8x8xf32> to vector<8xf32>
      %108 = vector.shape_cast %107 : vector<8xf32> to vector<8x1xf32>
      %109 = arith.maximumf %106, %108 : vector<8x1xf32>
      %110 = arith.subf %106, %109 : vector<8x1xf32>
      %111 = math.exp %110 : vector<8x1xf32>
      %112 = vector.broadcast %109 : vector<8x1xf32> to vector<8x8xf32>
      %113 = arith.subf %104, %112 : vector<8x8xf32>
      %114 = math.exp %113 : vector<8x8xf32>
      %c2_60 = arith.constant 2 : index
      %c0_61 = arith.constant 0 : index
      %c0_62 = arith.constant 0 : index
      %115 = vector.load %arg8[%c2_60, %c0_61, %c0_62] : memref<4x8x1xf32, #tpu.memory_space<vmem>>, vector<1x8x1xf32>
      %116 = vector.shape_cast %115 : vector<1x8x1xf32> to vector<8x1xf32>
      %117 = arith.mulf %111, %116 : vector<8x1xf32>
      %cst_63 = arith.constant dense<0.000000e+00> : vector<8xf32>
      %118 = vector.multi_reduction <add>, %114, %cst_63 [1] : vector<8x8xf32> to vector<8xf32>
      %119 = vector.shape_cast %118 : vector<8xf32> to vector<8x1xf32>
      %120 = arith.addf %117, %119 : vector<8x1xf32>
      %c2_64 = arith.constant 2 : index
      %c0_65 = arith.constant 0 : index
      %c0_66 = arith.constant 0 : index
      %121 = vector.load %arg8[%c2_64, %c0_65, %c0_66] : memref<4x8x1xf32, #tpu.memory_space<vmem>>, vector<1x8x1xf32>
      %122 = vector.shape_cast %121 : vector<1x8x1xf32> to vector<8x1xf32>
      %123 = vector.shape_cast %120 : vector<8x1xf32> to vector<1x8x1xf32>
      tpu.vector_store %arg8[%c2_64, %c0_65, %c0_66], %123 {strides = array<i32>} : memref<4x8x1xf32, #tpu.memory_space<vmem>>, vector<1x8x1xf32>,
      %124 = arith.truncf %114 : vector<8x8xf32> to vector<8x8xbf16>
      %125 = vector.extract_strided_slice %14 {offsets = [0, 32], sizes = [8, 16], strides = [1, 1]} : vector<8x64xbf16> to vector<8x16xbf16>
      %cst_67 = arith.constant dense<0.000000e+00> : vector<8x16xf32>
      %126 = tpu.matmul %124, %125, %cst_67 {dimension_numbers = #tpu.dot_dimension_numbers<[1], [0], [0], [1], [0, 0, 1, 1], [], []>} : vector<8x8xbf16>, vector<8x16xbf16>, vector<8x16xf32> -> vector<8x16xf32>
      %c2_68 = arith.constant 2 : index
      %c0_69 = arith.constant 0 : index
      %c0_70 = arith.constant 0 : index
      %127 = vector.load %arg9[%c2_68, %c0_69, %c0_70] : memref<4x8x16xf32, #tpu.memory_space<vmem>>, vector<1x8x16xf32>
      %128 = vector.shape_cast %127 : vector<1x8x16xf32> to vector<8x16xf32>
      %129 = vector.broadcast %111 : vector<8x1xf32> to vector<8x16xf32>
      %130 = arith.mulf %129, %128 : vector<8x16xf32>
      %131 = arith.addf %130, %126 : vector<8x16xf32>
      %c2_71 = arith.constant 2 : index
      %c0_72 = arith.constant 0 : index
      %c0_73 = arith.constant 0 : index
      %132 = vector.load %arg9[%c2_71, %c0_72, %c0_73] : memref<4x8x16xf32, #tpu.memory_space<vmem>>, vector<1x8x16xf32>
      %133 = vector.shape_cast %132 : vector<1x8x16xf32> to vector<8x16xf32>
      %134 = vector.shape_cast %131 : vector<8x16xf32> to vector<1x8x16xf32>
      tpu.vector_store %arg9[%c2_71, %c0_72, %c0_73], %134 {strides = array<i32>} : memref<4x8x16xf32, #tpu.memory_space<vmem>>, vector<1x8x16xf32>,
      %c2_74 = arith.constant 2 : index
      %c0_75 = arith.constant 0 : index
      %c0_76 = arith.constant 0 : index
      %135 = vector.load %arg7[%c2_74, %c0_75, %c0_76] : memref<4x8x1xf32, #tpu.memory_space<vmem>>, vector<1x8x1xf32>
      %136 = vector.shape_cast %135 : vector<1x8x1xf32> to vector<8x1xf32>
      %137 = vector.shape_cast %109 : vector<8x1xf32> to vector<1x8x1xf32>
      tpu.vector_store %arg7[%c2_74, %c0_75, %c0_76], %137 {strides = array<i32>} : memref<4x8x1xf32, #tpu.memory_space<vmem>>, vector<1x8x1xf32>,
      %138 = vector.extract_strided_slice %10 {offsets = [0, 48], sizes = [8, 16], strides = [1, 1]} : vector<8x64xbf16> to vector<8x16xbf16>
      %139 = vector.extract_strided_slice %12 {offsets = [0, 48], sizes = [8, 16], strides = [1, 1]} : vector<8x64xbf16> to vector<8x16xbf16>
      %cst_77 = arith.constant dense<0.000000e+00> : vector<8x8xf32>
      %140 = tpu.matmul %138, %139, %cst_77 {dimension_numbers = #tpu.dot_dimension_numbers<[1], [1], [0], [0], [0, 0, 1, 0], [], []>} : vector<8x16xbf16>, vector<8x16xbf16>, vector<8x8xf32> -> vector<8x8xf32>
      %141 = arith.addf %140, %26 : vector<8x8xf32>
      %c3 = arith.constant 3 : index
      %c0_78 = arith.constant 0 : index
      %c0_79 = arith.constant 0 : index
      %142 = vector.load %arg7[%c3, %c0_78, %c0_79] : memref<4x8x1xf32, #tpu.memory_space<vmem>>, vector<1x8x1xf32>
      %143 = vector.shape_cast %142 : vector<1x8x1xf32> to vector<8x1xf32>
      %cst_80 = arith.constant dense<0xFF800000> : vector<8xf32>
      %144 = vector.multi_reduction <maximumf>, %141, %cst_80 [1] : vector<8x8xf32> to vector<8xf32>
      %145 = vector.shape_cast %144 : vector<8xf32> to vector<8x1xf32>
      %146 = arith.maximumf %143, %145 : vector<8x1xf32>
      %147 = arith.subf %143, %146 : vector<8x1xf32>
      %148 = math.exp %147 : vector<8x1xf32>
      %149 = vector.broadcast %146 : vector<8x1xf32> to vector<8x8xf32>
      %150 = arith.subf %141, %149 : vector<8x8xf32>
      %151 = math.exp %150 : vector<8x8xf32>
      %c3_81 = arith.constant 3 : index
      %c0_82 = arith.constant 0 : index
      %c0_83 = arith.constant 0 : index
      %152 = vector.load %arg8[%c3_81, %c0_82, %c0_83] : memref<4x8x1xf32, #tpu.memory_space<vmem>>, vector<1x8x1xf32>
      %153 = vector.shape_cast %152 : vector<1x8x1xf32> to vector<8x1xf32>
      %154 = arith.mulf %148, %153 : vector<8x1xf32>
      %cst_84 = arith.constant dense<0.000000e+00> : vector<8xf32>
      %155 = vector.multi_reduction <add>, %151, %cst_84 [1] : vector<8x8xf32> to vector<8xf32>
      %156 = vector.shape_cast %155 : vector<8xf32> to vector<8x1xf32>
      %157 = arith.addf %154, %156 : vector<8x1xf32>
      %c3_85 = arith.constant 3 : index
      %c0_86 = arith.constant 0 : index
      %c0_87 = arith.constant 0 : index
      %158 = vector.load %arg8[%c3_85, %c0_86, %c0_87] : memref<4x8x1xf32, #tpu.memory_space<vmem>>, vector<1x8x1xf32>
      %159 = vector.shape_cast %158 : vector<1x8x1xf32> to vector<8x1xf32>
      %160 = vector.shape_cast %157 : vector<8x1xf32> to vector<1x8x1xf32>
      tpu.vector_store %arg8[%c3_85, %c0_86, %c0_87], %160 {strides = array<i32>} : memref<4x8x1xf32, #tpu.memory_space<vmem>>, vector<1x8x1xf32>,
      %161 = arith.truncf %151 : vector<8x8xf32> to vector<8x8xbf16>
      %162 = vector.extract_strided_slice %14 {offsets = [0, 48], sizes = [8, 16], strides = [1, 1]} : vector<8x64xbf16> to vector<8x16xbf16>
      %cst_88 = arith.constant dense<0.000000e+00> : vector<8x16xf32>
      %163 = tpu.matmul %161, %162, %cst_88 {dimension_numbers = #tpu.dot_dimension_numbers<[1], [0], [0], [1], [0, 0, 1, 1], [], []>} : vector<8x8xbf16>, vector<8x16xbf16>, vector<8x16xf32> -> vector<8x16xf32>
      %c3_89 = arith.constant 3 : index
      %c0_90 = arith.constant 0 : index
      %c0_91 = arith.constant 0 : index
      %164 = vector.load %arg9[%c3_89, %c0_90, %c0_91] : memref<4x8x16xf32, #tpu.memory_space<vmem>>, vector<1x8x16xf32>
      %165 = vector.shape_cast %164 : vector<1x8x16xf32> to vector<8x16xf32>
      %166 = vector.broadcast %148 : vector<8x1xf32> to vector<8x16xf32>
      %167 = arith.mulf %166, %165 : vector<8x16xf32>
      %168 = arith.addf %167, %163 : vector<8x16xf32>
      %c3_92 = arith.constant 3 : index
      %c0_93 = arith.constant 0 : index
      %c0_94 = arith.constant 0 : index
      %169 = vector.load %arg9[%c3_92, %c0_93, %c0_94] : memref<4x8x16xf32, #tpu.memory_space<vmem>>, vector<1x8x16xf32>
      %170 = vector.shape_cast %169 : vector<1x8x16xf32> to vector<8x16xf32>
      %171 = vector.shape_cast %168 : vector<8x16xf32> to vector<1x8x16xf32>
      tpu.vector_store %arg9[%c3_92, %c0_93, %c0_94], %171 {strides = array<i32>} : memref<4x8x16xf32, #tpu.memory_space<vmem>>, vector<1x8x16xf32>,
      %c3_95 = arith.constant 3 : index
      %c0_96 = arith.constant 0 : index
      %c0_97 = arith.constant 0 : index
      %172 = vector.load %arg7[%c3_95, %c0_96, %c0_97] : memref<4x8x1xf32, #tpu.memory_space<vmem>>, vector<1x8x1xf32>
      %173 = vector.shape_cast %172 : vector<1x8x1xf32> to vector<8x1xf32>
      %174 = vector.shape_cast %146 : vector<8x1xf32> to vector<1x8x1xf32>
      tpu.vector_store %arg7[%c3_95, %c0_96, %c0_97], %174 {strides = array<i32>} : memref<4x8x1xf32, #tpu.memory_space<vmem>>, vector<1x8x1xf32>,
    } else {
    }
    %6 = arith.cmpi eq, %arg2, %arg1 : i32
    %7 = arith.extui %6 : i1 to i32
    %c0_i32_2 = arith.constant 0 : i32
    %8 = arith.cmpi ne, %7, %c0_i32_2 : i32
    scf.if %8 {
      %c0 = arith.constant 0 : index
      %c0_3 = arith.constant 0 : index
      %c0_4 = arith.constant 0 : index
      %9 = vector.load %arg8[%c0, %c0_3, %c0_4] : memref<4x8x1xf32, #tpu.memory_space<vmem>>, vector<1x8x1xf32>
      %10 = vector.shape_cast %9 : vector<1x8x1xf32> to vector<8x1xf32>
      %11 = tpu.reciprocal %10 {approx = true} : vector<8x1xf32> -> vector<8x1xf32>
      %c0_5 = arith.constant 0 : index
      %c0_6 = arith.constant 0 : index
      %c0_7 = arith.constant 0 : index
      %12 = vector.load %arg9[%c0_5, %c0_6, %c0_7] : memref<4x8x16xf32, #tpu.memory_space<vmem>>, vector<1x8x16xf32>
      %13 = vector.shape_cast %12 : vector<1x8x16xf32> to vector<8x16xf32>
      %14 = vector.broadcast %11 : vector<8x1xf32> to vector<8x16xf32>
      %15 = arith.mulf %13, %14 : vector<8x16xf32>
      %c1 = arith.constant 1 : index
      %c0_8 = arith.constant 0 : index
      %c0_9 = arith.constant 0 : index
      %16 = vector.load %arg8[%c1, %c0_8, %c0_9] : memref<4x8x1xf32, #tpu.memory_space<vmem>>, vector<1x8x1xf32>
      %17 = vector.shape_cast %16 : vector<1x8x1xf32> to vector<8x1xf32>
      %18 = tpu.reciprocal %17 {approx = true} : vector<8x1xf32> -> vector<8x1xf32>
      %c1_10 = arith.constant 1 : index
      %c0_11 = arith.constant 0 : index
      %c0_12 = arith.constant 0 : index
      %19 = vector.load %arg9[%c1_10, %c0_11, %c0_12] : memref<4x8x16xf32, #tpu.memory_space<vmem>>, vector<1x8x16xf32>
      %20 = vector.shape_cast %19 : vector<1x8x16xf32> to vector<8x16xf32>
      %21 = vector.broadcast %18 : vector<8x1xf32> to vector<8x16xf32>
      %22 = arith.mulf %20, %21 : vector<8x16xf32>
      %c2 = arith.constant 2 : index
      %c0_13 = arith.constant 0 : index
      %c0_14 = arith.constant 0 : index
      %23 = vector.load %arg8[%c2, %c0_13, %c0_14] : memref<4x8x1xf32, #tpu.memory_space<vmem>>, vector<1x8x1xf32>
      %24 = vector.shape_cast %23 : vector<1x8x1xf32> to vector<8x1xf32>
      %25 = tpu.reciprocal %24 {approx = true} : vector<8x1xf32> -> vector<8x1xf32>
      %c2_15 = arith.constant 2 : index
      %c0_16 = arith.constant 0 : index
      %c0_17 = arith.constant 0 : index
      %26 = vector.load %arg9[%c2_15, %c0_16, %c0_17] : memref<4x8x16xf32, #tpu.memory_space<vmem>>, vector<1x8x16xf32>
      %27 = vector.shape_cast %26 : vector<1x8x16xf32> to vector<8x16xf32>
      %28 = vector.broadcast %25 : vector<8x1xf32> to vector<8x16xf32>
      %29 = arith.mulf %27, %28 : vector<8x16xf32>
      %c3 = arith.constant 3 : index
      %c0_18 = arith.constant 0 : index
      %c0_19 = arith.constant 0 : index
      %30 = vector.load %arg8[%c3, %c0_18, %c0_19] : memref<4x8x1xf32, #tpu.memory_space<vmem>>, vector<1x8x1xf32>
      %31 = vector.shape_cast %30 : vector<1x8x1xf32> to vector<8x1xf32>
      %32 = tpu.reciprocal %31 {approx = true} : vector<8x1xf32> -> vector<8x1xf32>
      %c3_20 = arith.constant 3 : index
      %c0_21 = arith.constant 0 : index
      %c0_22 = arith.constant 0 : index
      %33 = vector.load %arg9[%c3_20, %c0_21, %c0_22] : memref<4x8x16xf32, #tpu.memory_space<vmem>>, vector<1x8x16xf32>
      %34 = vector.shape_cast %33 : vector<1x8x16xf32> to vector<8x16xf32>
      %35 = vector.broadcast %32 : vector<8x1xf32> to vector<8x16xf32>
      %36 = arith.mulf %34, %35 : vector<8x16xf32>
      %37 = tpu.concatenate %15, %22, %29, %36 in 1 : vector<8x16xf32>, vector<8x16xf32>, vector<8x16xf32>, vector<8x16xf32> -> vector<8x64xf32>
      %38 = arith.truncf %37 : vector<8x64xf32> to vector<8x64xbf16>
      %c0_23 = arith.constant 0 : index
      %c0_24 = arith.constant 0 : index
      %c0_25 = arith.constant 0 : index
      %39 = vector.load %arg6[%c0_23, %c0_24, %c0_25] : memref<1x8x64xbf16, #tpu.memory_space<vmem>>, vector<1x8x64xbf16>
      %40 = vector.shape_cast %39 : vector<1x8x64xbf16> to vector<8x64xbf16>
      %41 = vector.shape_cast %38 : vector<8x64xbf16> to vector<1x8x64xbf16>
      tpu.vector_store %arg6[%c0_23, %c0_24, %c0_25], %41 {strides = array<i32>} : memref<1x8x64xbf16, #tpu.memory_space<vmem>>, vector<1x8x64xbf16>,
    } else {
    }
    return
  }
  func.func @transform_0(%arg0: i32, %arg1: i32, %arg2: i32) -> (i32, i32, i32) {
    %c0_i32 = arith.constant 0 : i32
    %c0_i32_0 = arith.constant 0 : i32
    return %arg0, %arg1, %c0_i32 : i32, i32, i32
  }
  func.func @transform_1(%arg0: i32, %arg1: i32, %arg2: i32) -> (i32, i32, i32) {
    %0 = arith.minsi %arg2, %arg1 : i32
    %c0_i32 = arith.constant 0 : i32
    %c0_i32_0 = arith.constant 0 : i32
    return %arg0, %0, %c0_i32 : i32, i32, i32
  }
  func.func @transform_2(%arg0: i32, %arg1: i32, %arg2: i32) -> (i32, i32, i32) {
    %0 = arith.minsi %arg2, %arg1 : i32
    %c0_i32 = arith.constant 0 : i32
    %c0_i32_0 = arith.constant 0 : i32
    return %arg0, %0, %c0_i32 : i32, i32, i32
  }
  func.func @transform_3(%arg0: i32, %arg1: i32, %arg2: i32) -> (i32, i32, i32) {
    %c0_i32 = arith.constant 0 : i32
    %c0_i32_0 = arith.constant 0 : i32
    return %arg0, %arg1, %c0_i32 : i32, i32, i32
  }
}

module attributes {stable_mosaic.version = 11 : i64} {
  func.func @_rmsnorm_swiglu_residual_kernel(%arg0: i32, %arg1: i32, %arg2: memref<16x64xf32, #tpu.memory_space<vmem>>, %arg3: memref<1x64xf32, #tpu.memory_space<vmem>>, %arg4: memref<64x256xbf16, #tpu.memory_space<vmem>>, %arg5: memref<64x256xbf16, #tpu.memory_space<vmem>>, %arg6: memref<256x64xbf16, #tpu.memory_space<vmem>>, %arg7: memref<16x64xf32, #tpu.memory_space<vmem>>, %arg8: memref<16x64xbf16, #tpu.memory_space<vmem>>, %arg9: memref<16x64xf32, #tpu.memory_space<vmem>>) attributes {dimension_semantics = [#tpu.dimension_semantics<parallel>, #tpu.dimension_semantics<arbitrary>], iteration_bounds = array<i64: 1, 1>, scalar_prefetch = 0 : i64, scratch_operands = 2 : i64, tpu.core_type = #tpu.core_type<tc>, window_params = [{transform_indices = @transform_0, window_bounds = array<i64: 16, 64>}, {pipeline_mode = #tpu.pipeline_mode<synchronous>, transform_indices = @transform_1, window_bounds = array<i64: 1, 64>}, {transform_indices = @transform_2, window_bounds = array<i64: 64, 256>}, {transform_indices = @transform_3, window_bounds = array<i64: 64, 256>}, {transform_indices = @transform_4, window_bounds = array<i64: 256, 64>}, {transform_indices = @transform_5, window_bounds = array<i64: 16, 64>}]} {
    %c0_i32 = arith.constant 0 : i32
    %0 = arith.cmpi eq, %arg1, %c0_i32 : i32
    %1 = arith.extui %0 : i1 to i32
    %c0_i32_0 = arith.constant 0 : i32
    %2 = arith.cmpi ne, %1, %c0_i32_0 : i32
    scf.if %2 {
      %c0_17 = arith.constant 0 : index
      %c0_18 = arith.constant 0 : index
      %24 = vector.load %arg2[%c0_17, %c0_18] : memref<16x64xf32, #tpu.memory_space<vmem>>, vector<16x64xf32>
      %25 = arith.mulf %24, %24 : vector<16x64xf32>
      %cst_19 = arith.constant dense<0.000000e+00> : vector<16xf32>
      %26 = vector.multi_reduction <add>, %25, %cst_19 [1] : vector<16x64xf32> to vector<16xf32>
      %27 = vector.shape_cast %26 : vector<16xf32> to vector<16x1xf32>
      %cst_20 = arith.constant 6.400000e+01 : f32
      %28 = vector.broadcast %cst_20 : f32 to vector<16x1xf32>
      %29 = arith.divf %27, %28 : vector<16x1xf32>
      %cst_21 = arith.constant 9.99999993E-9 : f32
      %30 = vector.broadcast %cst_21 : f32 to vector<16x1xf32>
      %31 = arith.addf %29, %30 : vector<16x1xf32>
      %32 = math.rsqrt %31 : vector<16x1xf32>
      %33 = vector.broadcast %32 : vector<16x1xf32> to vector<16x64xf32>
      %34 = arith.mulf %24, %33 : vector<16x64xf32>
      %c0_22 = arith.constant 0 : index
      %c0_23 = arith.constant 0 : index
      %35 = vector.load %arg3[%c0_22, %c0_23] : memref<1x64xf32, #tpu.memory_space<vmem>>, vector<1x64xf32>
      %36 = vector.broadcast %35 : vector<1x64xf32> to vector<16x64xf32>
      %37 = arith.mulf %34, %36 : vector<16x64xf32>
      %38 = arith.truncf %37 : vector<16x64xf32> to vector<16x64xbf16>
      %c0_24 = arith.constant 0 : index
      %c0_25 = arith.constant 0 : index
      %39 = vector.load %arg8[%c0_24, %c0_25] : memref<16x64xbf16, #tpu.memory_space<vmem>>, vector<16x64xbf16>
      tpu.vector_store %arg8[%c0_24, %c0_25], %38 {strides = array<i32>} : memref<16x64xbf16, #tpu.memory_space<vmem>>, vector<16x64xbf16>,
      %cst_26 = arith.constant 0.000000e+00 : f32
      %40 = vector.broadcast %cst_26 : f32 to vector<16x64xf32>
      %c0_27 = arith.constant 0 : index
      %c0_28 = arith.constant 0 : index
      %41 = vector.load %arg9[%c0_27, %c0_28] : memref<16x64xf32, #tpu.memory_space<vmem>>, vector<16x64xf32>
      tpu.vector_store %arg9[%c0_27, %c0_28], %40 {strides = array<i32>} : memref<16x64xf32, #tpu.memory_space<vmem>>, vector<16x64xf32>,
    } else {
    }
    %c0 = arith.constant 0 : index
    %c0_1 = arith.constant 0 : index
    %3 = vector.load %arg8[%c0, %c0_1] : memref<16x64xbf16, #tpu.memory_space<vmem>>, vector<16x64xbf16>
    %c0_2 = arith.constant 0 : index
    %c0_3 = arith.constant 0 : index
    %4 = vector.load %arg4[%c0_2, %c0_3] : memref<64x256xbf16, #tpu.memory_space<vmem>>, vector<64x256xbf16>
    %cst = arith.constant dense<0.000000e+00> : vector<16x256xf32>
    %5 = tpu.matmul %3, %4, %cst {dimension_numbers = #tpu.dot_dimension_numbers<[1], [0], [0], [1], [0, 0, 1, 1], [], []>} : vector<16x64xbf16>, vector<64x256xbf16>, vector<16x256xf32> -> vector<16x256xf32>
    %c0_4 = arith.constant 0 : index
    %c0_5 = arith.constant 0 : index
    %6 = vector.load %arg5[%c0_4, %c0_5] : memref<64x256xbf16, #tpu.memory_space<vmem>>, vector<64x256xbf16>
    %cst_6 = arith.constant dense<0.000000e+00> : vector<16x256xf32>
    %7 = tpu.matmul %3, %6, %cst_6 {dimension_numbers = #tpu.dot_dimension_numbers<[1], [0], [0], [1], [0, 0, 1, 1], [], []>} : vector<16x64xbf16>, vector<64x256xbf16>, vector<16x256xf32> -> vector<16x256xf32>
    %8 = arith.negf %5 : vector<16x256xf32>
    %9 = math.exp %8 : vector<16x256xf32>
    %cst_7 = arith.constant 1.000000e+00 : f32
    %10 = vector.broadcast %cst_7 : f32 to vector<16x256xf32>
    %11 = arith.addf %10, %9 : vector<16x256xf32>
    %12 = arith.divf %10, %11 : vector<16x256xf32>
    %13 = arith.mulf %5, %12 : vector<16x256xf32>
    %14 = arith.mulf %13, %7 : vector<16x256xf32>
    %15 = arith.truncf %14 : vector<16x256xf32> to vector<16x256xbf16>
    %c0_8 = arith.constant 0 : index
    %c0_9 = arith.constant 0 : index
    %16 = vector.load %arg9[%c0_8, %c0_9] : memref<16x64xf32, #tpu.memory_space<vmem>>, vector<16x64xf32>
    %c0_10 = arith.constant 0 : index
    %c0_11 = arith.constant 0 : index
    %17 = vector.load %arg6[%c0_10, %c0_11] : memref<256x64xbf16, #tpu.memory_space<vmem>>, vector<256x64xbf16>
    %cst_12 = arith.constant dense<0.000000e+00> : vector<16x64xf32>
    %18 = tpu.matmul %15, %17, %cst_12 {dimension_numbers = #tpu.dot_dimension_numbers<[1], [0], [0], [1], [0, 0, 1, 1], [], []>} : vector<16x256xbf16>, vector<256x64xbf16>, vector<16x64xf32> -> vector<16x64xf32>
    %19 = arith.addf %16, %18 : vector<16x64xf32>
    %c0_13 = arith.constant 0 : index
    %c0_14 = arith.constant 0 : index
    %20 = vector.load %arg9[%c0_13, %c0_14] : memref<16x64xf32, #tpu.memory_space<vmem>>, vector<16x64xf32>
    tpu.vector_store %arg9[%c0_13, %c0_14], %19 {strides = array<i32>} : memref<16x64xf32, #tpu.memory_space<vmem>>, vector<16x64xf32>,
    %c0_i32_15 = arith.constant 0 : i32
    %21 = arith.cmpi eq, %arg1, %c0_i32_15 : i32
    %22 = arith.extui %21 : i1 to i32
    %c0_i32_16 = arith.constant 0 : i32
    %23 = arith.cmpi ne, %22, %c0_i32_16 : i32
    scf.if %23 {
      %c0_17 = arith.constant 0 : index
      %c0_18 = arith.constant 0 : index
      %24 = vector.load %arg2[%c0_17, %c0_18] : memref<16x64xf32, #tpu.memory_space<vmem>>, vector<16x64xf32>
      %c0_19 = arith.constant 0 : index
      %c0_20 = arith.constant 0 : index
      %25 = vector.load %arg9[%c0_19, %c0_20] : memref<16x64xf32, #tpu.memory_space<vmem>>, vector<16x64xf32>
      %26 = arith.addf %24, %25 : vector<16x64xf32>
      %c0_21 = arith.constant 0 : index
      %c0_22 = arith.constant 0 : index
      %27 = vector.load %arg7[%c0_21, %c0_22] : memref<16x64xf32, #tpu.memory_space<vmem>>, vector<16x64xf32>
      tpu.vector_store %arg7[%c0_21, %c0_22], %26 {strides = array<i32>} : memref<16x64xf32, #tpu.memory_space<vmem>>, vector<16x64xf32>,
    } else {
    }
    return
  }
  func.func @transform_0(%arg0: i32, %arg1: i32) -> (i32, i32) {
    %c0_i32 = arith.constant 0 : i32
    %c0_i32_0 = arith.constant 0 : i32
    return %arg0, %c0_i32 : i32, i32
  }
  func.func @transform_1(%arg0: i32, %arg1: i32) -> (i32, i32) {
    %c0_i32 = arith.constant 0 : i32
    %c0_i32_0 = arith.constant 0 : i32
    %c0_i32_1 = arith.constant 0 : i32
    return %c0_i32, %c0_i32_0 : i32, i32
  }
  func.func @transform_2(%arg0: i32, %arg1: i32) -> (i32, i32) {
    %c0_i32 = arith.constant 0 : i32
    %c0_i32_0 = arith.constant 0 : i32
    return %c0_i32, %arg1 : i32, i32
  }
  func.func @transform_3(%arg0: i32, %arg1: i32) -> (i32, i32) {
    %c0_i32 = arith.constant 0 : i32
    %c0_i32_0 = arith.constant 0 : i32
    return %c0_i32, %arg1 : i32, i32
  }
  func.func @transform_4(%arg0: i32, %arg1: i32) -> (i32, i32) {
    %c0_i32 = arith.constant 0 : i32
    %c0_i32_0 = arith.constant 0 : i32
    return %arg1, %c0_i32 : i32, i32
  }
  func.func @transform_5(%arg0: i32, %arg1: i32) -> (i32, i32) {
    %c0_i32 = arith.constant 0 : i32
    %c0_i32_0 = arith.constant 0 : i32
    return %arg0, %c0_i32 : i32, i32
  }
}

module attributes {stable_mosaic.version = 11 : i64} {
  func.func @_rmsnorm_qkv_rope_kernel(%arg0: i32, %arg1: memref<16x64xf32, #tpu.memory_space<vmem>>, %arg2: memref<1x64xf32, #tpu.memory_space<vmem>>, %arg3: memref<64x64xbf16, #tpu.memory_space<vmem>>, %arg4: memref<64x64xbf16, #tpu.memory_space<vmem>>, %arg5: memref<64x64xbf16, #tpu.memory_space<vmem>>, %arg6: memref<1x64xf32, #tpu.memory_space<vmem>>, %arg7: memref<1x64xf32, #tpu.memory_space<vmem>>, %arg8: memref<1x64xf32, #tpu.memory_space<vmem>>, %arg9: memref<16x16xf32, #tpu.memory_space<vmem>>, %arg10: memref<16x16xf32, #tpu.memory_space<vmem>>, %arg11: memref<16x64xbf16, #tpu.memory_space<vmem>>, %arg12: memref<16x64xbf16, #tpu.memory_space<vmem>>, %arg13: memref<16x64xbf16, #tpu.memory_space<vmem>>) attributes {dimension_semantics = [#tpu.dimension_semantics<parallel>], iteration_bounds = array<i64: 1>, scalar_prefetch = 0 : i64, scratch_operands = 0 : i64, tpu.core_type = #tpu.core_type<tc>, window_params = [{transform_indices = @transform_0, window_bounds = array<i64: 16, 64>}, {pipeline_mode = #tpu.pipeline_mode<synchronous>, transform_indices = @transform_1, window_bounds = array<i64: 1, 64>}, {pipeline_mode = #tpu.pipeline_mode<synchronous>, transform_indices = @transform_2, window_bounds = array<i64: 64, 64>}, {pipeline_mode = #tpu.pipeline_mode<synchronous>, transform_indices = @transform_3, window_bounds = array<i64: 64, 64>}, {pipeline_mode = #tpu.pipeline_mode<synchronous>, transform_indices = @transform_4, window_bounds = array<i64: 64, 64>}, {pipeline_mode = #tpu.pipeline_mode<synchronous>, transform_indices = @transform_5, window_bounds = array<i64: 1, 64>}, {pipeline_mode = #tpu.pipeline_mode<synchronous>, transform_indices = @transform_6, window_bounds = array<i64: 1, 64>}, {pipeline_mode = #tpu.pipeline_mode<synchronous>, transform_indices = @transform_7, window_bounds = array<i64: 1, 64>}, {transform_indices = @transform_8, window_bounds = array<i64: 16, 16>}, {transform_indices = @transform_9, window_bounds = array<i64: 16, 16>}, {transform_indices = @transform_10, window_bounds = array<i64: 16, 64>}, {transform_indices = @transform_11, window_bounds = array<i64: 16, 64>}, {transform_indices = @transform_12, window_bounds = array<i64: 16, 64>}]} {
    %c0 = arith.constant 0 : index
    %c0_0 = arith.constant 0 : index
    %0 = vector.load %arg1[%c0, %c0_0] : memref<16x64xf32, #tpu.memory_space<vmem>>, vector<16x64xf32>
    %1 = arith.mulf %0, %0 : vector<16x64xf32>
    %cst = arith.constant dense<0.000000e+00> : vector<16xf32>
    %2 = vector.multi_reduction <add>, %1, %cst [1] : vector<16x64xf32> to vector<16xf32>
    %3 = vector.shape_cast %2 : vector<16xf32> to vector<16x1xf32>
    %cst_1 = arith.constant 6.400000e+01 : f32
    %4 = vector.broadcast %cst_1 : f32 to vector<16x1xf32>
    %5 = arith.divf %3, %4 : vector<16x1xf32>
    %cst_2 = arith.constant 9.99999993E-9 : f32
    %6 = vector.broadcast %cst_2 : f32 to vector<16x1xf32>
    %7 = arith.addf %5, %6 : vector<16x1xf32>
    %8 = math.rsqrt %7 : vector<16x1xf32>
    %9 = vector.broadcast %8 : vector<16x1xf32> to vector<16x64xf32>
    %10 = arith.mulf %0, %9 : vector<16x64xf32>
    %c0_3 = arith.constant 0 : index
    %c0_4 = arith.constant 0 : index
    %11 = vector.load %arg2[%c0_3, %c0_4] : memref<1x64xf32, #tpu.memory_space<vmem>>, vector<1x64xf32>
    %12 = vector.broadcast %11 : vector<1x64xf32> to vector<16x64xf32>
    %13 = arith.mulf %10, %12 : vector<16x64xf32>
    %14 = arith.truncf %13 : vector<16x64xf32> to vector<16x64xbf16>
    %c0_5 = arith.constant 0 : index
    %c0_6 = arith.constant 0 : index
    %15 = vector.load %arg3[%c0_5, %c0_6] : memref<64x64xbf16, #tpu.memory_space<vmem>>, vector<64x64xbf16>
    %cst_7 = arith.constant dense<0.000000e+00> : vector<16x64xf32>
    %16 = tpu.matmul %14, %15, %cst_7 {dimension_numbers = #tpu.dot_dimension_numbers<[1], [0], [0], [1], [0, 0, 1, 1], [], []>} : vector<16x64xbf16>, vector<64x64xbf16>, vector<16x64xf32> -> vector<16x64xf32>
    %c0_8 = arith.constant 0 : index
    %c0_9 = arith.constant 0 : index
    %17 = vector.load %arg6[%c0_8, %c0_9] : memref<1x64xf32, #tpu.memory_space<vmem>>, vector<1x64xf32>
    %18 = vector.broadcast %17 : vector<1x64xf32> to vector<16x64xf32>
    %19 = arith.addf %16, %18 : vector<16x64xf32>
    %c0_10 = arith.constant 0 : index
    %c0_11 = arith.constant 0 : index
    %20 = vector.load %arg4[%c0_10, %c0_11] : memref<64x64xbf16, #tpu.memory_space<vmem>>, vector<64x64xbf16>
    %cst_12 = arith.constant dense<0.000000e+00> : vector<16x64xf32>
    %21 = tpu.matmul %14, %20, %cst_12 {dimension_numbers = #tpu.dot_dimension_numbers<[1], [0], [0], [1], [0, 0, 1, 1], [], []>} : vector<16x64xbf16>, vector<64x64xbf16>, vector<16x64xf32> -> vector<16x64xf32>
    %c0_13 = arith.constant 0 : index
    %c0_14 = arith.constant 0 : index
    %22 = vector.load %arg7[%c0_13, %c0_14] : memref<1x64xf32, #tpu.memory_space<vmem>>, vector<1x64xf32>
    %23 = vector.broadcast %22 : vector<1x64xf32> to vector<16x64xf32>
    %24 = arith.addf %21, %23 : vector<16x64xf32>
    %c0_15 = arith.constant 0 : index
    %c0_16 = arith.constant 0 : index
    %25 = vector.load %arg5[%c0_15, %c0_16] : memref<64x64xbf16, #tpu.memory_space<vmem>>, vector<64x64xbf16>
    %cst_17 = arith.constant dense<0.000000e+00> : vector<16x64xf32>
    %26 = tpu.matmul %14, %25, %cst_17 {dimension_numbers = #tpu.dot_dimension_numbers<[1], [0], [0], [1], [0, 0, 1, 1], [], []>} : vector<16x64xbf16>, vector<64x64xbf16>, vector<16x64xf32> -> vector<16x64xf32>
    %c0_18 = arith.constant 0 : index
    %c0_19 = arith.constant 0 : index
    %27 = vector.load %arg8[%c0_18, %c0_19] : memref<1x64xf32, #tpu.memory_space<vmem>>, vector<1x64xf32>
    %28 = vector.broadcast %27 : vector<1x64xf32> to vector<16x64xf32>
    %29 = arith.addf %26, %28 : vector<16x64xf32>
    %c0_20 = arith.constant 0 : index
    %c0_21 = arith.constant 0 : index
    %30 = vector.load %arg9[%c0_20, %c0_21] : memref<16x16xf32, #tpu.memory_space<vmem>>, vector<16x16xf32>
    %c0_22 = arith.constant 0 : index
    %c0_23 = arith.constant 0 : index
    %31 = vector.load %arg10[%c0_22, %c0_23] : memref<16x16xf32, #tpu.memory_space<vmem>>, vector<16x16xf32>
    %32 = vector.extract_strided_slice %19 {offsets = [0, 0], sizes = [16, 16], strides = [1, 1]} : vector<16x64xf32> to vector<16x16xf32>
    %33 = vector.extract_strided_slice %24 {offsets = [0, 0], sizes = [16, 16], strides = [1, 1]} : vector<16x64xf32> to vector<16x16xf32>
    %34 = vector.extract_strided_slice %32 {offsets = [0, 8], sizes = [16, 8], strides = [1, 1]} : vector<16x16xf32> to vector<16x8xf32>
    %35 = vector.extract_strided_slice %32 {offsets = [0, 0], sizes = [16, 8], strides = [1, 1]} : vector<16x16xf32> to vector<16x8xf32>
    %36 = tpu.concatenate %34, %35 in 1 : vector<16x8xf32>, vector<16x8xf32> -> vector<16x16xf32>
    %37 = vector.extract_strided_slice %33 {offsets = [0, 8], sizes = [16, 8], strides = [1, 1]} : vector<16x16xf32> to vector<16x8xf32>
    %38 = vector.extract_strided_slice %33 {offsets = [0, 0], sizes = [16, 8], strides = [1, 1]} : vector<16x16xf32> to vector<16x8xf32>
    %39 = tpu.concatenate %37, %38 in 1 : vector<16x8xf32>, vector<16x8xf32> -> vector<16x16xf32>
    %40 = arith.mulf %32, %30 : vector<16x16xf32>
    %41 = arith.mulf %36, %31 : vector<16x16xf32>
    %42 = arith.addf %40, %41 : vector<16x16xf32>
    %43 = arith.mulf %33, %30 : vector<16x16xf32>
    %44 = arith.mulf %39, %31 : vector<16x16xf32>
    %45 = arith.addf %43, %44 : vector<16x16xf32>
    %46 = vector.extract_strided_slice %19 {offsets = [0, 16], sizes = [16, 16], strides = [1, 1]} : vector<16x64xf32> to vector<16x16xf32>
    %47 = vector.extract_strided_slice %24 {offsets = [0, 16], sizes = [16, 16], strides = [1, 1]} : vector<16x64xf32> to vector<16x16xf32>
    %48 = vector.extract_strided_slice %46 {offsets = [0, 8], sizes = [16, 8], strides = [1, 1]} : vector<16x16xf32> to vector<16x8xf32>
    %49 = vector.extract_strided_slice %46 {offsets = [0, 0], sizes = [16, 8], strides = [1, 1]} : vector<16x16xf32> to vector<16x8xf32>
    %50 = tpu.concatenate %48, %49 in 1 : vector<16x8xf32>, vector<16x8xf32> -> vector<16x16xf32>
    %51 = vector.extract_strided_slice %47 {offsets = [0, 8], sizes = [16, 8], strides = [1, 1]} : vector<16x16xf32> to vector<16x8xf32>
    %52 = vector.extract_strided_slice %47 {offsets = [0, 0], sizes = [16, 8], strides = [1, 1]} : vector<16x16xf32> to vector<16x8xf32>
    %53 = tpu.concatenate %51, %52 in 1 : vector<16x8xf32>, vector<16x8xf32> -> vector<16x16xf32>
    %54 = arith.mulf %46, %30 : vector<16x16xf32>
    %55 = arith.mulf %50, %31 : vector<16x16xf32>
    %56 = arith.addf %54, %55 : vector<16x16xf32>
    %57 = arith.mulf %47, %30 : vector<16x16xf32>
    %58 = arith.mulf %53, %31 : vector<16x16xf32>
    %59 = arith.addf %57, %58 : vector<16x16xf32>
    %60 = vector.extract_strided_slice %19 {offsets = [0, 32], sizes = [16, 16], strides = [1, 1]} : vector<16x64xf32> to vector<16x16xf32>
    %61 = vector.extract_strided_slice %24 {offsets = [0, 32], sizes = [16, 16], strides = [1, 1]} : vector<16x64xf32> to vector<16x16xf32>
    %62 = vector.extract_strided_slice %60 {offsets = [0, 8], sizes = [16, 8], strides = [1, 1]} : vector<16x16xf32> to vector<16x8xf32>
    %63 = vector.extract_strided_slice %60 {offsets = [0, 0], sizes = [16, 8], strides = [1, 1]} : vector<16x16xf32> to vector<16x8xf32>
    %64 = tpu.concatenate %62, %63 in 1 : vector<16x8xf32>, vector<16x8xf32> -> vector<16x16xf32>
    %65 = vector.extract_strided_slice %61 {offsets = [0, 8], sizes = [16, 8], strides = [1, 1]} : vector<16x16xf32> to vector<16x8xf32>
    %66 = vector.extract_strided_slice %61 {offsets = [0, 0], sizes = [16, 8], strides = [1, 1]} : vector<16x16xf32> to vector<16x8xf32>
    %67 = tpu.concatenate %65, %66 in 1 : vector<16x8xf32>, vector<16x8xf32> -> vector<16x16xf32>
    %68 = arith.mulf %60, %30 : vector<16x16xf32>
    %69 = arith.mulf %64, %31 : vector<16x16xf32>
    %70 = arith.addf %68, %69 : vector<16x16xf32>
    %71 = arith.mulf %61, %30 : vector<16x16xf32>
    %72 = arith.mulf %67, %31 : vector<16x16xf32>
    %73 = arith.addf %71, %72 : vector<16x16xf32>
    %74 = vector.extract_strided_slice %19 {offsets = [0, 48], sizes = [16, 16], strides = [1, 1]} : vector<16x64xf32> to vector<16x16xf32>
    %75 = vector.extract_strided_slice %24 {offsets = [0, 48], sizes = [16, 16], strides = [1, 1]} : vector<16x64xf32> to vector<16x16xf32>
    %76 = vector.extract_strided_slice %74 {offsets = [0, 8], sizes = [16, 8], strides = [1, 1]} : vector<16x16xf32> to vector<16x8xf32>
    %77 = vector.extract_strided_slice %74 {offsets = [0, 0], sizes = [16, 8], strides = [1, 1]} : vector<16x16xf32> to vector<16x8xf32>
    %78 = tpu.concatenate %76, %77 in 1 : vector<16x8xf32>, vector<16x8xf32> -> vector<16x16xf32>
    %79 = vector.extract_strided_slice %75 {offsets = [0, 8], sizes = [16, 8], strides = [1, 1]} : vector<16x16xf32> to vector<16x8xf32>
    %80 = vector.extract_strided_slice %75 {offsets = [0, 0], sizes = [16, 8], strides = [1, 1]} : vector<16x16xf32> to vector<16x8xf32>
    %81 = tpu.concatenate %79, %80 in 1 : vector<16x8xf32>, vector<16x8xf32> -> vector<16x16xf32>
    %82 = arith.mulf %74, %30 : vector<16x16xf32>
    %83 = arith.mulf %78, %31 : vector<16x16xf32>
    %84 = arith.addf %82, %83 : vector<16x16xf32>
    %85 = arith.mulf %75, %30 : vector<16x16xf32>
    %86 = arith.mulf %81, %31 : vector<16x16xf32>
    %87 = arith.addf %85, %86 : vector<16x16xf32>
    %88 = tpu.concatenate %42, %56, %70, %84 in 1 : vector<16x16xf32>, vector<16x16xf32>, vector<16x16xf32>, vector<16x16xf32> -> vector<16x64xf32>
    %cst_24 = arith.constant 2.500000e-01 : f32
    %89 = vector.broadcast %cst_24 : f32 to vector<16x64xf32>
    %90 = arith.mulf %88, %89 : vector<16x64xf32>
    %91 = arith.truncf %90 : vector<16x64xf32> to vector<16x64xbf16>
    %c0_25 = arith.constant 0 : index
    %c0_26 = arith.constant 0 : index
    %92 = vector.load %arg11[%c0_25, %c0_26] : memref<16x64xbf16, #tpu.memory_space<vmem>>, vector<16x64xbf16>
    tpu.vector_store %arg11[%c0_25, %c0_26], %91 {strides = array<i32>} : memref<16x64xbf16, #tpu.memory_space<vmem>>, vector<16x64xbf16>,
    %93 = tpu.concatenate %45, %59, %73, %87 in 1 : vector<16x16xf32>, vector<16x16xf32>, vector<16x16xf32>, vector<16x16xf32> -> vector<16x64xf32>
    %94 = arith.truncf %93 : vector<16x64xf32> to vector<16x64xbf16>
    %c0_27 = arith.constant 0 : index
    %c0_28 = arith.constant 0 : index
    %95 = vector.load %arg12[%c0_27, %c0_28] : memref<16x64xbf16, #tpu.memory_space<vmem>>, vector<16x64xbf16>
    tpu.vector_store %arg12[%c0_27, %c0_28], %94 {strides = array<i32>} : memref<16x64xbf16, #tpu.memory_space<vmem>>, vector<16x64xbf16>,
    %96 = arith.truncf %29 : vector<16x64xf32> to vector<16x64xbf16>
    %c0_29 = arith.constant 0 : index
    %c0_30 = arith.constant 0 : index
    %97 = vector.load %arg13[%c0_29, %c0_30] : memref<16x64xbf16, #tpu.memory_space<vmem>>, vector<16x64xbf16>
    tpu.vector_store %arg13[%c0_29, %c0_30], %96 {strides = array<i32>} : memref<16x64xbf16, #tpu.memory_space<vmem>>, vector<16x64xbf16>,
    return
  }
  func.func @transform_0(%arg0: i32) -> (i32, i32) {
    %c0_i32 = arith.constant 0 : i32
    %c0_i32_0 = arith.constant 0 : i32
    return %arg0, %c0_i32 : i32, i32
  }
  func.func @transform_1(%arg0: i32) -> (i32, i32) {
    %c0_i32 = arith.constant 0 : i32
    %c0_i32_0 = arith.constant 0 : i32
    %c0_i32_1 = arith.constant 0 : i32
    return %c0_i32, %c0_i32_0 : i32, i32
  }
  func.func @transform_2(%arg0: i32) -> (i32, i32) {
    %c0_i32 = arith.constant 0 : i32
    %c0_i32_0 = arith.constant 0 : i32
    %c0_i32_1 = arith.constant 0 : i32
    return %c0_i32, %c0_i32_0 : i32, i32
  }
  func.func @transform_3(%arg0: i32) -> (i32, i32) {
    %c0_i32 = arith.constant 0 : i32
    %c0_i32_0 = arith.constant 0 : i32
    %c0_i32_1 = arith.constant 0 : i32
    return %c0_i32, %c0_i32_0 : i32, i32
  }
  func.func @transform_4(%arg0: i32) -> (i32, i32) {
    %c0_i32 = arith.constant 0 : i32
    %c0_i32_0 = arith.constant 0 : i32
    %c0_i32_1 = arith.constant 0 : i32
    return %c0_i32, %c0_i32_0 : i32, i32
  }
  func.func @transform_5(%arg0: i32) -> (i32, i32) {
    %c0_i32 = arith.constant 0 : i32
    %c0_i32_0 = arith.constant 0 : i32
    %c0_i32_1 = arith.constant 0 : i32
    return %c0_i32, %c0_i32_0 : i32, i32
  }
  func.func @transform_6(%arg0: i32) -> (i32, i32) {
    %c0_i32 = arith.constant 0 : i32
    %c0_i32_0 = arith.constant 0 : i32
    %c0_i32_1 = arith.constant 0 : i32
    return %c0_i32, %c0_i32_0 : i32, i32
  }
  func.func @transform_7(%arg0: i32) -> (i32, i32) {
    %c0_i32 = arith.constant 0 : i32
    %c0_i32_0 = arith.constant 0 : i32
    %c0_i32_1 = arith.constant 0 : i32
    return %c0_i32, %c0_i32_0 : i32, i32
  }
  func.func @transform_8(%arg0: i32) -> (i32, i32) {
    %c0_i32 = arith.constant 0 : i32
    %c0_i32_0 = arith.constant 0 : i32
    return %arg0, %c0_i32 : i32, i32
  }
  func.func @transform_9(%arg0: i32) -> (i32, i32) {
    %c0_i32 = arith.constant 0 : i32
    %c0_i32_0 = arith.constant 0 : i32
    return %arg0, %c0_i32 : i32, i32
  }
  func.func @transform_10(%arg0: i32) -> (i32, i32) {
    %c0_i32 = arith.constant 0 : i32
    %c0_i32_0 = arith.constant 0 : i32
    return %arg0, %c0_i32 : i32, i32
  }
  func.func @transform_11(%arg0: i32) -> (i32, i32) {
    %c0_i32 = arith.constant 0 : i32
    %c0_i32_0 = arith.constant 0 : i32
    return %arg0, %c0_i32 : i32, i32
  }
  func.func @transform_12(%arg0: i32) -> (i32, i32) {
    %c0_i32 = arith.constant 0 : i32
    %c0_i32_0 = arith.constant 0 : i32
    return %arg0, %c0_i32 : i32, i32
  }
}

module attributes {stable_mosaic.version = 11 : i64} {
  func.func @_proj_residual_kernel(%arg0: i32, %arg1: memref<16x64xf32, #tpu.memory_space<vmem>>, %arg2: memref<16x64xbf16, #tpu.memory_space<vmem>>, %arg3: memref<64x64xbf16, #tpu.memory_space<vmem>>, %arg4: memref<1x64xf32, #tpu.memory_space<vmem>>, %arg5: memref<16x64xf32, #tpu.memory_space<vmem>>) attributes {dimension_semantics = [#tpu.dimension_semantics<parallel>], iteration_bounds = array<i64: 1>, scalar_prefetch = 0 : i64, scratch_operands = 0 : i64, tpu.core_type = #tpu.core_type<tc>, window_params = [{transform_indices = @transform_0, window_bounds = array<i64: 16, 64>}, {transform_indices = @transform_1, window_bounds = array<i64: 16, 64>}, {pipeline_mode = #tpu.pipeline_mode<synchronous>, transform_indices = @transform_2, window_bounds = array<i64: 64, 64>}, {pipeline_mode = #tpu.pipeline_mode<synchronous>, transform_indices = @transform_3, window_bounds = array<i64: 1, 64>}, {transform_indices = @transform_4, window_bounds = array<i64: 16, 64>}]} {
    %c0 = arith.constant 0 : index
    %c0_0 = arith.constant 0 : index
    %0 = vector.load %arg1[%c0, %c0_0] : memref<16x64xf32, #tpu.memory_space<vmem>>, vector<16x64xf32>
    %c0_1 = arith.constant 0 : index
    %c0_2 = arith.constant 0 : index
    %1 = vector.load %arg2[%c0_1, %c0_2] : memref<16x64xbf16, #tpu.memory_space<vmem>>, vector<16x64xbf16>
    %c0_3 = arith.constant 0 : index
    %c0_4 = arith.constant 0 : index
    %2 = vector.load %arg3[%c0_3, %c0_4] : memref<64x64xbf16, #tpu.memory_space<vmem>>, vector<64x64xbf16>
    %cst = arith.constant dense<0.000000e+00> : vector<16x64xf32>
    %3 = tpu.matmul %1, %2, %cst {dimension_numbers = #tpu.dot_dimension_numbers<[1], [0], [0], [1], [0, 0, 1, 1], [], []>} : vector<16x64xbf16>, vector<64x64xbf16>, vector<16x64xf32> -> vector<16x64xf32>
    %4 = arith.addf %0, %3 : vector<16x64xf32>
    %c0_5 = arith.constant 0 : index
    %c0_6 = arith.constant 0 : index
    %5 = vector.load %arg4[%c0_5, %c0_6] : memref<1x64xf32, #tpu.memory_space<vmem>>, vector<1x64xf32>
    %6 = vector.broadcast %5 : vector<1x64xf32> to vector<16x64xf32>
    %7 = arith.addf %4, %6 : vector<16x64xf32>
    %c0_7 = arith.constant 0 : index
    %c0_8 = arith.constant 0 : index
    %8 = vector.load %arg5[%c0_7, %c0_8] : memref<16x64xf32, #tpu.memory_space<vmem>>, vector<16x64xf32>
    tpu.vector_store %arg5[%c0_7, %c0_8], %7 {strides = array<i32>} : memref<16x64xf32, #tpu.memory_space<vmem>>, vector<16x64xf32>,
    return
  }
  func.func @transform_0(%arg0: i32) -> (i32, i32) {
    %c0_i32 = arith.constant 0 : i32
    %c0_i32_0 = arith.constant 0 : i32
    return %arg0, %c0_i32 : i32, i32
  }
  func.func @transform_1(%arg0: i32) -> (i32, i32) {
    %c0_i32 = arith.constant 0 : i32
    %c0_i32_0 = arith.constant 0 : i32
    return %arg0, %c0_i32 : i32, i32
  }
  func.func @transform_2(%arg0: i32) -> (i32, i32) {
    %c0_i32 = arith.constant 0 : i32
    %c0_i32_0 = arith.constant 0 : i32
    %c0_i32_1 = arith.constant 0 : i32
    return %c0_i32, %c0_i32_0 : i32, i32
  }
  func.func @transform_3(%arg0: i32) -> (i32, i32) {
    %c0_i32 = arith.constant 0 : i32
    %c0_i32_0 = arith.constant 0 : i32
    %c0_i32_1 = arith.constant 0 : i32
    return %c0_i32, %c0_i32_0 : i32, i32
  }
  func.func @transform_4(%arg0: i32) -> (i32, i32) {
    %c0_i32 = arith.constant 0 : i32
    %c0_i32_0 = arith.constant 0 : i32
    return %arg0, %c0_i32 : i32, i32
  }
}

module attributes {stable_mosaic.version = 11 : i64} {
  func.func @_rmsnorm_lmhead_kernel(%arg0: i32, %arg1: i32, %arg2: memref<16x64xf32, #tpu.memory_space<vmem>>, %arg3: memref<1x64xf32, #tpu.memory_space<vmem>>, %arg4: memref<128x64xbf16, #tpu.memory_space<vmem>>, %arg5: memref<16x128xbf16, #tpu.memory_space<vmem>>, %arg6: memref<16x64xbf16, #tpu.memory_space<vmem>>) attributes {dimension_semantics = [#tpu.dimension_semantics<parallel>, #tpu.dimension_semantics<arbitrary>], iteration_bounds = array<i64: 1, 1>, scalar_prefetch = 0 : i64, scratch_operands = 1 : i64, tpu.core_type = #tpu.core_type<tc>, window_params = [{transform_indices = @transform_0, window_bounds = array<i64: 16, 64>}, {pipeline_mode = #tpu.pipeline_mode<synchronous>, transform_indices = @transform_1, window_bounds = array<i64: 1, 64>}, {transform_indices = @transform_2, window_bounds = array<i64: 128, 64>}, {transform_indices = @transform_3, window_bounds = array<i64: 16, 128>}]} {
    %c0_i32 = arith.constant 0 : i32
    %0 = arith.cmpi eq, %arg1, %c0_i32 : i32
    %1 = arith.extui %0 : i1 to i32
    %c0_i32_0 = arith.constant 0 : i32
    %2 = arith.cmpi ne, %1, %c0_i32_0 : i32
    scf.if %2 {
      %c0_6 = arith.constant 0 : index
      %c0_7 = arith.constant 0 : index
      %8 = vector.load %arg2[%c0_6, %c0_7] : memref<16x64xf32, #tpu.memory_space<vmem>>, vector<16x64xf32>
      %9 = arith.mulf %8, %8 : vector<16x64xf32>
      %cst_8 = arith.constant dense<0.000000e+00> : vector<16xf32>
      %10 = vector.multi_reduction <add>, %9, %cst_8 [1] : vector<16x64xf32> to vector<16xf32>
      %11 = vector.shape_cast %10 : vector<16xf32> to vector<16x1xf32>
      %cst_9 = arith.constant 6.400000e+01 : f32
      %12 = vector.broadcast %cst_9 : f32 to vector<16x1xf32>
      %13 = arith.divf %11, %12 : vector<16x1xf32>
      %cst_10 = arith.constant 9.99999993E-9 : f32
      %14 = vector.broadcast %cst_10 : f32 to vector<16x1xf32>
      %15 = arith.addf %13, %14 : vector<16x1xf32>
      %16 = math.rsqrt %15 : vector<16x1xf32>
      %17 = vector.broadcast %16 : vector<16x1xf32> to vector<16x64xf32>
      %18 = arith.mulf %8, %17 : vector<16x64xf32>
      %c0_11 = arith.constant 0 : index
      %c0_12 = arith.constant 0 : index
      %19 = vector.load %arg3[%c0_11, %c0_12] : memref<1x64xf32, #tpu.memory_space<vmem>>, vector<1x64xf32>
      %20 = vector.broadcast %19 : vector<1x64xf32> to vector<16x64xf32>
      %21 = arith.mulf %18, %20 : vector<16x64xf32>
      %22 = arith.truncf %21 : vector<16x64xf32> to vector<16x64xbf16>
      %c0_13 = arith.constant 0 : index
      %c0_14 = arith.constant 0 : index
      %23 = vector.load %arg6[%c0_13, %c0_14] : memref<16x64xbf16, #tpu.memory_space<vmem>>, vector<16x64xbf16>
      tpu.vector_store %arg6[%c0_13, %c0_14], %22 {strides = array<i32>} : memref<16x64xbf16, #tpu.memory_space<vmem>>, vector<16x64xbf16>,
    } else {
    }
    %c0 = arith.constant 0 : index
    %c0_1 = arith.constant 0 : index
    %3 = vector.load %arg6[%c0, %c0_1] : memref<16x64xbf16, #tpu.memory_space<vmem>>, vector<16x64xbf16>
    %c0_2 = arith.constant 0 : index
    %c0_3 = arith.constant 0 : index
    %4 = vector.load %arg4[%c0_2, %c0_3] : memref<128x64xbf16, #tpu.memory_space<vmem>>, vector<128x64xbf16>
    %cst = arith.constant dense<0.000000e+00> : vector<16x128xf32>
    %5 = tpu.matmul %3, %4, %cst {dimension_numbers = #tpu.dot_dimension_numbers<[1], [1], [0], [0], [0, 0, 1, 0], [], []>} : vector<16x64xbf16>, vector<128x64xbf16>, vector<16x128xf32> -> vector<16x128xf32>
    %6 = arith.truncf %5 : vector<16x128xf32> to vector<16x128xbf16>
    %c0_4 = arith.constant 0 : index
    %c0_5 = arith.constant 0 : index
    %7 = vector.load %arg5[%c0_4, %c0_5] : memref<16x128xbf16, #tpu.memory_space<vmem>>, vector<16x128xbf16>
    tpu.vector_store %arg5[%c0_4, %c0_5], %6 {strides = array<i32>} : memref<16x128xbf16, #tpu.memory_space<vmem>>, vector<16x128xbf16>,
    return
  }
  func.func @transform_0(%arg0: i32, %arg1: i32) -> (i32, i32) {
    %c0_i32 = arith.constant 0 : i32
    %c0_i32_0 = arith.constant 0 : i32
    return %arg0, %c0_i32 : i32, i32
  }
  func.func @transform_1(%arg0: i32, %arg1: i32) -> (i32, i32) {
    %c0_i32 = arith.constant 0 : i32
    %c0_i32_0 = arith.constant 0 : i32
    %c0_i32_1 = arith.constant 0 : i32
    return %c0_i32, %c0_i32_0 : i32, i32
  }
  func.func @transform_2(%arg0: i32, %arg1: i32) -> (i32, i32) {
    %c0_i32 = arith.constant 0 : i32
    %c0_i32_0 = arith.constant 0 : i32
    return %arg1, %c0_i32 : i32, i32
  }
  func.func @transform_3(%arg0: i32, %arg1: i32) -> (i32, i32) {
    %c0_i32 = arith.constant 0 : i32
    return %arg0, %arg1 : i32, i32
  }
}

</mosaic_0001>

<llo_original>
// kernel: _lambda_.11
$region0: #{_lambda_.11}
  #allocation0 [shape = 'u32[]', space=smem, size = 0x4, offset = 0x4, fixed_abs, tag = 'smem constant byte address 0x4 - core index']
  #allocation1 [shape = 'u32[72,128]{1,0:T(1,128)}', space=vmem, size = 0x9000, scoped, tag = 'internal scratch']
  %s0 = inlined_call_operand.vmem [shape: f32[16,64], index: 0, kind: input, shape index: {}]
  %s1 = inlined_call_operand.vmem [shape: bf16[16,64], index: 1, kind: input, shape index: {}]
  %s2 = inlined_call_operand.vmem [shape: bf16[64,64], index: 2, kind: input, shape index: {}]
  %s3 = inlined_call_operand.vmem [shape: f32[1,64], index: 3, kind: input, shape index: {}]
  %s4 = inlined_call_operand.vmem [shape: f32[16,64], index: 4, kind: output, shape index: {}]
  %s5 = sld [smem:[#allocation0]]
  $region26: #{_lambda_.11} parent=0
    _
  %s7 = ssub.s32 1, %s5
  %s8 = scalar_select 0, %s7, %s5
  // Predicated region
  $region2: #{_lambda_.11} parent=0 // pred_check
    _
  $region3: #{_lambda_.11} parent=0 // pred_check_branch
    %10 = sbr.rel (0) target = $region5
  $region4: #{_lambda_.11} parent=0 // pred_region
    _
  $region5: #{_lambda_.11} parent=0 // pred_fallthru
    _
  // Predicated region
  $region6: #{_lambda_.11} parent=0 // pred_check
    _
  $region7: #{_lambda_.11} parent=0 // pred_check_branch
    %12 = sbr.rel (0) target = $region9
  $region8: #{_lambda_.11} parent=0 // pred_region
    _
  $region9: #{_lambda_.11} parent=0 // pred_fallthru
    _
  // Predicated region
  $region10: #{_lambda_.11} parent=0 // pred_check
    _
  $region11: #{_lambda_.11} parent=0 // pred_check_branch
    %14 = sbr.rel (0) target = $region13
  $region12: #{_lambda_.11} parent=0 // pred_region
    _
  $region13: #{_lambda_.11} parent=0 // pred_fallthru
    _
  // Predicated region
  $region14: #{_lambda_.11} parent=0 // pred_check
    _
  $region15: #{_lambda_.11} parent=0 // pred_check_branch
    %16 = sbr.rel (0) target = $region17
  $region16: #{_lambda_.11} parent=0 // pred_region
    _
  $region17: #{_lambda_.11} parent=0 // pred_fallthru
    _
  %v18 = vld [vmem:[%s0] sm:$0xff]
  %v19 = vld [vmem:[%s0 + $0x8] sm:$0xff]
  %v20 = vld [vmem:[%s1] sm:$0xf]
  %v21 = vld [vmem:[%s1 + $0x4] sm:$0xf]
  %v22 = vld [vmem:[%s2] sm:$0xf]
  %v23 = vld [vmem:[%s2 + $0x4] sm:$0xf]
  %v24 = vld [vmem:[%s2 + $0x8] sm:$0xf]
  %v25 = vld [vmem:[%s2 + $0xc] sm:$0xf]
  %v26 = vld [vmem:[%s2 + $0x10] sm:$0xf]
  %v27 = vld [vmem:[%s2 + $0x14] sm:$0xf]
  %v28 = vld [vmem:[%s2 + $0x18] sm:$0xf]
  %v29 = vld [vmem:[%s2 + $0x1c] sm:$0xf]
  %v32 = vunpack.c.l.b16 %v20
  %v33 = vunpack.c.l.b16 %v21
  %v34 = vpack.c.b16 %v33, %v32
  %v43 = vunpack.c.l.b16 %v22
  %v44 = vunpack.c.l.b16 %v23
  %v45 = vunpack.c.l.b16 %v24
  %v46 = vunpack.c.l.b16 %v25
  %v47 = vunpack.c.l.b16 %v26
  %v48 = vunpack.c.l.b16 %v27
  %v49 = vunpack.c.l.b16 %v28
  %v50 = vunpack.c.l.b16 %v29
  %v51 = vpack.c.b16 %v44, %v43
  %v52 = vpack.c.b16 %v46, %v45
  %v53 = vpack.c.b16 %v48, %v47
  %v54 = vpack.c.b16 %v50, %v49
  %vm59 = vcmask 523264
  %v61 = vsel %vm59, %v34, 0
  %63 = vmatpush.bf16.msra.mxu0 0
  %64 = vmatpush.bf16.msra.mxu0 0
  %65 = vmatpush.bf16.msra.mxu0 0
  %66 = vmatpush.bf16.msra.mxu0 0
  %67 = vmatpush.bf16.msra.mxu0 %v54
  %68 = vmatpush.bf16.msra.mxu0 %v53
  %69 = vmatpush.bf16.msra.mxu0 %v52
  %70 = vmatpush.bf16.msra.mxu0 %v51
  %71 = vmatmul.bf16.gmra.mxu0 %v61
  %v72 = vpop.f32.mrf.mxu0
  %v73 = vadd.f32 0.0, %v72
  %v74 = vpop.f32.mrf.mxu0
  %v75 = vadd.f32 0.0, %v74
  %76 = vdwg.mxu0
  %v77 = vadd.f32 %v18, %v73
  %v78 = vadd.f32 %v19, %v75
  %v79 = vld [vmem:[%s3] sm:$0x1]
  %v81 = vperm.slane %v79, 0
  %v83 = vadd.f32 %v77, %v81
  %v84 = vadd.f32 %v78, %v81
  %85 = vst.msk [vmem:[%s4] sm:$0xff] %vm59, %v83
  %86 = vst.msk [vmem:[%s4 + $0x8] sm:$0xff] %vm59, %v84
  // Predicated region
  $region18: #{_lambda_.11} parent=0 // pred_check
    _
  $region19: #{_lambda_.11} parent=0 // pred_check_branch
    %88 = sbr.rel (0) target = $region21
  $region20: #{_lambda_.11} parent=0 // pred_region
    _
  $region21: #{_lambda_.11} parent=0 // pred_fallthru
    _
  // Predicated region
  $region22: #{_lambda_.11} parent=0 // pred_check
    _
  $region23: #{_lambda_.11} parent=0 // pred_check_branch
    %90 = sbr.rel (0) target = $region25
  $region24: #{_lambda_.11} parent=0 // pred_region
    _
  $region25: #{_lambda_.11} parent=0 // pred_fallthru
    _

// kernel: _lambda_.9
$region0: #{_lambda_.9}
  #allocation0 [shape = 'u32[]', space=smem, size = 0x4, offset = 0x4, fixed_abs, tag = 'smem constant byte address 0x4 - core index']
  #allocation1 [shape = 'u32[72,128]{1,0:T(1,128)}', space=vmem, size = 0x9000, scoped, tag = 'internal scratch']
  %s0 = inlined_call_operand.vmem [shape: f32[16,64], index: 0, kind: input, shape index: {}]
  %s1 = inlined_call_operand.vmem [shape: f32[1,64], index: 1, kind: input, shape index: {}]
  %s2 = inlined_call_operand.vmem [shape: bf16[64,64], index: 2, kind: input, shape index: {}]
  %s3 = inlined_call_operand.vmem [shape: bf16[64,64], index: 3, kind: input, shape index: {}]
  %s4 = inlined_call_operand.vmem [shape: bf16[64,64], index: 4, kind: input, shape index: {}]
  %s5 = inlined_call_operand.vmem [shape: f32[1,64], index: 5, kind: input, shape index: {}]
  %s6 = inlined_call_operand.vmem [shape: f32[1,64], index: 6, kind: input, shape index: {}]
  %s7 = inlined_call_operand.vmem [shape: f32[1,64], index: 7, kind: input, shape index: {}]
  %s8 = inlined_call_operand.vmem [shape: f32[16,16], index: 8, kind: input, shape index: {}]
  %s9 = inlined_call_operand.vmem [shape: f32[16,16], index: 9, kind: input, shape index: {}]
  %s10 = inlined_call_operand.vmem [shape: bf16[16,64], index: 10, kind: output, shape index: {0}]
  %s11 = inlined_call_operand.vmem [shape: bf16[16,64], index: 11, kind: output, shape index: {1}]
  %s12 = inlined_call_operand.vmem [shape: bf16[16,64], index: 12, kind: output, shape index: {2}]
  %13 = xla_tuple %s10, %s11, %s12
  %s14 = sld [smem:[#allocation0]]
  $region66: #{_lambda_.9} parent=0
    _
  %s16 = ssub.s32 1, %s14
  %s17 = scalar_select 0, %s16, %s14
  // Predicated region
  $region2: #{_lambda_.9} parent=0 // pred_check
    _
  $region3: #{_lambda_.9} parent=0 // pred_check_branch
    %19 = sbr.rel (0) target = $region5
  $region4: #{_lambda_.9} parent=0 // pred_region
    _
  $region5: #{_lambda_.9} parent=0 // pred_fallthru
    _
  // Predicated region
  $region6: #{_lambda_.9} parent=0 // pred_check
    _
  $region7: #{_lambda_.9} parent=0 // pred_check_branch
    %21 = sbr.rel (0) target = $region9
  $region8: #{_lambda_.9} parent=0 // pred_region
    _
  $region9: #{_lambda_.9} parent=0 // pred_fallthru
    _
  // Predicated region
  $region10: #{_lambda_.9} parent=0 // pred_check
    _
  $region11: #{_lambda_.9} parent=0 // pred_check_branch
    %23 = sbr.rel (0) target = $region13
  $region12: #{_lambda_.9} parent=0 // pred_region
    _
  $region13: #{_lambda_.9} parent=0 // pred_fallthru
    _
  // Predicated region
  $region14: #{_lambda_.9} parent=0 // pred_check
    _
  $region15: #{_lambda_.9} parent=0 // pred_check_branch
    %25 = sbr.rel (0) target = $region17
  $region16: #{_lambda_.9} parent=0 // pred_region
    _
  $region17: #{_lambda_.9} parent=0 // pred_fallthru
    _
  // Predicated region
  $region18: #{_lambda_.9} parent=0 // pred_check
    _
  $region19: #{_lambda_.9} parent=0 // pred_check_branch
    %27 = sbr.rel (0) target = $region21
  $region20: #{_lambda_.9} parent=0 // pred_region
    _
  $region21: #{_lambda_.9} parent=0 // pred_fallthru
    _
  // Predicated region
  $region22: #{_lambda_.9} parent=0 // pred_check
    _
  $region23: #{_lambda_.9} parent=0 // pred_check_branch
    %29 = sbr.rel (0) target = $region25
  $region24: #{_lambda_.9} parent=0 // pred_region
    _
  $region25: #{_lambda_.9} parent=0 // pred_fallthru
    _
  // Predicated region
  $region26: #{_lambda_.9} parent=0 // pred_check
    _
  $region27: #{_lambda_.9} parent=0 // pred_check_branch
    %31 = sbr.rel (0) target = $region29
  $region28: #{_lambda_.9} parent=0 // pred_region
    _
  $region29: #{_lambda_.9} parent=0 // pred_fallthru
    _
  // Predicated region
  $region30: #{_lambda_.9} parent=0 // pred_check
    _
  $region31: #{_lambda_.9} parent=0 // pred_check_branch
    %33 = sbr.rel (0) target = $region33
  $region32: #{_lambda_.9} parent=0 // pred_region
    _
  $region33: #{_lambda_.9} parent=0 // pred_fallthru
    _
  // Predicated region
  $region34: #{_lambda_.9} parent=0 // pred_check
    _
  $region35: #{_lambda_.9} parent=0 // pred_check_branch
    %35 = sbr.rel (0) target = $region37
  $region36: #{_lambda_.9} parent=0 // pred_region
    _
  $region37: #{_lambda_.9} parent=0 // pred_fallthru
    _
  // Predicated region
  $region38: #{_lambda_.9} parent=0 // pred_check
    _
  $region39: #{_lambda_.9} parent=0 // pred_check_branch
    %37 = sbr.rel (0) target = $region41
  $region40: #{_lambda_.9} parent=0 // pred_region
    _
  $region41: #{_lambda_.9} parent=0 // pred_fallthru
    _
  %v39 = vld [vmem:[%s0] sm:$0xff]
  %v40 = vld [vmem:[%s0 + $0x8] sm:$0xff]
  %v41 = vmul.f32 %v39, %v39
  %v42 = vmul.f32 %v40, %v40
  %vm43 = vcmask 523264
  %v44 = vsel %vm43, %v41, 0.0
  %45 = vadd.xlane.f32.xlu0 %v44
  %v46 = vpop.xlane.xlu0 %45
  %v47 = vsel %vm43, %v42, 0.0
  %48 = vadd.xlane.f32.xlu0 %v47
  %v49 = vpop.xlane.xlu0 %48
  %v50 = vrcp.pop 64.0
  %v51 = vmul.f32 64.0, %v50
  %v52 = vsub.f32 1.0, %v51
  %v53 = vmul.f32 %v50, %v52
  %v54 = vadd.f32 %v50, %v53
  %vm55 = vweird.f32 %v50
  %v56 = vsel %vm55, %v50, %v54
  %v57 = vmul.f32 %v46, %v56
  %v58 = vmul.f32 %v49, %v56
  %v59 = vadd.f32 %v57, 1e-08
  %v60 = vadd.f32 %v58, 1e-08
  %v61 = vrsqrt.pop %v59
  %v62 = vmul.f32 %v61, %v59
  %v63 = vmul.f32 %v62, %v61
  %v64 = vmul.f32 0.5, %v63
  %v65 = vsub.f32 1.5, %v64
  %v66 = vmul.f32 %v61, %v65
  %vm67 = vweird.f32 %v59
  %vm68 = vweird.f32 %v61
  %vm69 = vmor %vm67, %vm68
  %v70 = vsel %vm69, %v61, %v66
  %v71 = vrsqrt.pop %v60
  %v72 = vmul.f32 %v71, %v60
  %v73 = vmul.f32 %v72, %v71
  %v74 = vmul.f32 0.5, %v73
  %v75 = vsub.f32 1.5, %v74
  %v76 = vmul.f32 %v71, %v75
  %vm77 = vweird.f32 %v60
  %vm78 = vweird.f32 %v71
  %vm79 = vmor %vm77, %vm78
  %v80 = vsel %vm79, %v71, %v76
  %v81 = vmul.f32 %v39, %v70
  %v82 = vmul.f32 %v40, %v80
  %v83 = vld [vmem:[%s1] sm:$0x1]
  %v85 = vperm.slane %v83, 0
  %v87 = vmul.f32 %v81, %v85
  %v88 = vmul.f32 %v82, %v85
  %v89 = vpack.c.bf16 %v88, %v87
  %v90 = vld [vmem:[%s2] sm:$0xf]
  %v91 = vld [vmem:[%s2 + $0x4] sm:$0xf]
  %v92 = vld [vmem:[%s2 + $0x8] sm:$0xf]
  %v93 = vld [vmem:[%s2 + $0xc] sm:$0xf]
  %v94 = vld [vmem:[%s2 + $0x10] sm:$0xf]
  %v95 = vld [vmem:[%s2 + $0x14] sm:$0xf]
  %v96 = vld [vmem:[%s2 + $0x18] sm:$0xf]
  %v97 = vld [vmem:[%s2 + $0x1c] sm:$0xf]
  %v98 = vld [vmem:[%s5] sm:$0x1]
  %v100 = vperm.slane %v98, 0
  %v110 = vunpack.c.l.b16 %v90
  %v111 = vunpack.c.l.b16 %v91
  %v112 = vunpack.c.l.b16 %v92
  %v113 = vunpack.c.l.b16 %v93
  %v114 = vunpack.c.l.b16 %v94
  %v115 = vunpack.c.l.b16 %v95
  %v116 = vunpack.c.l.b16 %v96
  %v117 = vunpack.c.l.b16 %v97
  %v118 = vpack.c.b16 %v111, %v110
  %v119 = vpack.c.b16 %v113, %v112
  %v120 = vpack.c.b16 %v115, %v114
  %v121 = vpack.c.b16 %v117, %v116
  %v127 = vsel %vm43, %v89, 0
  %129 = vmatpush.bf16.msra.mxu0 0
  %130 = vmatpush.bf16.msra.mxu0 0
  %131 = vmatpush.bf16.msra.mxu0 0
  %132 = vmatpush.bf16.msra.mxu0 0
  %133 = vmatpush.bf16.msra.mxu0 %v121
  %134 = vmatpush.bf16.msra.mxu0 %v120
  %135 = vmatpush.bf16.msra.mxu0 %v119
  %136 = vmatpush.bf16.msra.mxu0 %v118
  %137 = vmatmul.bf16.gmra.mxu0 %v127
  %v138 = vpop.f32.mrf.mxu0
  %v139 = vadd.f32 %v100, %v138
  %v140 = vpop.f32.mrf.mxu0
  %v141 = vadd.f32 %v100, %v140
  %142 = vdwg.mxu0
  %v143 = vld [vmem:[%s3] sm:$0xf]
  %v144 = vld [vmem:[%s3 + $0x4] sm:$0xf]
  %v145 = vld [vmem:[%s3 + $0x8] sm:$0xf]
  %v146 = vld [vmem:[%s3 + $0xc] sm:$0xf]
  %v147 = vld [vmem:[%s3 + $0x10] sm:$0xf]
  %v148 = vld [vmem:[%s3 + $0x14] sm:$0xf]
  %v149 = vld [vmem:[%s3 + $0x18] sm:$0xf]
  %v150 = vld [vmem:[%s3 + $0x1c] sm:$0xf]
  %v151 = vld [vmem:[%s6] sm:$0x1]
  %v153 = vperm.slane %v151, 0
  %v163 = vunpack.c.l.b16 %v143
  %v164 = vunpack.c.l.b16 %v144
  %v165 = vunpack.c.l.b16 %v145
  %v166 = vunpack.c.l.b16 %v146
  %v167 = vunpack.c.l.b16 %v147
  %v168 = vunpack.c.l.b16 %v148
  %v169 = vunpack.c.l.b16 %v149
  %v170 = vunpack.c.l.b16 %v150
  %v171 = vpack.c.b16 %v164, %v163
  %v172 = vpack.c.b16 %v166, %v165
  %v173 = vpack.c.b16 %v168, %v167
  %v174 = vpack.c.b16 %v170, %v169
  %179 = vmatpush.bf16.msra.mxu0 0
  %180 = vmatpush.bf16.msra.mxu0 0
  %181 = vmatpush.bf16.msra.mxu0 0
  %182 = vmatpush.bf16.msra.mxu0 0
  %183 = vmatpush.bf16.msra.mxu0 %v174
  %184 = vmatpush.bf16.msra.mxu0 %v173
  %185 = vmatpush.bf16.msra.mxu0 %v172
  %186 = vmatpush.bf16.msra.mxu0 %v171
  %187 = vmatmul.bf16.gmra.mxu0 %v127
  %v188 = vpop.f32.mrf.mxu0
  %v189 = vadd.f32 %v153, %v188
  %v190 = vpop.f32.mrf.mxu0
  %v191 = vadd.f32 %v153, %v190
  %192 = vdwg.mxu0
  %v193 = vld [vmem:[%s4] sm:$0xf]
  %v194 = vld [vmem:[%s4 + $0x4] sm:$0xf]
  %v195 = vld [vmem:[%s4 + $0x8] sm:$0xf]
  %v196 = vld [vmem:[%s4 + $0xc] sm:$0xf]
  %v197 = vld [vmem:[%s4 + $0x10] sm:$0xf]
  %v198 = vld [vmem:[%s4 + $0x14] sm:$0xf]
  %v199 = vld [vmem:[%s4 + $0x18] sm:$0xf]
  %v200 = vld [vmem:[%s4 + $0x1c] sm:$0xf]
  %v201 = vld [vmem:[%s7] sm:$0x1]
  %v203 = vperm.slane %v201, 0
  %v213 = vunpack.c.l.b16 %v193
  %v214 = vunpack.c.l.b16 %v194
  %v215 = vunpack.c.l.b16 %v195
  %v216 = vunpack.c.l.b16 %v196
  %v217 = vunpack.c.l.b16 %v197
  %v218 = vunpack.c.l.b16 %v198
  %v219 = vunpack.c.l.b16 %v199
  %v220 = vunpack.c.l.b16 %v200
  %v221 = vpack.c.b16 %v214, %v213
  %v222 = vpack.c.b16 %v216, %v215
  %v223 = vpack.c.b16 %v218, %v217
  %v224 = vpack.c.b16 %v220, %v219
  %229 = vmatpush.bf16.msra.mxu0 0
  %230 = vmatpush.bf16.msra.mxu0 0
  %231 = vmatpush.bf16.msra.mxu0 0
  %232 = vmatpush.bf16.msra.mxu0 0
  %233 = vmatpush.bf16.msra.mxu0 %v224
  %234 = vmatpush.bf16.msra.mxu0 %v223
  %235 = vmatpush.bf16.msra.mxu0 %v222
  %236 = vmatpush.bf16.msra.mxu0 %v221
  %237 = vmatmul.bf16.gmra.mxu0 %v127
  %v238 = vpop.f32.mrf.mxu0
  %v239 = vadd.f32 %v203, %v238
  %v240 = vpop.f32.mrf.mxu0
  %v241 = vadd.f32 %v203, %v240
  %242 = vdwg.mxu0
  %v243 = vld [vmem:[%s8] sm:$0xff]
  %v244 = vld [vmem:[%s8 + $0x8] sm:$0xff]
  %v245 = vld [vmem:[%s9] sm:$0xff]
  %v246 = vld [vmem:[%s9 + $0x8] sm:$0xff]
  %249 = vrot.lane.b32.xlu0 %v139, 120
  %v250 = vpop.permute.xlu0 %249
  %251 = vrot.lane.b32.xlu0 %v141, 120
  %v252 = vpop.permute.xlu0 %251
  %255 = vrot.lane.b32.xlu0 %v139, 8
  %v256 = vpop.permute.xlu0 %255
  %257 = vrot.lane.b32.xlu0 %v141, 8
  %v258 = vpop.permute.xlu0 %257
  %vm261 = vcmask 64512
  %v262 = vsel %vm261, %v250, %v256
  %v263 = vsel %vm261, %v252, %v258
  %266 = vrot.lane.b32.xlu0 %v189, 120
  %v267 = vpop.permute.xlu0 %266
  %268 = vrot.lane.b32.xlu0 %v191, 120
  %v269 = vpop.permute.xlu0 %268
  %272 = vrot.lane.b32.xlu0 %v189, 8
  %v273 = vpop.permute.xlu0 %272
  %274 = vrot.lane.b32.xlu0 %v191, 8
  %v275 = vpop.permute.xlu0 %274
  %v278 = vsel %vm261, %v267, %v273
  %v279 = vsel %vm261, %v269, %v275
  %v280 = vmul.f32 %v139, %v243
  %v281 = vmul.f32 %v141, %v244
  %v282 = vmul.f32 %v262, %v245
  %v283 = vmul.f32 %v263, %v246
  %v284 = vadd.f32 %v280, %v282
  %v285 = vadd.f32 %v281, %v283
  %v286 = vmul.f32 %v189, %v243
  %v287 = vmul.f32 %v191, %v244
  %v288 = vmul.f32 %v278, %v245
  %v289 = vmul.f32 %v279, %v246
  %v290 = vadd.f32 %v286, %v288
  %v291 = vadd.f32 %v287, %v289
  %292 = vrot.lane.b32.xlu0 %v139, 104
  %v293 = vpop.permute.xlu0 %292
  %294 = vrot.lane.b32.xlu0 %v141, 104
  %v295 = vpop.permute.xlu0 %294
  %v298 = vsel %vm261, %v293, %v250
  %v299 = vsel %vm261, %v295, %v252
  %300 = vrot.lane.b32.xlu0 %v189, 104
  %v301 = vpop.permute.xlu0 %300
  %302 = vrot.lane.b32.xlu0 %v191, 104
  %v303 = vpop.permute.xlu0 %302
  %v306 = vsel %vm261, %v301, %v267
  %v307 = vsel %vm261, %v303, %v269
  %310 = vrot.lane.b32.xlu0 %v243, 16
  %v311 = vpop.permute.xlu0 %310
  %312 = vrot.lane.b32.xlu0 %v244, 16
  %v313 = vpop.permute.xlu0 %312
  %v316 = vmul.f32 %v139, %v311
  %v317 = vmul.f32 %v141, %v313
  %v318 = vmul.f32 %v298, %v245
  %v319 = vmul.f32 %v299, %v246
  %322 = vrot.lane.b32.xlu0 %v318, 16
  %v323 = vpop.permute.xlu0 %322
  %324 = vrot.lane.b32.xlu0 %v319, 16
  %v325 = vpop.permute.xlu0 %324
  %v328 = vadd.f32 %v316, %v323
  %v329 = vadd.f32 %v317, %v325
  %v330 = vmul.f32 %v189, %v311
  %v331 = vmul.f32 %v191, %v313
  %v332 = vmul.f32 %v306, %v245
  %v333 = vmul.f32 %v307, %v246
  %336 = vrot.lane.b32.xlu0 %v332, 16
  %v337 = vpop.permute.xlu0 %336
  %338 = vrot.lane.b32.xlu0 %v333, 16
  %v339 = vpop.permute.xlu0 %338
  %v342 = vadd.f32 %v330, %v337
  %v343 = vadd.f32 %v331, %v339
  %344 = vrot.lane.b32.xlu0 %v139, 88
  %v345 = vpop.permute.xlu0 %344
  %346 = vrot.lane.b32.xlu0 %v141, 88
  %v347 = vpop.permute.xlu0 %346
  %v350 = vsel %vm261, %v345, %v293
  %v351 = vsel %vm261, %v347, %v295
  %352 = vrot.lane.b32.xlu0 %v189, 88
  %v353 = vpop.permute.xlu0 %352
  %354 = vrot.lane.b32.xlu0 %v191, 88
  %v355 = vpop.permute.xlu0 %354
  %v358 = vsel %vm261, %v353, %v301
  %v359 = vsel %vm261, %v355, %v303
  %360 = vrot.lane.b32.xlu0 %v243, 32
  %v361 = vpop.permute.xlu0 %360
  %362 = vrot.lane.b32.xlu0 %v244, 32
  %v363 = vpop.permute.xlu0 %362
  %v366 = vmul.f32 %v139, %v361
  %v367 = vmul.f32 %v141, %v363
  %v368 = vmul.f32 %v350, %v245
  %v369 = vmul.f32 %v351, %v246
  %372 = vrot.lane.b32.xlu0 %v368, 32
  %v373 = vpop.permute.xlu0 %372
  %374 = vrot.lane.b32.xlu0 %v369, 32
  %v375 = vpop.permute.xlu0 %374
  %v378 = vadd.f32 %v366, %v373
  %v379 = vadd.f32 %v367, %v375
  %v380 = vmul.f32 %v189, %v361
  %v381 = vmul.f32 %v191, %v363
  %v382 = vmul.f32 %v358, %v245
  %v383 = vmul.f32 %v359, %v246
  %386 = vrot.lane.b32.xlu0 %v382, 32
  %v387 = vpop.permute.xlu0 %386
  %388 = vrot.lane.b32.xlu0 %v383, 32
  %v389 = vpop.permute.xlu0 %388
  %v392 = vadd.f32 %v380, %v387
  %v393 = vadd.f32 %v381, %v389
  %394 = vrot.lane.b32.xlu0 %v139, 72
  %v395 = vpop.permute.xlu0 %394
  %396 = vrot.lane.b32.xlu0 %v141, 72
  %v397 = vpop.permute.xlu0 %396
  %v400 = vsel %vm261, %v395, %v345
  %v401 = vsel %vm261, %v397, %v347
  %402 = vrot.lane.b32.xlu0 %v189, 72
  %v403 = vpop.permute.xlu0 %402
  %404 = vrot.lane.b32.xlu0 %v191, 72
  %v405 = vpop.permute.xlu0 %404
  %v408 = vsel %vm261, %v403, %v353
  %v409 = vsel %vm261, %v405, %v355
  %410 = vrot.lane.b32.xlu0 %v243, 48
  %v411 = vpop.permute.xlu0 %410
  %412 = vrot.lane.b32.xlu0 %v244, 48
  %v413 = vpop.permute.xlu0 %412
  %v416 = vmul.f32 %v139, %v411
  %v417 = vmul.f32 %v141, %v413
  %v418 = vmul.f32 %v400, %v245
  %v419 = vmul.f32 %v401, %v246
  %422 = vrot.lane.b32.xlu0 %v418, 48
  %v423 = vpop.permute.xlu0 %422
  %424 = vrot.lane.b32.xlu0 %v419, 48
  %v425 = vpop.permute.xlu0 %424
  %v428 = vadd.f32 %v416, %v423
  %v429 = vadd.f32 %v417, %v425
  %v430 = vmul.f32 %v189, %v411
  %v431 = vmul.f32 %v191, %v413
  %v432 = vmul.f32 %v408, %v245
  %v433 = vmul.f32 %v409, %v246
  %436 = vrot.lane.b32.xlu0 %v432, 48
  %v437 = vpop.permute.xlu0 %436
  %438 = vrot.lane.b32.xlu0 %v433, 48
  %v439 = vpop.permute.xlu0 %438
  %v442 = vadd.f32 %v430, %v437
  %v443 = vadd.f32 %v431, %v439
  %vm444 = vcmask 130048
  %v445 = vsel %vm444, %v284, %v328
  %v446 = vsel %vm444, %v285, %v329
  %vm447 = vcmask 261120
  %v448 = vsel %vm447, %v445, %v378
  %v449 = vsel %vm447, %v446, %v379
  %vm450 = vcmask 392192
  %v451 = vsel %vm450, %v448, %v428
  %v452 = vsel %vm450, %v449, %v429
  %v453 = vmul.f32 %v451, 0.25
  %v454 = vmul.f32 %v452, 0.25
  %v455 = vpack.c.bf16 %v453, %v453
  %v456 = vpack.c.bf16 %v454, %v454
  %vm457 = vcmask 519168
  %458 = vst.msk [vmem:[%s10] sm:$0xf] %vm457, %v455
  %459 = vst.msk [vmem:[%s10 + $0x4] sm:$0xf] %vm457, %v456
  %v460 = vsel %vm444, %v290, %v342
  %v461 = vsel %vm444, %v291, %v343
  %v462 = vsel %vm447, %v460, %v392
  %v463 = vsel %vm447, %v461, %v393
  %v464 = vsel %vm450, %v462, %v442
  %v465 = vsel %vm450, %v463, %v443
  %v466 = vpack.c.bf16 %v464, %v464
  %v467 = vpack.c.bf16 %v465, %v465
  %468 = vst.msk [vmem:[%s11] sm:$0xf] %vm457, %v466
  %469 = vst.msk [vmem:[%s11 + $0x4] sm:$0xf] %vm457, %v467
  %v470 = vpack.c.bf16 %v239, %v239
  %v471 = vpack.c.bf16 %v241, %v241
  %472 = vst.msk [vmem:[%s12] sm:$0xf] %vm457, %v470
  %473 = vst.msk [vmem:[%s12 + $0x4] sm:$0xf] %vm457, %v471
  // Predicated region
  $region42: #{_lambda_.9} parent=0 // pred_check
    _
  $region43: #{_lambda_.9} parent=0 // pred_check_branch
    %475 = sbr.rel (0) target = $region45
  $region44: #{_lambda_.9} parent=0 // pred_region
    _
  $region45: #{_lambda_.9} parent=0 // pred_fallthru
    _
  // Predicated region
  $region46: #{_lambda_.9} parent=0 // pred_check
    _
  $region47: #{_lambda_.9} parent=0 // pred_check_branch
    %477 = sbr.rel (0) target = $region49
  $region48: #{_lambda_.9} parent=0 // pred_region
    _
  $region49: #{_lambda_.9} parent=0 // pred_fallthru
    _
  // Predicated region
  $region50: #{_lambda_.9} parent=0 // pred_check
    _
  $region51: #{_lambda_.9} parent=0 // pred_check_branch
    %479 = sbr.rel (0) target = $region53
  $region52: #{_lambda_.9} parent=0 // pred_region
    _
  $region53: #{_lambda_.9} parent=0 // pred_fallthru
    _
  // Predicated region
  $region54: #{_lambda_.9} parent=0 // pred_check
    _
  $region55: #{_lambda_.9} parent=0 // pred_check_branch
    %481 = sbr.rel (0) target = $region57
  $region56: #{_lambda_.9} parent=0 // pred_region
    _
  $region57: #{_lambda_.9} parent=0 // pred_fallthru
    _
  // Predicated region
  $region58: #{_lambda_.9} parent=0 // pred_check
    _
  $region59: #{_lambda_.9} parent=0 // pred_check_branch
    %483 = sbr.rel (0) target = $region61
  $region60: #{_lambda_.9} parent=0 // pred_region
    _
  $region61: #{_lambda_.9} parent=0 // pred_fallthru
    _
  // Predicated region
  $region62: #{_lambda_.9} parent=0 // pred_check
    _
  $region63: #{_lambda_.9} parent=0 // pred_check_branch
    %485 = sbr.rel (0) target = $region65
  $region64: #{_lambda_.9} parent=0 // pred_region
    _
  $region65: #{_lambda_.9} parent=0 // pred_fallthru
    _

// kernel: _lambda_.12
$region0: #{_lambda_.12}
  #allocation0 [shape = 'u32[]', space=smem, size = 0x4, offset = 0x4, fixed_abs, tag = 'smem constant byte address 0x4 - core index']
  #allocation1 [shape = 'u32[72,128]{1,0:T(1,128)}', space=vmem, size = 0x9000, scoped, tag = 'internal scratch']
  #allocation2 [shape = 'bf16[16,64]{1,0:T(8,128)(2,1)}', space=vmem, size = 0x1000, scoped, tag = 'scratch operand']
  #allocation3 [shape = 'f32[16,64]{1,0:T(8,128)}', space=vmem, size = 0x2000, scoped, tag = 'scratch operand']
  %s0 = inlined_call_operand.vmem [shape: f32[16,64], index: 0, kind: input, shape index: {}]
  %s1 = inlined_call_operand.vmem [shape: f32[1,64], index: 1, kind: input, shape index: {}]
  %s2 = inlined_call_operand.vmem [shape: bf16[64,256], index: 2, kind: input, shape index: {}]
  %s3 = inlined_call_operand.vmem [shape: bf16[64,256], index: 3, kind: input, shape index: {}]
  %s4 = inlined_call_operand.vmem [shape: bf16[256,64], index: 4, kind: input, shape index: {}]
  %s5 = inlined_call_operand.vmem [shape: f32[16,64], index: 5, kind: output, shape index: {}]
  %s6 = sld [smem:[#allocation0]]
  $region38: #{_lambda_.12} parent=0
    _
  %s8 = ssub.s32 1, %s6
  %s9 = scalar_select 0, %s8, %s6
  // Predicated region
  $region2: #{_lambda_.12} parent=0 // pred_check
    _
  $region3: #{_lambda_.12} parent=0 // pred_check_branch
    %11 = sbr.rel (0) target = $region5
  $region4: #{_lambda_.12} parent=0 // pred_region
    _
  $region5: #{_lambda_.12} parent=0 // pred_fallthru
    _
  // Predicated region
  $region6: #{_lambda_.12} parent=0 // pred_check
    _
  $region7: #{_lambda_.12} parent=0 // pred_check_branch
    %13 = sbr.rel (0) target = $region9
  $region8: #{_lambda_.12} parent=0 // pred_region
    _
  $region9: #{_lambda_.12} parent=0 // pred_fallthru
    _
  // Predicated region
  $region10: #{_lambda_.12} parent=0 // pred_check
    _
  $region11: #{_lambda_.12} parent=0 // pred_check_branch
    %15 = sbr.rel (0) target = $region13
  $region12: #{_lambda_.12} parent=0 // pred_region
    _
  $region13: #{_lambda_.12} parent=0 // pred_fallthru
    _
  // Predicated region
  $region14: #{_lambda_.12} parent=0 // pred_check
    _
  $region15: #{_lambda_.12} parent=0 // pred_check_branch
    %17 = sbr.rel (0) target = $region17
  $region16: #{_lambda_.12} parent=0 // pred_region
    _
  $region17: #{_lambda_.12} parent=0 // pred_fallthru
    _
  // Predicated region
  $region18: #{_lambda_.12} parent=0 // pred_check
    _
  $region19: #{_lambda_.12} parent=0 // pred_check_branch
    %19 = sbr.rel (0) target = $region21
  $region20: #{_lambda_.12} parent=0 // pred_region
    _
  $region21: #{_lambda_.12} parent=0 // pred_fallthru
    _
  %p21 = scmp.eq.s32.totalorder 0, 0
  // Predicated region
  $region22: #{_lambda_.12} parent=0 // pred_check
    %p22 = pneg %p21
  $region23: #{_lambda_.12} parent=0 // pred_check_branch
    %24 = sbr.rel (%p22) target = $region25
  $region24: #{_lambda_.12} parent=0 // pred_region
    %v25 = vld [vmem:[%s0] sm:$0xff]
    %v26 = vld [vmem:[%s0 + $0x8] sm:$0xff]
    %v27 = vmul.f32 %v25, %v25
    %v28 = vmul.f32 %v26, %v26
    %vm29 = vcmask 523264
    %v30 = vsel %vm29, %v27, 0.0
    %31 = vadd.xlane.f32.xlu0 %v30
    %v32 = vpop.xlane.xlu0 %31
    %v33 = vsel %vm29, %v28, 0.0
    %34 = vadd.xlane.f32.xlu0 %v33
    %v35 = vpop.xlane.xlu0 %34
    %v36 = vrcp.pop 64.0
    %v37 = vmul.f32 64.0, %v36
    %v38 = vsub.f32 1.0, %v37
    %v39 = vmul.f32 %v36, %v38
    %v40 = vadd.f32 %v36, %v39
    %vm41 = vweird.f32 %v36
    %v42 = vsel %vm41, %v36, %v40
    %v43 = vmul.f32 %v32, %v42
    %v44 = vmul.f32 %v35, %v42
    %v45 = vadd.f32 %v43, 1e-08
    %v46 = vadd.f32 %v44, 1e-08
    %v47 = vrsqrt.pop %v45
    %v48 = vmul.f32 %v47, %v45
    %v49 = vmul.f32 %v48, %v47
    %v50 = vmul.f32 0.5, %v49
    %v51 = vsub.f32 1.5, %v50
    %v52 = vmul.f32 %v47, %v51
    %vm53 = vweird.f32 %v45
    %vm54 = vweird.f32 %v47
    %vm55 = vmor %vm53, %vm54
    %v56 = vsel %vm55, %v47, %v52
    %v57 = vrsqrt.pop %v46
    %v58 = vmul.f32 %v57, %v46
    %v59 = vmul.f32 %v58, %v57
    %v60 = vmul.f32 0.5, %v59
    %v61 = vsub.f32 1.5, %v60
    %v62 = vmul.f32 %v57, %v61
    %vm63 = vweird.f32 %v46
    %vm64 = vweird.f32 %v57
    %vm65 = vmor %vm63, %vm64
    %v66 = vsel %vm65, %v57, %v62
    %v67 = vmul.f32 %v25, %v56
    %v68 = vmul.f32 %v26, %v66
    %v69 = vld [vmem:[%s1] sm:$0x1]
    %v71 = vperm.slane %v69, 0
    %v73 = vmul.f32 %v67, %v71
    %v74 = vmul.f32 %v68, %v71
    %v75 = vpack.c.bf16 %v73, %v73
    %v76 = vpack.c.bf16 %v74, %v74
    %vm77 = vcmask 519168
    %78 = vst.msk [vmem:[#allocation2] sm:$0xf] %vm77, %v75
    %79 = vst.msk [vmem:[#allocation2 + $0x4] sm:$0xf] %vm77, %v76
    %80 = vst.msk [vmem:[#allocation3] sm:$0xff] %vm29, 0.0
    %81 = vst.msk [vmem:[#allocation3 + $0x8] sm:$0xff] %vm29, 0.0
  $region25: #{_lambda_.12} parent=0 // pred_fallthru
    _
  %v82 = vld [vmem:[#allocation2] sm:$0xf]
  %v83 = vld [vmem:[#allocation2 + $0x4] sm:$0xf]
  %v84 = vld [vmem:[%s2] sm:$0xff]
  %v85 = vld [vmem:[%s2 + $0x8] sm:$0xff]
  %v86 = vld [vmem:[%s2 + $0x10] sm:$0xff]
  %v87 = vld [vmem:[%s2 + $0x18] sm:$0xff]
  %v88 = vld [vmem:[%s2 + $0x20] sm:$0xff]
  %v89 = vld [vmem:[%s2 + $0x28] sm:$0xff]
  %v90 = vld [vmem:[%s2 + $0x30] sm:$0xff]
  %v91 = vld [vmem:[%s2 + $0x38] sm:$0xff]
  %v94 = vunpack.c.l.b16 %v82
  %v95 = vunpack.c.l.b16 %v83
  %v96 = vpack.c.b16 %v95, %v94
  %v105 = vunpack.c.l.b16 %v84
  %v106 = vunpack.c.h.b16 %v84
  %v107 = vunpack.c.l.b16 %v85
  %v108 = vunpack.c.h.b16 %v85
  %v109 = vunpack.c.l.b16 %v86
  %v110 = vunpack.c.h.b16 %v86
  %v111 = vunpack.c.l.b16 %v87
  %v112 = vunpack.c.h.b16 %v87
  %v113 = vunpack.c.l.b16 %v88
  %v114 = vunpack.c.h.b16 %v88
  %v115 = vunpack.c.l.b16 %v89
  %v116 = vunpack.c.h.b16 %v89
  %v117 = vunpack.c.l.b16 %v90
  %v118 = vunpack.c.h.b16 %v90
  %v119 = vunpack.c.l.b16 %v91
  %v120 = vunpack.c.h.b16 %v91
  %v121 = vpack.c.b16 %v107, %v105
  %v122 = vpack.c.b16 %v108, %v106
  %v123 = vpack.c.b16 %v111, %v109
  %v124 = vpack.c.b16 %v112, %v110
  %v125 = vpack.c.b16 %v115, %v113
  %v126 = vpack.c.b16 %v116, %v114
  %v127 = vpack.c.b16 %v119, %v117
  %v128 = vpack.c.b16 %v120, %v118
  %vm137 = vcmask 523264
  %v139 = vsel %vm137, %v96, 0
  %141 = vmatpush.bf16.msra.mxu0 0
  %142 = vmatpush.bf16.msra.mxu0 0
  %143 = vmatpush.bf16.msra.mxu0 0
  %144 = vmatpush.bf16.msra.mxu0 0
  %145 = vmatpush.bf16.msra.mxu0 %v127
  %146 = vmatpush.bf16.msra.mxu0 %v125
  %147 = vmatpush.bf16.msra.mxu0 %v123
  %148 = vmatpush.bf16.msra.mxu0 %v121
  %149 = vmatmul.bf16.gmra.mxu0 %v139
  %v150 = vpop.f32.mrf.mxu0
  %v151 = vadd.f32 0.0, %v150
  %v152 = vpop.f32.mrf.mxu0
  %v153 = vadd.f32 0.0, %v152
  %154 = vdwg.mxu0
  %155 = vmatpush.bf16.msra.mxu0 0
  %156 = vmatpush.bf16.msra.mxu0 0
  %157 = vmatpush.bf16.msra.mxu0 0
  %158 = vmatpush.bf16.msra.mxu0 0
  %159 = vmatpush.bf16.msra.mxu0 %v128
  %160 = vmatpush.bf16.msra.mxu0 %v126
  %161 = vmatpush.bf16.msra.mxu0 %v124
  %162 = vmatpush.bf16.msra.mxu0 %v122
  %163 = vmatmul.bf16.gmra.mxu0 %v139
  %v164 = vpop.f32.mrf.mxu0
  %v165 = vadd.f32 0.0, %v164
  %v166 = vpop.f32.mrf.mxu0
  %v167 = vadd.f32 0.0, %v166
  %168 = vdwg.mxu0
  %v169 = vld [vmem:[%s3] sm:$0xff]
  %v170 = vld [vmem:[%s3 + $0x8] sm:$0xff]
  %v171 = vld [vmem:[%s3 + $0x10] sm:$0xff]
  %v172 = vld [vmem:[%s3 + $0x18] sm:$0xff]
  %v173 = vld [vmem:[%s3 + $0x20] sm:$0xff]
  %v174 = vld [vmem:[%s3 + $0x28] sm:$0xff]
  %v175 = vld [vmem:[%s3 + $0x30] sm:$0xff]
  %v176 = vld [vmem:[%s3 + $0x38] sm:$0xff]
  %v185 = vunpack.c.l.b16 %v169
  %v186 = vunpack.c.h.b16 %v169
  %v187 = vunpack.c.l.b16 %v170
  %v188 = vunpack.c.h.b16 %v170
  %v189 = vunpack.c.l.b16 %v171
  %v190 = vunpack.c.h.b16 %v171
  %v191 = vunpack.c.l.b16 %v172
  %v192 = vunpack.c.h.b16 %v172
  %v193 = vunpack.c.l.b16 %v173
  %v194 = vunpack.c.h.b16 %v173
  %v195 = vunpack.c.l.b16 %v174
  %v196 = vunpack.c.h.b16 %v174
  %v197 = vunpack.c.l.b16 %v175
  %v198 = vunpack.c.h.b16 %v175
  %v199 = vunpack.c.l.b16 %v176
  %v200 = vunpack.c.h.b16 %v176
  %v201 = vpack.c.b16 %v187, %v185
  %v202 = vpack.c.b16 %v188, %v186
  %v203 = vpack.c.b16 %v191, %v189
  %v204 = vpack.c.b16 %v192, %v190
  %v205 = vpack.c.b16 %v195, %v193
  %v206 = vpack.c.b16 %v196, %v194
  %v207 = vpack.c.b16 %v199, %v197
  %v208 = vpack.c.b16 %v200, %v198
  %217 = vmatpush.bf16.msra.mxu0 0
  %218 = vmatpush.bf16.msra.mxu0 0
  %219 = vmatpush.bf16.msra.mxu0 0
  %220 = vmatpush.bf16.msra.mxu0 0
  %221 = vmatpush.bf16.msra.mxu0 %v207
  %222 = vmatpush.bf16.msra.mxu0 %v205
  %223 = vmatpush.bf16.msra.mxu0 %v203
  %224 = vmatpush.bf16.msra.mxu0 %v201
  %225 = vmatmul.bf16.gmra.mxu0 %v139
  %v226 = vpop.f32.mrf.mxu0
  %v227 = vadd.f32 0.0, %v226
  %v228 = vpop.f32.mrf.mxu0
  %v229 = vadd.f32 0.0, %v228
  %230 = vdwg.mxu0
  %231 = vmatpush.bf16.msra.mxu0 0
  %232 = vmatpush.bf16.msra.mxu0 0
  %233 = vmatpush.bf16.msra.mxu0 0
  %234 = vmatpush.bf16.msra.mxu0 0
  %235 = vmatpush.bf16.msra.mxu0 %v208
  %236 = vmatpush.bf16.msra.mxu0 %v206
  %237 = vmatpush.bf16.msra.mxu0 %v204
  %238 = vmatpush.bf16.msra.mxu0 %v202
  %239 = vmatmul.bf16.gmra.mxu0 %v139
  %v240 = vpop.f32.mrf.mxu0
  %v241 = vadd.f32 0.0, %v240
  %v242 = vpop.f32.mrf.mxu0
  %v243 = vadd.f32 0.0, %v242
  %244 = vdwg.mxu0
  %v245 = vxor.u32 %v151, 2147483648
  %v246 = vxor.u32 %v165, 2147483648
  %v247 = vxor.u32 %v153, 2147483648
  %v248 = vxor.u32 %v167, 2147483648
  %v249 = vmul.f32 %v245, 1.442695
  %v250 = vpow.pop %v249
  %v251 = vmul.f32 %v246, 1.442695
  %v252 = vpow.pop %v251
  %v253 = vmul.f32 %v247, 1.442695
  %v254 = vpow.pop %v253
  %v255 = vmul.f32 %v248, 1.442695
  %v256 = vpow.pop %v255
  %v257 = vadd.f32 %v250, 1.0
  %v258 = vadd.f32 %v252, 1.0
  %v259 = vadd.f32 %v254, 1.0
  %v260 = vadd.f32 %v256, 1.0
  %v261 = vrcp.pop %v257
  %v262 = vmul.f32 %v257, %v261
  %v263 = vsub.f32 1.0, %v262
  %v264 = vmul.f32 %v261, %v263
  %v265 = vadd.f32 %v261, %v264
  %vm266 = vweird.f32 %v257
  %vm267 = vweird.f32 %v261
  %vm268 = vmor %vm266, %vm267
  %v269 = vsel %vm268, %v261, %v265
  %v270 = vand.u32 2147483647, %v257
  %vm271 = vcmp.eq.f32.partialorder %v270, 8.507059e+37
  %v272 = vand.u32 %v257, 2147483648
  %v273 = vor.u32 1.1754944e-38, %v272
  %v274 = vsel %vm271, %v273, %v269
  %v275 = vmul.f32 1.0, %v274
  %v276 = vrcp.pop %v258
  %v277 = vmul.f32 %v258, %v276
  %v278 = vsub.f32 1.0, %v277
  %v279 = vmul.f32 %v276, %v278
  %v280 = vadd.f32 %v276, %v279
  %vm281 = vweird.f32 %v258
  %vm282 = vweird.f32 %v276
  %vm283 = vmor %vm281, %vm282
  %v284 = vsel %vm283, %v276, %v280
  %v285 = vand.u32 2147483647, %v258
  %vm286 = vcmp.eq.f32.partialorder %v285, 8.507059e+37
  %v287 = vand.u32 %v258, 2147483648
  %v288 = vor.u32 1.1754944e-38, %v287
  %v289 = vsel %vm286, %v288, %v284
  %v290 = vmul.f32 1.0, %v289
  %v291 = vrcp.pop %v259
  %v292 = vmul.f32 %v259, %v291
  %v293 = vsub.f32 1.0, %v292
  %v294 = vmul.f32 %v291, %v293
  %v295 = vadd.f32 %v291, %v294
  %vm296 = vweird.f32 %v259
  %vm297 = vweird.f32 %v291
  %vm298 = vmor %vm296, %vm297
  %v299 = vsel %vm298, %v291, %v295
  %v300 = vand.u32 2147483647, %v259
  %vm301 = vcmp.eq.f32.partialorder %v300, 8.507059e+37
  %v302 = vand.u32 %v259, 2147483648
  %v303 = vor.u32 1.1754944e-38, %v302
  %v304 = vsel %vm301, %v303, %v299
  %v305 = vmul.f32 1.0, %v304
  %v306 = vrcp.pop %v260
  %v307 = vmul.f32 %v260, %v306
  %v308 = vsub.f32 1.0, %v307
  %v309 = vmul.f32 %v306, %v308
  %v310 = vadd.f32 %v306, %v309
  %vm311 = vweird.f32 %v260
  %vm312 = vweird.f32 %v306
  %vm313 = vmor %vm311, %vm312
  %v314 = vsel %vm313, %v306, %v310
  %v315 = vand.u32 2147483647, %v260
  %vm316 = vcmp.eq.f32.partialorder %v315, 8.507059e+37
  %v317 = vand.u32 %v260, 2147483648
  %v318 = vor.u32 1.1754944e-38, %v317
  %v319 = vsel %vm316, %v318, %v314
  %v320 = vmul.f32 1.0, %v319
  %v321 = vmul.f32 %v151, %v275
  %v322 = vmul.f32 %v165, %v290
  %v323 = vmul.f32 %v153, %v305
  %v324 = vmul.f32 %v167, %v320
  %v325 = vmul.f32 %v321, %v227
  %v326 = vmul.f32 %v322, %v241
  %v327 = vmul.f32 %v323, %v229
  %v328 = vmul.f32 %v324, %v243
  %v329 = vpack.c.bf16 %v327, %v325
  %v330 = vpack.c.bf16 %v328, %v326
  %v331 = vld [vmem:[#allocation3] sm:$0xff]
  %v332 = vld [vmem:[#allocation3 + $0x8] sm:$0xff]
  %v333 = vld [vmem:[%s4] sm:$0xf]
  %v334 = vld [vmem:[%s4 + $0x4] sm:$0xf]
  %v335 = vld [vmem:[%s4 + $0x8] sm:$0xf]
  %v336 = vld [vmem:[%s4 + $0xc] sm:$0xf]
  %v337 = vld [vmem:[%s4 + $0x10] sm:$0xf]
  %v338 = vld [vmem:[%s4 + $0x14] sm:$0xf]
  %v339 = vld [vmem:[%s4 + $0x18] sm:$0xf]
  %v340 = vld [vmem:[%s4 + $0x1c] sm:$0xf]
  %v341 = vld [vmem:[%s4 + $0x20] sm:$0xf]
  %v342 = vld [vmem:[%s4 + $0x24] sm:$0xf]
  %v343 = vld [vmem:[%s4 + $0x28] sm:$0xf]
  %v344 = vld [vmem:[%s4 + $0x2c] sm:$0xf]
  %v345 = vld [vmem:[%s4 + $0x30] sm:$0xf]
  %v346 = vld [vmem:[%s4 + $0x34] sm:$0xf]
  %v347 = vld [vmem:[%s4 + $0x38] sm:$0xf]
  %v348 = vld [vmem:[%s4 + $0x3c] sm:$0xf]
  %v349 = vld [vmem:[%s4 + $0x40] sm:$0xf]
  %v350 = vld [vmem:[%s4 + $0x44] sm:$0xf]
  %v351 = vld [vmem:[%s4 + $0x48] sm:$0xf]
  %v352 = vld [vmem:[%s4 + $0x4c] sm:$0xf]
  %v353 = vld [vmem:[%s4 + $0x50] sm:$0xf]
  %v354 = vld [vmem:[%s4 + $0x54] sm:$0xf]
  %v355 = vld [vmem:[%s4 + $0x58] sm:$0xf]
  %v356 = vld [vmem:[%s4 + $0x5c] sm:$0xf]
  %v357 = vld [vmem:[%s4 + $0x60] sm:$0xf]
  %v358 = vld [vmem:[%s4 + $0x64] sm:$0xf]
  %v359 = vld [vmem:[%s4 + $0x68] sm:$0xf]
  %v360 = vld [vmem:[%s4 + $0x6c] sm:$0xf]
  %v361 = vld [vmem:[%s4 + $0x70] sm:$0xf]
  %v362 = vld [vmem:[%s4 + $0x74] sm:$0xf]
  %v363 = vld [vmem:[%s4 + $0x78] sm:$0xf]
  %v364 = vld [vmem:[%s4 + $0x7c] sm:$0xf]
  %v397 = vunpack.c.l.b16 %v333
  %v398 = vunpack.c.l.b16 %v334
  %v399 = vunpack.c.l.b16 %v335
  %v400 = vunpack.c.l.b16 %v336
  %v401 = vunpack.c.l.b16 %v337
  %v402 = vunpack.c.l.b16 %v338
  %v403 = vunpack.c.l.b16 %v339
  %v404 = vunpack.c.l.b16 %v340
  %v405 = vunpack.c.l.b16 %v341
  %v406 = vunpack.c.l.b16 %v342
  %v407 = vunpack.c.l.b16 %v343
  %v408 = vunpack.c.l.b16 %v344
  %v409 = vunpack.c.l.b16 %v345
  %v410 = vunpack.c.l.b16 %v346
  %v411 = vunpack.c.l.b16 %v347
  %v412 = vunpack.c.l.b16 %v348
  %v413 = vunpack.c.l.b16 %v349
  %v414 = vunpack.c.l.b16 %v350
  %v415 = vunpack.c.l.b16 %v351
  %v416 = vunpack.c.l.b16 %v352
  %v417 = vunpack.c.l.b16 %v353
  %v418 = vunpack.c.l.b16 %v354
  %v419 = vunpack.c.l.b16 %v355
  %v420 = vunpack.c.l.b16 %v356
  %v421 = vunpack.c.l.b16 %v357
  %v422 = vunpack.c.l.b16 %v358
  %v423 = vunpack.c.l.b16 %v359
  %v424 = vunpack.c.l.b16 %v360
  %v425 = vunpack.c.l.b16 %v361
  %v426 = vunpack.c.l.b16 %v362
  %v427 = vunpack.c.l.b16 %v363
  %v428 = vunpack.c.l.b16 %v364
  %v429 = vpack.c.b16 %v398, %v397
  %v430 = vpack.c.b16 %v400, %v399
  %v431 = vpack.c.b16 %v402, %v401
  %v432 = vpack.c.b16 %v404, %v403
  %v433 = vpack.c.b16 %v406, %v405
  %v434 = vpack.c.b16 %v408, %v407
  %v435 = vpack.c.b16 %v410, %v409
  %v436 = vpack.c.b16 %v412, %v411
  %v437 = vpack.c.b16 %v414, %v413
  %v438 = vpack.c.b16 %v416, %v415
  %v439 = vpack.c.b16 %v418, %v417
  %v440 = vpack.c.b16 %v420, %v419
  %v441 = vpack.c.b16 %v422, %v421
  %v442 = vpack.c.b16 %v424, %v423
  %v443 = vpack.c.b16 %v426, %v425
  %v444 = vpack.c.b16 %v428, %v427
  %461 = vmatpush.bf16.msra.mxu0 %v436
  %462 = vmatpush.bf16.msra.mxu0 %v435
  %463 = vmatpush.bf16.msra.mxu0 %v434
  %464 = vmatpush.bf16.msra.mxu0 %v433
  %465 = vmatpush.bf16.msra.mxu0 %v432
  %466 = vmatpush.bf16.msra.mxu0 %v431
  %467 = vmatpush.bf16.msra.mxu0 %v430
  %468 = vmatpush.bf16.msra.mxu0 %v429
  %469 = vmatmul.bf16.gmra.mxu0 %v329
  %v470 = vpop.f32.mrf.mxu0
  %v471 = vadd.f32 0.0, %v470
  %v472 = vpop.f32.mrf.mxu0
  %v473 = vadd.f32 0.0, %v472
  %474 = vdwg.mxu0
  %475 = vmatpush.bf16.msra.mxu0 %v444
  %476 = vmatpush.bf16.msra.mxu0 %v443
  %477 = vmatpush.bf16.msra.mxu0 %v442
  %478 = vmatpush.bf16.msra.mxu0 %v441
  %479 = vmatpush.bf16.msra.mxu0 %v440
  %480 = vmatpush.bf16.msra.mxu0 %v439
  %481 = vmatpush.bf16.msra.mxu0 %v438
  %482 = vmatpush.bf16.msra.mxu0 %v437
  %483 = vmatmul.bf16.gmra.mxu0 %v330
  %v484 = vpop.f32.mrf.mxu0
  %v485 = vadd.f32 %v471, %v484
  %v486 = vpop.f32.mrf.mxu0
  %v487 = vadd.f32 %v473, %v486
  %488 = vdwg.mxu0
  %v489 = vadd.f32 %v331, %v485
  %v490 = vadd.f32 %v332, %v487
  %491 = vst.msk [vmem:[#allocation3] sm:$0xff] %vm137, %v489
  %492 = vst.msk [vmem:[#allocation3 + $0x8] sm:$0xff] %vm137, %v490
  // Predicated region
  $region26: #{_lambda_.12} parent=0 // pred_check
    %p493 = pneg %p21
  $region27: #{_lambda_.12} parent=0 // pred_check_branch
    %495 = sbr.rel (%p493) target = $region29
  $region28: #{_lambda_.12} parent=0 // pred_region
    %v496 = vld [vmem:[%s0] sm:$0xff]
    %v497 = vld [vmem:[%s0 + $0x8] sm:$0xff]
    %v498 = vld [vmem:[#allocation3] sm:$0xff]
    %v499 = vld [vmem:[#allocation3 + $0x8] sm:$0xff]
    %v500 = vadd.f32 %v496, %v498
    %v501 = vadd.f32 %v497, %v499
    %502 = vst.msk [vmem:[%s5] sm:$0xff] %vm137, %v500
    %503 = vst.msk [vmem:[%s5 + $0x8] sm:$0xff] %vm137, %v501
  $region29: #{_lambda_.12} parent=0 // pred_fallthru
    _
  // Predicated region
  $region30: #{_lambda_.12} parent=0 // pred_check
    _
  $region31: #{_lambda_.12} parent=0 // pred_check_branch
    %505 = sbr.rel (0) target = $region33
  $region32: #{_lambda_.12} parent=0 // pred_region
    _
  $region33: #{_lambda_.12} parent=0 // pred_fallthru
    _
  // Predicated region
  $region34: #{_lambda_.12} parent=0 // pred_check
    _
  $region35: #{_lambda_.12} parent=0 // pred_check_branch
    %507 = sbr.rel (0) target = $region37
  $region36: #{_lambda_.12} parent=0 // pred_region
    _
  $region37: #{_lambda_.12} parent=0 // pred_fallthru
    _

// kernel: _lambda_.10
$region0: #{_lambda_.10}
  #allocation0 [shape = 'u32[]', space=smem, size = 0x4, offset = 0x4, fixed_abs, tag = 'smem constant byte address 0x4 - core index']
  #allocation1 [shape = 'u32[72,128]{1,0:T(1,128)}', space=vmem, size = 0x9000, scoped, tag = 'internal scratch']
  #allocation2 [shape = 'f32[4,8,1]{2,1,0:T(8,128)}', space=vmem, size = 0x4000, scoped, tag = 'scratch operand']
  #allocation3 [shape = 'f32[4,8,1]{2,1,0:T(8,128)}', space=vmem, size = 0x4000, scoped, tag = 'scratch operand']
  #allocation4 [shape = 'f32[4,8,16]{2,1,0:T(8,128)}', space=vmem, size = 0x4000, scoped, tag = 'scratch operand']
  %s0 = inlined_call_operand.vmem [shape: bf16[2,8,64], index: 0, kind: input, shape index: {}]
  %s1 = inlined_call_operand.vmem [shape: bf16[2,8,64], index: 1, kind: input, shape index: {}]
  %s2 = inlined_call_operand.vmem [shape: bf16[2,8,64], index: 2, kind: input, shape index: {}]
  %s3 = inlined_call_operand.vmem [shape: bf16[2,8,64], index: 3, kind: output, shape index: {}]
  %s4 = sld [smem:[#allocation0]]
  $region57: #{_lambda_.10} parent=0
    _
  %s6 = ssub.s32 1, %s4
  %s7 = scalar_select 0, %s6, %s4
  loop: start=0, step=1, limit=4
  $region2: #{_lambda_.10} parent=0 // loop_pre_header
    _
  $region3: #{_lambda_.10} parent=0 // loop_header
    %s9 = sphi 0, %s13
    %p10 = scmp.ge.s32.totalorder %s9, 4
    %s16 = sphi 0, %s35
    %s17 = sphi 0, %s31
    %s18 = sphi 0, %s27
    %s19 = sphi 0, %s16
    %s20 = sphi 0, %s17
    %s21 = sphi 0, %s18
    %s22 = sphi 0, %s19
    %s23 = sphi 0, %s20
    %s24 = sphi 0, %s21
    %s40 = sphi 0, %s42
    %s43 = sphi 0, %s40
    %s44 = sphi 0, %s43
    %s60 = sphi 0, %s44
    %s72 = sphi 0, %s74
    %s75 = sphi 0, %s72
    %s76 = sphi 0, %s75
    %s92 = sphi 0, %s76
    %s104 = sphi 0, %s106
    %s107 = sphi 0, %s104
    %s108 = sphi 0, %s107
    %s124 = sphi 0, %s108
    %s132 = sphi 0, %s134
    %s135 = sphi 0, %s132
    %s136 = sphi 0, %s135
    %s152 = sphi 0, %s136
  $region4: #{_lambda_.10} parent=0 // loop_header_branch
    %12 = sbr.rel (%p10) target = $region8
  $region5: #{_lambda_.10} parent=0 // loop_body
    %s14 = ssub.s32 %s9, 1
    %s15 = ssub.s32 %s9, 2
    %s25 = sadd.s32 1, %s18
    %p26 = scmp.ge.s32.totalorder %s25, 1
    %s27 = scalar_select %p26, 0, %s25
    %s28 = sadd.s32 1, %s17
    %s29 = scalar_select %p26, %s28, %s17
    %p30 = scmp.ge.s32.totalorder %s29, 1
    %s31 = scalar_select %p30, 0, %s29
    %s32 = sadd.s32 1, %s16
    %s33 = scalar_select %p30, %s32, %s16
    %p34 = scmp.ge.s32.totalorder %s33, 2
    %s35 = scalar_select %p34, 0, %s33
    %s36 = ssub.s32 %s16, %s35
    %s37 = ssub.s32 %s17, %s31
    %s38 = sor.u32 %s36, %s37
    %p39 = scmp.eq.s32.totalorder %s38, 0
    %s41 = sadd.s32 %s40, 1
    %s42 = scalar_select %p39, %s40, %s41
    %p45 = pneg %p39
    %p46 = scmp.eq.s32.totalorder %s9, 1
    %p47 = por %p45, %p46
    %p48 = scmp.ne.s32.totalorder %s40, %s43
    %p49 = scmp.eq.s32.totalorder %s9, 0
    %p50 = por %p48, %p49
    %p51 = scmp.ne.s32.totalorder %s40, %s43
    %p52 = scmp.eq.s32.totalorder %s14, 1
    %p53 = por %p51, %p52
    %p54 = scmp.ne.s32.totalorder %s43, %s44
    %p55 = scmp.eq.s32.totalorder %s14, 0
    %p56 = por %p54, %p55
    %p57 = scmp.ne.s32.totalorder %s43, %s44
    %p58 = scmp.eq.s32.totalorder %s15, 1
    %p59 = por %p57, %p58
    %p61 = scmp.ne.s32.totalorder %s44, %s60
    %p62 = scmp.eq.s32.totalorder %s15, 0
    %p63 = por %p61, %p62
    %p64 = scmp.lt.s32.totalorder %s18, %s17
    %s65 = scalar_select %p64, %s18, %s17
    %p66 = scmp.lt.s32.totalorder %s27, %s31
    %s67 = scalar_select %p66, %s27, %s31
    %s68 = ssub.s32 %s16, %s35
    %s69 = ssub.s32 %s65, %s67
    %s70 = sor.u32 %s68, %s69
    %p71 = scmp.eq.s32.totalorder %s70, 0
    %s73 = sadd.s32 %s72, 1
    %s74 = scalar_select %p71, %s72, %s73
    %p77 = pneg %p71
    %p78 = scmp.eq.s32.totalorder %s9, 1
    %p79 = por %p77, %p78
    %p80 = scmp.ne.s32.totalorder %s72, %s75
    %p81 = scmp.eq.s32.totalorder %s9, 0
    %p82 = por %p80, %p81
    %p83 = scmp.ne.s32.totalorder %s72, %s75
    %p84 = scmp.eq.s32.totalorder %s14, 1
    %p85 = por %p83, %p84
    %p86 = scmp.ne.s32.totalorder %s75, %s76
    %p87 = scmp.eq.s32.totalorder %s14, 0
    %p88 = por %p86, %p87
    %p89 = scmp.ne.s32.totalorder %s75, %s76
    %p90 = scmp.eq.s32.totalorder %s15, 1
    %p91 = por %p89, %p90
    %p93 = scmp.ne.s32.totalorder %s76, %s92
    %p94 = scmp.eq.s32.totalorder %s15, 0
    %p95 = por %p93, %p94
    %p96 = scmp.lt.s32.totalorder %s18, %s17
    %s97 = scalar_select %p96, %s18, %s17
    %p98 = scmp.lt.s32.totalorder %s27, %s31
    %s99 = scalar_select %p98, %s27, %s31
    %s100 = ssub.s32 %s16, %s35
    %s101 = ssub.s32 %s97, %s99
    %s102 = sor.u32 %s100, %s101
    %p103 = scmp.eq.s32.totalorder %s102, 0
    %s105 = sadd.s32 %s104, 1
    %s106 = scalar_select %p103, %s104, %s105
    %p109 = pneg %p103
    %p110 = scmp.eq.s32.totalorder %s9, 1
    %p111 = por %p109, %p110
    %p112 = scmp.ne.s32.totalorder %s104, %s107
    %p113 = scmp.eq.s32.totalorder %s9, 0
    %p114 = por %p112, %p113
    %p115 = scmp.ne.s32.totalorder %s104, %s107
    %p116 = scmp.eq.s32.totalorder %s14, 1
    %p117 = por %p115, %p116
    %p118 = scmp.ne.s32.totalorder %s107, %s108
    %p119 = scmp.eq.s32.totalorder %s14, 0
    %p120 = por %p118, %p119
    %p121 = scmp.ne.s32.totalorder %s107, %s108
    %p122 = scmp.eq.s32.totalorder %s15, 1
    %p123 = por %p121, %p122
    %p125 = scmp.ne.s32.totalorder %s108, %s124
    %p126 = scmp.eq.s32.totalorder %s15, 0
    %p127 = por %p125, %p126
    %s128 = ssub.s32 %s16, %s35
    %s129 = ssub.s32 %s17, %s31
    %s130 = sor.u32 %s128, %s129
    %p131 = scmp.eq.s32.totalorder %s130, 0
    %s133 = sadd.s32 %s132, 1
    %s134 = scalar_select %p131, %s132, %s133
    %p137 = pneg %p131
    %p138 = scmp.eq.s32.totalorder %s9, 1
    %p139 = por %p137, %p138
    %p140 = scmp.ne.s32.totalorder %s132, %s135
    %p141 = scmp.eq.s32.totalorder %s9, 0
    %p142 = por %p140, %p141
    %p143 = scmp.ne.s32.totalorder %s132, %s135
    %p144 = scmp.eq.s32.totalorder %s14, 1
    %p145 = por %p143, %p144
    %p146 = scmp.ne.s32.totalorder %s135, %s136
    %p147 = scmp.eq.s32.totalorder %s14, 0
    %p148 = por %p146, %p147
    %p149 = scmp.ne.s32.totalorder %s135, %s136
    %p150 = scmp.eq.s32.totalorder %s15, 1
    %p151 = por %p149, %p150
    %p153 = scmp.ne.s32.totalorder %s136, %s152
    %p154 = scmp.eq.s32.totalorder %s15, 0
    %p155 = por %p153, %p154
    %p156 = scmp.le.s32.totalorder 1, %s9
    %p157 = scmp.lt.s32.totalorder %s9, 3
    %p158 = pnand %p156, %p157
    %p159 = pneg %p158
    // Predicated region
    $region9: #{_lambda_.10} parent=5 // pred_check
      _
    $region10: #{_lambda_.10} parent=5 // pred_check_branch
      %161 = sbr.rel (%p158) target = $region12
    $region11: #{_lambda_.10} parent=5 // pred_region
      %s162 = ssub.s32 %s9, 1
    $region12: #{_lambda_.10} parent=5 // pred_fallthru
      _
    %p163 = scmp.lt.s32.totalorder %s9, 2
    // Predicated region
    $region13: #{_lambda_.10} parent=5 // pred_check
      %p164 = pneg %p163
    $region14: #{_lambda_.10} parent=5 // pred_check_branch
      %166 = sbr.rel (%p164) target = $region16
    $region15: #{_lambda_.10} parent=5 // pred_region
      // Predicated region
      $region17: #{_lambda_.10} parent=15 // pred_check
        %p167 = pneg %p50
      $region18: #{_lambda_.10} parent=15 // pred_check_branch
        %169 = sbr.rel (%p167) target = $region20
      $region19: #{_lambda_.10} parent=15 // pred_region
        %p170 = scmp.lt.s32.totalorder %s16, 1
        %s171 = scalar_select %p170, %s16, 1
        %p172 = scmp.lt.s32.totalorder %s17, 0
        %s173 = scalar_select %p172, %s17, 0
        %s174 = sadd.s32 %s173, %s171
        %s175 = smul.addr %s174, 4
        %s176 = scalar_lea.vmem %s0, %s175
      $region20: #{_lambda_.10} parent=15 // pred_fallthru
        _
      // Predicated region
      $region21: #{_lambda_.10} parent=15 // pred_check
        %p177 = pneg %p82
      $region22: #{_lambda_.10} parent=15 // pred_check_branch
        %179 = sbr.rel (%p177) target = $region24
      $region23: #{_lambda_.10} parent=15 // pred_region
        %p180 = scmp.lt.s32.totalorder %s18, %s17
        %s181 = scalar_select %p180, %s18, %s17
        %p182 = scmp.lt.s32.totalorder %s16, 1
        %s183 = scalar_select %p182, %s16, 1
        %p184 = scmp.lt.s32.totalorder %s181, 0
        %s185 = scalar_select %p184, %s181, 0
        %s186 = sadd.s32 %s185, %s183
        %s187 = smul.addr %s186, 4
        %s188 = scalar_lea.vmem %s1, %s187
        %p189 = scmp.lt.s32.totalorder %s18, %s17
        %s190 = scalar_select %p189, %s18, %s17
      $region24: #{_lambda_.10} parent=15 // pred_fallthru
        _
      // Predicated region
      $region25: #{_lambda_.10} parent=15 // pred_check
        %p191 = pneg %p114
      $region26: #{_lambda_.10} parent=15 // pred_check_branch
        %193 = sbr.rel (%p191) target = $region28
      $region27: #{_lambda_.10} parent=15 // pred_region
        %p194 = scmp.lt.s32.totalorder %s18, %s17
        %s195 = scalar_select %p194, %s18, %s17
        %p196 = scmp.lt.s32.totalorder %s16, 1
        %s197 = scalar_select %p196, %s16, 1
        %p198 = scmp.lt.s32.totalorder %s195, 0
        %s199 = scalar_select %p198, %s195, 0
        %s200 = sadd.s32 %s199, %s197
        %s201 = smul.addr %s200, 4
        %s202 = scalar_lea.vmem %s2, %s201
        %p203 = scmp.lt.s32.totalorder %s18, %s17
        %s204 = scalar_select %p203, %s18, %s17
      $region28: #{_lambda_.10} parent=15 // pred_fallthru
        _
    $region16: #{_lambda_.10} parent=5 // pred_fallthru
      _
    %p205 = scmp.le.s32.totalorder 1, %s9
    %p206 = scmp.lt.s32.totalorder %s9, 3
    %p207 = pnand %p205, %p206
    %p208 = pneg %p207
    // Predicated region
    $region29: #{_lambda_.10} parent=5 // pred_check
      _
    $region30: #{_lambda_.10} parent=5 // pred_check_branch
      %210 = sbr.rel (%p207) target = $region32
    $region31: #{_lambda_.10} parent=5 // pred_region
      %s211 = ssub.s32 %s9, 1
      %p212 = scmp.lt.s32.totalorder %s19, 1
      %s213 = scalar_select %p212, %s19, 1
      %p214 = scmp.lt.s32.totalorder %s20, 0
      %s215 = scalar_select %p214, %s20, 0
      %s216 = sadd.s32 %s215, %s213
      %s217 = smul.addr %s216, 4
      %s218 = scalar_lea.vmem %s0, %s217
      %p219 = pneg %p56
      %p220 = pneg %p53
      %p221 = scmp.lt.s32.totalorder %s21, %s20
      %s222 = scalar_select %p221, %s21, %s20
      %p223 = scmp.lt.s32.totalorder %s19, 1
      %s224 = scalar_select %p223, %s19, 1
      %p225 = scmp.lt.s32.totalorder %s222, 0
      %s226 = scalar_select %p225, %s222, 0
      %s227 = sadd.s32 %s226, %s224
      %s228 = smul.addr %s227, 4
      %s229 = scalar_lea.vmem %s1, %s228
      %p230 = pneg %p88
      %p231 = pneg %p85
      %p232 = scmp.lt.s32.totalorder %s21, %s20
      %s233 = scalar_select %p232, %s21, %s20
      %p234 = scmp.lt.s32.totalorder %s19, 1
      %s235 = scalar_select %p234, %s19, 1
      %p236 = scmp.lt.s32.totalorder %s233, 0
      %s237 = scalar_select %p236, %s233, 0
      %s238 = sadd.s32 %s237, %s235
      %s239 = smul.addr %s238, 4
      %s240 = scalar_lea.vmem %s2, %s239
      %p241 = pneg %p120
      %p242 = pneg %p117
      %p243 = pneg %p148
      %p244 = pneg %p145
      %p245 = scmp.lt.s32.totalorder %s19, 1
      %s246 = scalar_select %p245, %s19, 1
      %p247 = scmp.lt.s32.totalorder %s20, 0
      %s248 = scalar_select %p247, %s20, 0
      %s249 = sadd.s32 %s248, %s246
      %s250 = smul.addr %s249, 4
      %s251 = scalar_lea.vmem %s3, %s250
      %p252 = scmp.lt.s32.totalorder %s19, 1
      %s253 = scalar_select %p252, %s19, 1
      %p254 = scmp.lt.s32.totalorder %s20, 0
      %s255 = scalar_select %p254, %s20, 0
      %s256 = sadd.s32 %s255, %s253
      %s257 = smul.addr %s256, 4
      %s258 = scalar_lea.vmem %s0, %s257
      %p259 = scmp.lt.s32.totalorder %s21, %s20
      %s260 = scalar_select %p259, %s21, %s20
      %p261 = scmp.lt.s32.totalorder %s19, 1
      %s262 = scalar_select %p261, %s19, 1
      %p263 = scmp.lt.s32.totalorder %s260, 0
      %s264 = scalar_select %p263, %s260, 0
      %s265 = sadd.s32 %s264, %s262
      %s266 = smul.addr %s265, 4
      %s267 = scalar_lea.vmem %s1, %s266
      %p268 = scmp.lt.s32.totalorder %s21, %s20
      %s269 = scalar_select %p268, %s21, %s20
      %p270 = scmp.lt.s32.totalorder %s21, %s20
      %s271 = scalar_select %p270, %s21, %s20
      %p272 = scmp.lt.s32.totalorder %s19, 1
      %s273 = scalar_select %p272, %s19, 1
      %p274 = scmp.lt.s32.totalorder %s271, 0
      %s275 = scalar_select %p274, %s271, 0
      %s276 = sadd.s32 %s275, %s273
      %s277 = smul.addr %s276, 4
      %s278 = scalar_lea.vmem %s2, %s277
      %p279 = scmp.lt.s32.totalorder %s21, %s20
      %s280 = scalar_select %p279, %s21, %s20
      %p281 = scmp.lt.s32.totalorder %s19, 1
      %s282 = scalar_select %p281, %s19, 1
      %p283 = scmp.lt.s32.totalorder %s20, 0
      %s284 = scalar_select %p283, %s20, 0
      %s285 = sadd.s32 %s284, %s282
      %s286 = smul.addr %s285, 4
      %s287 = scalar_lea.vmem %s3, %s286
      %p289 = scmp.eq.s32.totalorder %s21, 0
      // Predicated region
      $region33: #{_lambda_.10} parent=31 // pred_check
        %p290 = pneg %p289
      $region34: #{_lambda_.10} parent=31 // pred_check_branch
        %292 = sbr.rel (%p290) target = $region36
      $region35: #{_lambda_.10} parent=31 // pred_region
        %vm293 = vcmask 7168
        %294 = vst.msk [vmem:[#allocation2] sm:$0xff] %vm293, -1e+30
        %295 = vst.msk [vmem:[#allocation2 + $0x8] sm:$0xff] %vm293, -1e+30
        %296 = vst.msk [vmem:[#allocation2 + $0x10] sm:$0xff] %vm293, -1e+30
        %297 = vst.msk [vmem:[#allocation2 + $0x18] sm:$0xff] %vm293, -1e+30
        %298 = vst.msk [vmem:[#allocation3] sm:$0xff] %vm293, 0.0
        %299 = vst.msk [vmem:[#allocation3 + $0x8] sm:$0xff] %vm293, 0.0
        %300 = vst.msk [vmem:[#allocation3 + $0x10] sm:$0xff] %vm293, 0.0
        %301 = vst.msk [vmem:[#allocation3 + $0x18] sm:$0xff] %vm293, 0.0
        %vm302 = vcmask 130048
        %303 = vst.msk [vmem:[#allocation4] sm:$0xff] %vm302, 0.0
        %304 = vst.msk [vmem:[#allocation4 + $0x8] sm:$0xff] %vm302, 0.0
        %305 = vst.msk [vmem:[#allocation4 + $0x10] sm:$0xff] %vm302, 0.0
        %306 = vst.msk [vmem:[#allocation4 + $0x18] sm:$0xff] %vm302, 0.0
      $region36: #{_lambda_.10} parent=31 // pred_fallthru
        _
      %p307 = scmp.le.s32.totalorder %s21, %s20
      // Predicated region
      $region37: #{_lambda_.10} parent=31 // pred_check
        %p308 = pneg %p307
      $region38: #{_lambda_.10} parent=31 // pred_check_branch
        %310 = sbr.rel (%p308) target = $region40
      $region39: #{_lambda_.10} parent=31 // pred_region
        %v311 = vld [vmem:[%s258] sm:$0xf]
        %v312 = vld [vmem:[%s267] sm:$0xf]
        %v313 = vld [vmem:[%s278] sm:$0xf]
        %s314 = smul.u32 %s20, 8
        %v315 = vlaneseq
        %v316 = vshrl.u32 %v315, 7
        %v317 = vstv %s314
        %v318 = vadd.s32 %v317, %v316
        %s319 = smul.u32 %s21, 8
        %v320 = vlaneseq
        %v321 = vand.u32 %v320, 127
        %v322 = vstv %s319
        %v323 = vadd.s32 %v322, %v321
        %vm324 = vcmp.le.s32.totalorder %v323, %v318
        %v325 = vsel %vm324, 0.0, -1e+30
        %vm326 = vcmask 130048
        %v328 = vsel %vm326, %v311, 0
        %v331 = vsel %vm326, %v312, 0
        %333 = vmatpush.bf16.xpose.msra.mxu0 0
        %334 = vmatpush.bf16.xpose.msra.mxu0 0
        %335 = vmatpush.bf16.xpose.msra.mxu0 0
        %336 = vmatpush.bf16.xpose.msra.mxu0 0
        %337 = vmatpush.bf16.xpose.msra.mxu0 0
        %338 = vmatpush.bf16.xpose.msra.mxu0 0
        %339 = vmatpush.bf16.xpose.msra.mxu0 0
        %340 = vmatpush.bf16.xpose.msra.mxu0 %v331
        %341 = vmatmul.bf16.gmra.mxu0 %v328
        %v342 = vpop.f32.mrf.mxu0
        %v343 = vadd.f32 %v325, %v342
        %v344 = vpop.f32.mrf.mxu0
        %345 = vdwg.mxu0
        %v346 = vld [vmem:[#allocation2] sm:$0xff]
        %vm347 = vcmask 64512
        %v348 = vsel %vm347, %v343, -inf
        %349 = vmax.xlane.f32.xlu0 %v348
        %v350 = vpop.xlane.xlu0 %349
        %v351 = vmax.f32 %v346, %v350
        %v352 = vsub.f32 %v346, %v351
        %v353 = vmul.f32 %v352, 1.442695
        %v354 = vpow.pop %v353
        %356 = vset.pattern.permute.xlu0 0
        %357 = vperm.xlu0 %356, %v351
        %v358 = vpop.permute.xlu0 %357
        %v360 = vsub.f32 %v343, %v358
        %v361 = vmul.f32 %v360, 1.442695
        %v362 = vpow.pop %v361
        %v363 = vld [vmem:[#allocation3] sm:$0xff]
        %v364 = vmul.f32 %v354, %v363
        %v365 = vsel %vm347, %v362, 0.0
        %366 = vadd.xlane.f32.xlu0 %v365
        %v367 = vpop.xlane.xlu0 %366
        %v368 = vadd.f32 %v364, %v367
        %vm369 = vcmask 7168
        %370 = vst.msk [vmem:[#allocation3] sm:$0xff] %vm369, %v368
        %v371 = vpack.c.bf16 %v362, %v362
        %v373 = vsel %vm347, %v371, 0
        %vm375 = vcmask 1043456
        %v377 = vsel %vm375, %v313, 0
        %379 = vmatpush.bf16.msra.mxu0 0
        %380 = vmatpush.bf16.msra.mxu0 0
        %381 = vmatpush.bf16.msra.mxu0 0
        %382 = vmatpush.bf16.msra.mxu0 0
        %383 = vmatpush.bf16.msra.mxu0 0
        %384 = vmatpush.bf16.msra.mxu0 0
        %385 = vmatpush.bf16.msra.mxu0 0
        %386 = vmatpush.bf16.msra.mxu0 %v377
        %387 = vmatmul.bf16.gmra.mxu0 %v373
        %v388 = vpop.f32.mrf.mxu0
        %v389 = vadd.f32 0.0, %v388
        %v390 = vpop.f32.mrf.mxu0
        %391 = vdwg.mxu0
        %v392 = vld [vmem:[#allocation4] sm:$0xff]
        %394 = vset.pattern.permute.xlu0 0
        %395 = vperm.xlu0 %394, %v354
        %v396 = vpop.permute.xlu0 %395
        %v398 = vmul.f32 %v396, %v392
        %v399 = vadd.f32 %v398, %v389
        %400 = vst.msk [vmem:[#allocation4] sm:$0xff] %vm326, %v399
        %401 = vst.msk [vmem:[#allocation2] sm:$0xff] %vm369, %v351
        %v403 = vunpack.c.l.b16 %v311
        %v404 = vpack.c.b16 %v403, %v403
        %405 = vrot.lane.b32.xlu0 %v404, 112
        %v406 = vpop.permute.xlu0 %405
        %v408 = vunpack.c.l.b16 %v312
        %v409 = vpack.c.b16 %v408, %v408
        %410 = vrot.lane.b32.xlu0 %v409, 112
        %v411 = vpop.permute.xlu0 %410
        %v413 = vsel %vm326, %v406, 0
        %v416 = vsel %vm326, %v411, 0
        %418 = vmatpush.bf16.xpose.msra.mxu0 0
        %419 = vmatpush.bf16.xpose.msra.mxu0 0
        %420 = vmatpush.bf16.xpose.msra.mxu0 0
        %421 = vmatpush.bf16.xpose.msra.mxu0 0
        %422 = vmatpush.bf16.xpose.msra.mxu0 0
        %423 = vmatpush.bf16.xpose.msra.mxu0 0
        %424 = vmatpush.bf16.xpose.msra.mxu0 0
        %425 = vmatpush.bf16.xpose.msra.mxu0 %v416
        %426 = vmatmul.bf16.gmra.mxu0 %v413
        %v427 = vpop.f32.mrf.mxu0
        %v428 = vadd.f32 %v325, %v427
        %v429 = vpop.f32.mrf.mxu0
        %430 = vdwg.mxu0
        %s431 = scalar_lea.vmem [#allocation2], 8
        %v432 = vld [vmem:[%s431] sm:$0xff]
        %v433 = vsel %vm347, %v428, -inf
        %434 = vmax.xlane.f32.xlu0 %v433
        %v435 = vpop.xlane.xlu0 %434
        %v436 = vmax.f32 %v432, %v435
        %v437 = vsub.f32 %v432, %v436
        %v438 = vmul.f32 %v437, 1.442695
        %v439 = vpow.pop %v438
        %441 = vset.pattern.permute.xlu0 0
        %442 = vperm.xlu0 %441, %v436
        %v443 = vpop.permute.xlu0 %442
        %v445 = vsub.f32 %v428, %v443
        %v446 = vmul.f32 %v445, 1.442695
        %v447 = vpow.pop %v446
        %s448 = scalar_lea.vmem [#allocation3], 8
        %v449 = vld [vmem:[%s448] sm:$0xff]
        %v450 = vmul.f32 %v439, %v449
        %v451 = vsel %vm347, %v447, 0.0
        %452 = vadd.xlane.f32.xlu0 %v451
        %v453 = vpop.xlane.xlu0 %452
        %v454 = vadd.f32 %v450, %v453
        %455 = vst.msk [vmem:[%s448] sm:$0xff] %vm369, %v454
        %v456 = vpack.c.bf16 %v447, %v447
        %v458 = vunpack.c.l.b16 %v313
        %v459 = vpack.c.b16 %v458, %v458
        %460 = vrot.lane.b32.xlu0 %v459, 112
        %v461 = vpop.permute.xlu0 %460
        %v463 = vsel %vm347, %v456, 0
        %v466 = vsel %vm375, %v461, 0
        %468 = vmatpush.bf16.msra.mxu0 0
        %469 = vmatpush.bf16.msra.mxu0 0
        %470 = vmatpush.bf16.msra.mxu0 0
        %471 = vmatpush.bf16.msra.mxu0 0
        %472 = vmatpush.bf16.msra.mxu0 0
        %473 = vmatpush.bf16.msra.mxu0 0
        %474 = vmatpush.bf16.msra.mxu0 0
        %475 = vmatpush.bf16.msra.mxu0 %v466
        %476 = vmatmul.bf16.gmra.mxu0 %v463
        %v477 = vpop.f32.mrf.mxu0
        %v478 = vadd.f32 0.0, %v477
        %v479 = vpop.f32.mrf.mxu0
        %480 = vdwg.mxu0
        %s481 = scalar_lea.vmem [#allocation4], 8
        %v482 = vld [vmem:[%s481] sm:$0xff]
        %484 = vset.pattern.permute.xlu0 0
        %485 = vperm.xlu0 %484, %v439
        %v486 = vpop.permute.xlu0 %485
        %v488 = vmul.f32 %v486, %v482
        %v489 = vadd.f32 %v488, %v478
        %490 = vst.msk [vmem:[%s481] sm:$0xff] %vm326, %v489
        %491 = vst.msk [vmem:[%s431] sm:$0xff] %vm369, %v436
        %492 = vrot.lane.b32.xlu0 %v404, 96
        %v493 = vpop.permute.xlu0 %492
        %494 = vrot.lane.b32.xlu0 %v409, 96
        %v495 = vpop.permute.xlu0 %494
        %v497 = vsel %vm326, %v493, 0
        %v500 = vsel %vm326, %v495, 0
        %502 = vmatpush.bf16.xpose.msra.mxu0 0
        %503 = vmatpush.bf16.xpose.msra.mxu0 0
        %504 = vmatpush.bf16.xpose.msra.mxu0 0
        %505 = vmatpush.bf16.xpose.msra.mxu0 0
        %506 = vmatpush.bf16.xpose.msra.mxu0 0
        %507 = vmatpush.bf16.xpose.msra.mxu0 0
        %508 = vmatpush.bf16.xpose.msra.mxu0 0
        %509 = vmatpush.bf16.xpose.msra.mxu0 %v500
        %510 = vmatmul.bf16.gmra.mxu0 %v497
        %v511 = vpop.f32.mrf.mxu0
        %v512 = vadd.f32 %v325, %v511
        %v513 = vpop.f32.mrf.mxu0
        %514 = vdwg.mxu0
        %s515 = scalar_lea.vmem [#allocation2], 16
        %v516 = vld [vmem:[%s515] sm:$0xff]
        %v517 = vsel %vm347, %v512, -inf
        %518 = vmax.xlane.f32.xlu0 %v517
        %v519 = vpop.xlane.xlu0 %518
        %v520 = vmax.f32 %v516, %v519
        %v521 = vsub.f32 %v516, %v520
        %v522 = vmul.f32 %v521, 1.442695
        %v523 = vpow.pop %v522
        %525 = vset.pattern.permute.xlu0 0
        %526 = vperm.xlu0 %525, %v520
        %v527 = vpop.permute.xlu0 %526
        %v529 = vsub.f32 %v512, %v527
        %v530 = vmul.f32 %v529, 1.442695
        %v531 = vpow.pop %v530
        %s532 = scalar_lea.vmem [#allocation3], 16
        %v533 = vld [vmem:[%s532] sm:$0xff]
        %v534 = vmul.f32 %v523, %v533
        %v535 = vsel %vm347, %v531, 0.0
        %536 = vadd.xlane.f32.xlu0 %v535
        %v537 = vpop.xlane.xlu0 %536
        %v538 = vadd.f32 %v534, %v537
        %539 = vst.msk [vmem:[%s532] sm:$0xff] %vm369, %v538
        %v540 = vpack.c.bf16 %v531, %v531
        %541 = vrot.lane.b32.xlu0 %v459, 96
        %v542 = vpop.permute.xlu0 %541
        %v544 = vsel %vm347, %v540, 0
        %v547 = vsel %vm375, %v542, 0
        %549 = vmatpush.bf16.msra.mxu0 0
        %550 = vmatpush.bf16.msra.mxu0 0
        %551 = vmatpush.bf16.msra.mxu0 0
        %552 = vmatpush.bf16.msra.mxu0 0
        %553 = vmatpush.bf16.msra.mxu0 0
        %554 = vmatpush.bf16.msra.mxu0 0
        %555 = vmatpush.bf16.msra.mxu0 0
        %556 = vmatpush.bf16.msra.mxu0 %v547
        %557 = vmatmul.bf16.gmra.mxu0 %v544
        %v558 = vpop.f32.mrf.mxu0
        %v559 = vadd.f32 0.0, %v558
        %v560 = vpop.f32.mrf.mxu0
        %561 = vdwg.mxu0
        %s562 = scalar_lea.vmem [#allocation4], 16
        %v563 = vld [vmem:[%s562] sm:$0xff]
        %565 = vset.pattern.permute.xlu0 0
        %566 = vperm.xlu0 %565, %v523
        %v567 = vpop.permute.xlu0 %566
        %v569 = vmul.f32 %v567, %v563
        %v570 = vadd.f32 %v569, %v559
        %571 = vst.msk [vmem:[%s562] sm:$0xff] %vm326, %v570
        %572 = vst.msk [vmem:[%s515] sm:$0xff] %vm369, %v520
        %573 = vrot.lane.b32.xlu0 %v404, 80
        %v574 = vpop.permute.xlu0 %573
        %575 = vrot.lane.b32.xlu0 %v409, 80
        %v576 = vpop.permute.xlu0 %575
        %v578 = vsel %vm326, %v574, 0
        %v581 = vsel %vm326, %v576, 0
        %583 = vmatpush.bf16.xpose.msra.mxu0 0
        %584 = vmatpush.bf16.xpose.msra.mxu0 0
        %585 = vmatpush.bf16.xpose.msra.mxu0 0
        %586 = vmatpush.bf16.xpose.msra.mxu0 0
        %587 = vmatpush.bf16.xpose.msra.mxu0 0
        %588 = vmatpush.bf16.xpose.msra.mxu0 0
        %589 = vmatpush.bf16.xpose.msra.mxu0 0
        %590 = vmatpush.bf16.xpose.msra.mxu0 %v581
        %591 = vmatmul.bf16.gmra.mxu0 %v578
        %v592 = vpop.f32.mrf.mxu0
        %v593 = vadd.f32 %v325, %v592
        %v594 = vpop.f32.mrf.mxu0
        %595 = vdwg.mxu0
        %s596 = scalar_lea.vmem [#allocation2], 24
        %v597 = vld [vmem:[%s596] sm:$0xff]
        %v598 = vsel %vm347, %v593, -inf
        %599 = vmax.xlane.f32.xlu0 %v598
        %v600 = vpop.xlane.xlu0 %599
        %v601 = vmax.f32 %v597, %v600
        %v602 = vsub.f32 %v597, %v601
        %v603 = vmul.f32 %v602, 1.442695
        %v604 = vpow.pop %v603
        %606 = vset.pattern.permute.xlu0 0
        %607 = vperm.xlu0 %606, %v601
        %v608 = vpop.permute.xlu0 %607
        %v610 = vsub.f32 %v593, %v608
        %v611 = vmul.f32 %v610, 1.442695
        %v612 = vpow.pop %v611
        %s613 = scalar_lea.vmem [#allocation3], 24
        %v614 = vld [vmem:[%s613] sm:$0xff]
        %v615 = vmul.f32 %v604, %v614
        %v616 = vsel %vm347, %v612, 0.0
        %617 = vadd.xlane.f32.xlu0 %v616
        %v618 = vpop.xlane.xlu0 %617
        %v619 = vadd.f32 %v615, %v618
        %620 = vst.msk [vmem:[%s613] sm:$0xff] %vm369, %v619
        %v621 = vpack.c.bf16 %v612, %v612
        %622 = vrot.lane.b32.xlu0 %v459, 80
        %v623 = vpop.permute.xlu0 %622
        %v625 = vsel %vm347, %v621, 0
        %v628 = vsel %vm375, %v623, 0
        %630 = vmatpush.bf16.msra.mxu0 0
        %631 = vmatpush.bf16.msra.mxu0 0
        %632 = vmatpush.bf16.msra.mxu0 0
        %633 = vmatpush.bf16.msra.mxu0 0
        %634 = vmatpush.bf16.msra.mxu0 0
        %635 = vmatpush.bf16.msra.mxu0 0
        %636 = vmatpush.bf16.msra.mxu0 0
        %637 = vmatpush.bf16.msra.mxu0 %v628
        %638 = vmatmul.bf16.gmra.mxu0 %v625
        %v639 = vpop.f32.mrf.mxu0
        %v640 = vadd.f32 0.0, %v639
        %v641 = vpop.f32.mrf.mxu0
        %642 = vdwg.mxu0
        %s643 = scalar_lea.vmem [#allocation4], 24
        %v644 = vld [vmem:[%s643] sm:$0xff]
        %646 = vset.pattern.permute.xlu0 0
        %647 = vperm.xlu0 %646, %v604
        %v648 = vpop.permute.xlu0 %647
        %v650 = vmul.f32 %v648, %v644
        %v651 = vadd.f32 %v650, %v640
        %652 = vst.msk [vmem:[%s643] sm:$0xff] %vm326, %v651
        %653 = vst.msk [vmem:[%s596] sm:$0xff] %vm369, %v601
      $region40: #{_lambda_.10} parent=31 // pred_fallthru
        _
      %p654 = scmp.eq.s32.totalorder %s21, %s20
      // Predicated region
      $region41: #{_lambda_.10} parent=31 // pred_check
        %p655 = pneg %p654
      $region42: #{_lambda_.10} parent=31 // pred_check_branch
        %657 = sbr.rel (%p655) target = $region44
      $region43: #{_lambda_.10} parent=31 // pred_region
        %v658 = vld [vmem:[#allocation3] sm:$0xff]
        %v659 = vrcp.pop %v658
        %v660 = vld [vmem:[#allocation4] sm:$0xff]
        %662 = vset.pattern.permute.xlu0 0
        %663 = vperm.xlu0 %662, %v659
        %v664 = vpop.permute.xlu0 %663
        %v666 = vmul.f32 %v660, %v664
        %s667 = scalar_lea.vmem [#allocation3], 8
        %v668 = vld [vmem:[%s667] sm:$0xff]
        %v669 = vrcp.pop %v668
        %s670 = scalar_lea.vmem [#allocation4], 8
        %v671 = vld [vmem:[%s670] sm:$0xff]
        %673 = vset.pattern.permute.xlu0 0
        %674 = vperm.xlu0 %673, %v669
        %v675 = vpop.permute.xlu0 %674
        %v677 = vmul.f32 %v671, %v675
        %s678 = scalar_lea.vmem [#allocation3], 16
        %v679 = vld [vmem:[%s678] sm:$0xff]
        %v680 = vrcp.pop %v679
        %s681 = scalar_lea.vmem [#allocation4], 16
        %v682 = vld [vmem:[%s681] sm:$0xff]
        %684 = vset.pattern.permute.xlu0 0
        %685 = vperm.xlu0 %684, %v680
        %v686 = vpop.permute.xlu0 %685
        %v688 = vmul.f32 %v682, %v686
        %s689 = scalar_lea.vmem [#allocation3], 24
        %v690 = vld [vmem:[%s689] sm:$0xff]
        %v691 = vrcp.pop %v690
        %s692 = scalar_lea.vmem [#allocation4], 24
        %v693 = vld [vmem:[%s692] sm:$0xff]
        %695 = vset.pattern.permute.xlu0 0
        %696 = vperm.xlu0 %695, %v691
        %v697 = vpop.permute.xlu0 %696
        %v699 = vmul.f32 %v693, %v697
        %701 = vrot.lane.b32.xlu0 %v677, 16
        %v702 = vpop.permute.xlu0 %701
        %705 = vrot.lane.b32.xlu0 %v688, 32
        %v706 = vpop.permute.xlu0 %705
        %709 = vrot.lane.b32.xlu0 %v699, 48
        %v710 = vpop.permute.xlu0 %709
        %vm712 = vcmask 130048
        %v713 = vsel %vm712, %v666, %v702
        %vm714 = vcmask 261120
        %v715 = vsel %vm714, %v713, %v706
        %vm716 = vcmask 392192
        %v717 = vsel %vm716, %v715, %v710
        %v718 = vpack.c.bf16 %v717, %v717
        %vm719 = vcmask 519168
        %720 = vst.msk [vmem:[%s287] sm:$0xf] %vm719, %v718
      $region44: #{_lambda_.10} parent=31 // pred_fallthru
        _
      %p721 = scmp.lt.s32.totalorder %s19, 1
      %s722 = scalar_select %p721, %s19, 1
      %p723 = scmp.lt.s32.totalorder %s20, 0
      %s724 = scalar_select %p723, %s20, 0
      %s725 = sadd.s32 %s724, %s722
      %s726 = smul.addr %s725, 4
      %s727 = scalar_lea.vmem %s3, %s726
      // Predicated region
      $region45: #{_lambda_.10} parent=31 // pred_check
        %p728 = pneg %p145
      $region46: #{_lambda_.10} parent=31 // pred_check_branch
        %730 = sbr.rel (%p728) target = $region48
      $region47: #{_lambda_.10} parent=31 // pred_region
        _
      $region48: #{_lambda_.10} parent=31 // pred_fallthru
        _
    $region32: #{_lambda_.10} parent=5 // pred_fallthru
      _
    %p731 = scmp.le.s32.totalorder 2, %s9
    // Predicated region
    $region49: #{_lambda_.10} parent=5 // pred_check
      %p732 = pneg %p731
    $region50: #{_lambda_.10} parent=5 // pred_check_branch
      %734 = sbr.rel (%p732) target = $region52
    $region51: #{_lambda_.10} parent=5 // pred_region
      %s735 = ssub.s32 %s9, 2
      // Predicated region
      $region53: #{_lambda_.10} parent=51 // pred_check
        %p736 = pneg %p151
      $region54: #{_lambda_.10} parent=51 // pred_check_branch
        %738 = sbr.rel (%p736) target = $region56
      $region55: #{_lambda_.10} parent=51 // pred_region
        %p739 = scmp.lt.s32.totalorder %s22, 1
        %s740 = scalar_select %p739, %s22, 1
        %p741 = scmp.lt.s32.totalorder %s23, 0
        %s742 = scalar_select %p741, %s23, 0
        %s743 = sadd.s32 %s742, %s740
        %s744 = smul.addr %s743, 4
        %s745 = scalar_lea.vmem %s3, %s744
      $region56: #{_lambda_.10} parent=51 // pred_fallthru
        _
    $region52: #{_lambda_.10} parent=5 // pred_fallthru
      _
  $region6: #{_lambda_.10} parent=0 // loop_footer
    %s13 = sadd.s32 1, %s9
  $region7: #{_lambda_.10} parent=0 // loop_footer_branch
    %8 = sbr.rel target = $region3
  $region8: #{_lambda_.10} parent=0 // loop_exit
    _

// kernel: _lambda_.15
$region0: #{_lambda_.15}
  #allocation0 [shape = 'u32[]', space=smem, size = 0x4, offset = 0x4, fixed_abs, tag = 'smem constant byte address 0x4 - core index']
  #allocation1 [shape = 'u32[72,128]{1,0:T(1,128)}', space=vmem, size = 0x9000, scoped, tag = 'internal scratch']
  %s0 = inlined_call_operand.vmem [shape: f32[16,64], index: 0, kind: input, shape index: {}]
  %s1 = inlined_call_operand.vmem [shape: bf16[16,64], index: 1, kind: input, shape index: {}]
  %s2 = inlined_call_operand.hbm [shape: bf16[64,64], index: 2, kind: input, shape index: {}]
  %s3 = inlined_call_operand.vmem [shape: f32[1,64], index: 3, kind: input, shape index: {}]
  %s4 = inlined_call_operand.vmem [shape: f32[16,64], index: 4, kind: output, shape index: {}]
  %s5 = sld [smem:[#allocation0]]
  $region30: #{_lambda_.15} parent=0
    _
  %s7 = ssub.s32 1, %s5
  %s8 = scalar_select 0, %s7, %s5
  $region1: #{_lambda_.15} parent=0
    #allocation2 [shape = 'u8[16384]{0}', space=vmem, size = 0x4000, scoped, tag = 'input window, operand 2, single buffered']
    #allocation3 [shape = 's32[1]{0}', space=sflag, size = 0x4, scoped, tag = 'scoped memory for _lambda_.15']
    %9 = vsyncpa [#allocation3], 0
    // Predicated region
    $region2: #{_lambda_.15} parent=1 // pred_check
      _
    $region3: #{_lambda_.15} parent=1 // pred_check_branch
      %11 = sbr.rel (0) target = $region5
    $region4: #{_lambda_.15} parent=1 // pred_region
      _
    $region5: #{_lambda_.15} parent=1 // pred_fallthru
      _
    // Predicated region
    $region6: #{_lambda_.15} parent=1 // pred_check
      _
    $region7: #{_lambda_.15} parent=1 // pred_check_branch
      %13 = sbr.rel (0) target = $region9
    $region8: #{_lambda_.15} parent=1 // pred_region
      _
    $region9: #{_lambda_.15} parent=1 // pred_fallthru
      _
    // Predicated region
    $region10: #{_lambda_.15} parent=1 // pred_check
      _
    $region11: #{_lambda_.15} parent=1 // pred_check_branch
      %15 = sbr.rel (0) target = $region13
    $region12: #{_lambda_.15} parent=1 // pred_region
      %17 = vsyncadd [#allocation3], 0
      %s18 = sshll.u32 %s2, 4
      %s19 = int_to_ptr.hbm [resolvable:$true] %s18
      %s20 = sshll.u32 [#allocation2], 4
      %s21 = int_to_ptr.vmem [resolvable:$true] %s20
      %26 = dma.hbm_to_vmem [thread:$0]  %s19, 512, %s21, [#allocation3], 64, 64, 4
    $region13: #{_lambda_.15} parent=1 // pred_fallthru
      _
    // Predicated region
    $region14: #{_lambda_.15} parent=1 // pred_check
      _
    $region15: #{_lambda_.15} parent=1 // pred_check_branch
      %28 = sbr.rel (0) target = $region17
    $region16: #{_lambda_.15} parent=1 // pred_region
      _
    $region17: #{_lambda_.15} parent=1 // pred_fallthru
      _
    // Predicated region
    $region18: #{_lambda_.15} parent=1 // pred_check
      _
    $region19: #{_lambda_.15} parent=1 // pred_check_branch
      %30 = sbr.rel (0) target = $region21
    $region20: #{_lambda_.15} parent=1 // pred_region
      %32 = dma.done [#allocation3], 512
    $region21: #{_lambda_.15} parent=1 // pred_fallthru
      _
    %v34 = vld [vmem:[%s0] sm:$0xff]
    %v35 = vld [vmem:[%s0 + $0x8] sm:$0xff]
    %v36 = vld [vmem:[%s1] sm:$0xf]
    %v37 = vld [vmem:[%s1 + $0x4] sm:$0xf]
    %v38 = vld [vmem:[#allocation2] sm:$0xf]
    %v39 = vld [vmem:[#allocation2 + $0x4] sm:$0xf]
    %v40 = vld [vmem:[#allocation2 + $0x8] sm:$0xf]
    %v41 = vld [vmem:[#allocation2 + $0xc] sm:$0xf]
    %v42 = vld [vmem:[#allocation2 + $0x10] sm:$0xf]
    %v43 = vld [vmem:[#allocation2 + $0x14] sm:$0xf]
    %v44 = vld [vmem:[#allocation2 + $0x18] sm:$0xf]
    %v45 = vld [vmem:[#allocation2 + $0x1c] sm:$0xf]
    %v48 = vunpack.c.l.b16 %v36
    %v49 = vunpack.c.l.b16 %v37
    %v50 = vpack.c.b16 %v49, %v48
    %v59 = vunpack.c.l.b16 %v38
    %v60 = vunpack.c.l.b16 %v39
    %v61 = vunpack.c.l.b16 %v40
    %v62 = vunpack.c.l.b16 %v41
    %v63 = vunpack.c.l.b16 %v42
    %v64 = vunpack.c.l.b16 %v43
    %v65 = vunpack.c.l.b16 %v44
    %v66 = vunpack.c.l.b16 %v45
    %v67 = vpack.c.b16 %v60, %v59
    %v68 = vpack.c.b16 %v62, %v61
    %v69 = vpack.c.b16 %v64, %v63
    %v70 = vpack.c.b16 %v66, %v65
    %vm75 = vcmask 523264
    %v77 = vsel %vm75, %v50, 0
    %79 = vmatpush.bf16.msra.mxu0 0
    %80 = vmatpush.bf16.msra.mxu0 0
    %81 = vmatpush.bf16.msra.mxu0 0
    %82 = vmatpush.bf16.msra.mxu0 0
    %83 = vmatpush.bf16.msra.mxu0 %v70
    %84 = vmatpush.bf16.msra.mxu0 %v69
    %85 = vmatpush.bf16.msra.mxu0 %v68
    %86 = vmatpush.bf16.msra.mxu0 %v67
    %87 = vmatmul.bf16.gmra.mxu0 %v77
    %v88 = vpop.f32.mrf.mxu0
    %v89 = vadd.f32 0.0, %v88
    %v90 = vpop.f32.mrf.mxu0
    %v91 = vadd.f32 0.0, %v90
    %92 = vdwg.mxu0
    %v93 = vadd.f32 %v34, %v89
    %v94 = vadd.f32 %v35, %v91
    %v95 = vld [vmem:[%s3] sm:$0x1]
    %v97 = vperm.slane %v95, 0
    %v99 = vadd.f32 %v93, %v97
    %v100 = vadd.f32 %v94, %v97
    %101 = vst.msk [vmem:[%s4] sm:$0xff] %vm75, %v99
    %102 = vst.msk [vmem:[%s4 + $0x8] sm:$0xff] %vm75, %v100
    // Predicated region
    $region22: #{_lambda_.15} parent=1 // pred_check
      _
    $region23: #{_lambda_.15} parent=1 // pred_check_branch
      %104 = sbr.rel (0) target = $region25
    $region24: #{_lambda_.15} parent=1 // pred_region
      _
    $region25: #{_lambda_.15} parent=1 // pred_fallthru
      _
    // Predicated region
    $region26: #{_lambda_.15} parent=1 // pred_check
      _
    $region27: #{_lambda_.15} parent=1 // pred_check_branch
      %106 = sbr.rel (0) target = $region29
    $region28: #{_lambda_.15} parent=1 // pred_region
      _
    $region29: #{_lambda_.15} parent=1 // pred_fallthru
      _
    %107 = vsyncpa [#allocation3], 1

// kernel: _lambda_.13
$region0: #{_lambda_.13}
  #allocation0 [shape = 'u32[]', space=smem, size = 0x4, offset = 0x4, fixed_abs, tag = 'smem constant byte address 0x4 - core index']
  #allocation1 [shape = 'u32[72,128]{1,0:T(1,128)}', space=vmem, size = 0x9000, scoped, tag = 'internal scratch']
  %s0 = inlined_call_operand.vmem [shape: f32[16,64], index: 0, kind: input, shape index: {}]
  %s1 = inlined_call_operand.vmem [shape: f32[1,64], index: 1, kind: input, shape index: {}]
  %s2 = inlined_call_operand.vmem [shape: bf16[64,64], index: 2, kind: input, shape index: {}]
  %s3 = inlined_call_operand.hbm [shape: bf16[64,64], index: 3, kind: input, shape index: {}]
  %s4 = inlined_call_operand.hbm [shape: bf16[64,64], index: 4, kind: input, shape index: {}]
  %s5 = inlined_call_operand.vmem [shape: f32[1,64], index: 5, kind: input, shape index: {}]
  %s6 = inlined_call_operand.vmem [shape: f32[1,64], index: 6, kind: input, shape index: {}]
  %s7 = inlined_call_operand.vmem [shape: f32[1,64], index: 7, kind: input, shape index: {}]
  %s8 = inlined_call_operand.vmem [shape: f32[16,16], index: 8, kind: input, shape index: {}]
  %s9 = inlined_call_operand.vmem [shape: f32[16,16], index: 9, kind: input, shape index: {}]
  %s10 = inlined_call_operand.vmem [shape: bf16[16,64], index: 10, kind: output, shape index: {0}]
  %s11 = inlined_call_operand.vmem [shape: bf16[16,64], index: 11, kind: output, shape index: {1}]
  %s12 = inlined_call_operand.vmem [shape: bf16[16,64], index: 12, kind: output, shape index: {2}]
  %13 = xla_tuple %s10, %s11, %s12
  %s14 = sld [smem:[#allocation0]]
  $region74: #{_lambda_.13} parent=0
    _
  %s16 = ssub.s32 1, %s14
  %s17 = scalar_select 0, %s16, %s14
  $region1: #{_lambda_.13} parent=0
    #allocation2 [shape = 'u8[16384]{0}', space=vmem, size = 0x4000, scoped, tag = 'input window, operand 3, single buffered']
    #allocation3 [shape = 's32[1]{0}', space=sflag, size = 0x4, scoped, tag = 'scoped memory for _lambda_.13']
    #allocation4 [shape = 'u8[16384]{0}', space=vmem, size = 0x4000, scoped, tag = 'input window, operand 4, single buffered']
    #allocation5 [shape = 's32[1]{0}', space=sflag, size = 0x4, scoped, tag = 'scoped memory for _lambda_.13']
    %18 = vsyncpa [#allocation3], 0
    %19 = vsyncpa [#allocation5], 0
    // Predicated region
    $region2: #{_lambda_.13} parent=1 // pred_check
      _
    $region3: #{_lambda_.13} parent=1 // pred_check_branch
      %21 = sbr.rel (0) target = $region5
    $region4: #{_lambda_.13} parent=1 // pred_region
      _
    $region5: #{_lambda_.13} parent=1 // pred_fallthru
      _
    // Predicated region
    $region6: #{_lambda_.13} parent=1 // pred_check
      _
    $region7: #{_lambda_.13} parent=1 // pred_check_branch
      %23 = sbr.rel (0) target = $region9
    $region8: #{_lambda_.13} parent=1 // pred_region
      _
    $region9: #{_lambda_.13} parent=1 // pred_fallthru
      _
    // Predicated region
    $region10: #{_lambda_.13} parent=1 // pred_check
      _
    $region11: #{_lambda_.13} parent=1 // pred_check_branch
      %25 = sbr.rel (0) target = $region13
    $region12: #{_lambda_.13} parent=1 // pred_region
      _
    $region13: #{_lambda_.13} parent=1 // pred_fallthru
      _
    // Predicated region
    $region14: #{_lambda_.13} parent=1 // pred_check
      _
    $region15: #{_lambda_.13} parent=1 // pred_check_branch
      %27 = sbr.rel (0) target = $region17
    $region16: #{_lambda_.13} parent=1 // pred_region
      %29 = vsyncadd [#allocation3], 0
      %s30 = sshll.u32 %s3, 4
      %s31 = int_to_ptr.hbm [resolvable:$true] %s30
      %s32 = sshll.u32 [#allocation2], 4
      %s33 = int_to_ptr.vmem [resolvable:$true] %s32
      %38 = dma.hbm_to_vmem [thread:$0]  %s31, 512, %s33, [#allocation3], 64, 64, 4
    $region17: #{_lambda_.13} parent=1 // pred_fallthru
      _
    // Predicated region
    $region18: #{_lambda_.13} parent=1 // pred_check
      _
    $region19: #{_lambda_.13} parent=1 // pred_check_branch
      %40 = sbr.rel (0) target = $region21
    $region20: #{_lambda_.13} parent=1 // pred_region
      %42 = vsyncadd [#allocation5], 0
      %s43 = sshll.u32 %s4, 4
      %s44 = int_to_ptr.hbm [resolvable:$true] %s43
      %s45 = sshll.u32 [#allocation4], 4
      %s46 = int_to_ptr.vmem [resolvable:$true] %s45
      %51 = dma.hbm_to_vmem [thread:$0]  %s44, 512, %s46, [#allocation5], 64, 64, 4
    $region21: #{_lambda_.13} parent=1 // pred_fallthru
      _
    // Predicated region
    $region22: #{_lambda_.13} parent=1 // pred_check
      _
    $region23: #{_lambda_.13} parent=1 // pred_check_branch
      %53 = sbr.rel (0) target = $region25
    $region24: #{_lambda_.13} parent=1 // pred_region
      _
    $region25: #{_lambda_.13} parent=1 // pred_fallthru
      _
    // Predicated region
    $region26: #{_lambda_.13} parent=1 // pred_check
      _
    $region27: #{_lambda_.13} parent=1 // pred_check_branch
      %55 = sbr.rel (0) target = $region29
    $region28: #{_lambda_.13} parent=1 // pred_region
      _
    $region29: #{_lambda_.13} parent=1 // pred_fallthru
      _
    // Predicated region
    $region30: #{_lambda_.13} parent=1 // pred_check
      _
    $region31: #{_lambda_.13} parent=1 // pred_check_branch
      %57 = sbr.rel (0) target = $region33
    $region32: #{_lambda_.13} parent=1 // pred_region
      _
    $region33: #{_lambda_.13} parent=1 // pred_fallthru
      _
    // Predicated region
    $region34: #{_lambda_.13} parent=1 // pred_check
      _
    $region35: #{_lambda_.13} parent=1 // pred_check_branch
      %59 = sbr.rel (0) target = $region37
    $region36: #{_lambda_.13} parent=1 // pred_region
      _
    $region37: #{_lambda_.13} parent=1 // pred_fallthru
      _
    // Predicated region
    $region38: #{_lambda_.13} parent=1 // pred_check
      _
    $region39: #{_lambda_.13} parent=1 // pred_check_branch
      %61 = sbr.rel (0) target = $region41
    $region40: #{_lambda_.13} parent=1 // pred_region
      _
    $region41: #{_lambda_.13} parent=1 // pred_fallthru
      _
    // Predicated region
    $region42: #{_lambda_.13} parent=1 // pred_check
      _
    $region43: #{_lambda_.13} parent=1 // pred_check_branch
      %63 = sbr.rel (0) target = $region45
    $region44: #{_lambda_.13} parent=1 // pred_region
      %65 = dma.done [#allocation3], 512
    $region45: #{_lambda_.13} parent=1 // pred_fallthru
      _
    // Predicated region
    $region46: #{_lambda_.13} parent=1 // pred_check
      _
    $region47: #{_lambda_.13} parent=1 // pred_check_branch
      %67 = sbr.rel (0) target = $region49
    $region48: #{_lambda_.13} parent=1 // pred_region
      %69 = dma.done [#allocation5], 512
    $region49: #{_lambda_.13} parent=1 // pred_fallthru
      _
    %v71 = vld [vmem:[%s0] sm:$0xff]
    %v72 = vld [vmem:[%s0 + $0x8] sm:$0xff]
    %v73 = vmul.f32 %v71, %v71
    %v74 = vmul.f32 %v72, %v72
    %vm75 = vcmask 523264
    %v76 = vsel %vm75, %v73, 0.0
    %77 = vadd.xlane.f32.xlu0 %v76
    %v78 = vpop.xlane.xlu0 %77
    %v79 = vsel %vm75, %v74, 0.0
    %80 = vadd.xlane.f32.xlu0 %v79
    %v81 = vpop.xlane.xlu0 %80
    %v82 = vrcp.pop 64.0
    %v83 = vmul.f32 64.0, %v82
    %v84 = vsub.f32 1.0, %v83
    %v85 = vmul.f32 %v82, %v84
    %v86 = vadd.f32 %v82, %v85
    %vm87 = vweird.f32 %v82
    %v88 = vsel %vm87, %v82, %v86
    %v89 = vmul.f32 %v78, %v88
    %v90 = vmul.f32 %v81, %v88
    %v91 = vadd.f32 %v89, 1e-08
    %v92 = vadd.f32 %v90, 1e-08
    %v93 = vrsqrt.pop %v91
    %v94 = vmul.f32 %v93, %v91
    %v95 = vmul.f32 %v94, %v93
    %v96 = vmul.f32 0.5, %v95
    %v97 = vsub.f32 1.5, %v96
    %v98 = vmul.f32 %v93, %v97
    %vm99 = vweird.f32 %v91
    %vm100 = vweird.f32 %v93
    %vm101 = vmor %vm99, %vm100
    %v102 = vsel %vm101, %v93, %v98
    %v103 = vrsqrt.pop %v92
    %v104 = vmul.f32 %v103, %v92
    %v105 = vmul.f32 %v104, %v103
    %v106 = vmul.f32 0.5, %v105
    %v107 = vsub.f32 1.5, %v106
    %v108 = vmul.f32 %v103, %v107
    %vm109 = vweird.f32 %v92
    %vm110 = vweird.f32 %v103
    %vm111 = vmor %vm109, %vm110
    %v112 = vsel %vm111, %v103, %v108
    %v113 = vmul.f32 %v71, %v102
    %v114 = vmul.f32 %v72, %v112
    %v115 = vld [vmem:[%s1] sm:$0x1]
    %v117 = vperm.slane %v115, 0
    %v119 = vmul.f32 %v113, %v117
    %v120 = vmul.f32 %v114, %v117
    %v121 = vpack.c.bf16 %v120, %v119
    %v122 = vld [vmem:[%s2] sm:$0xf]
    %v123 = vld [vmem:[%s2 + $0x4] sm:$0xf]
    %v124 = vld [vmem:[%s2 + $0x8] sm:$0xf]
    %v125 = vld [vmem:[%s2 + $0xc] sm:$0xf]
    %v126 = vld [vmem:[%s2 + $0x10] sm:$0xf]
    %v127 = vld [vmem:[%s2 + $0x14] sm:$0xf]
    %v128 = vld [vmem:[%s2 + $0x18] sm:$0xf]
    %v129 = vld [vmem:[%s2 + $0x1c] sm:$0xf]
    %v130 = vld [vmem:[%s5] sm:$0x1]
    %v132 = vperm.slane %v130, 0
    %v142 = vunpack.c.l.b16 %v122
    %v143 = vunpack.c.l.b16 %v123
    %v144 = vunpack.c.l.b16 %v124
    %v145 = vunpack.c.l.b16 %v125
    %v146 = vunpack.c.l.b16 %v126
    %v147 = vunpack.c.l.b16 %v127
    %v148 = vunpack.c.l.b16 %v128
    %v149 = vunpack.c.l.b16 %v129
    %v150 = vpack.c.b16 %v143, %v142
    %v151 = vpack.c.b16 %v145, %v144
    %v152 = vpack.c.b16 %v147, %v146
    %v153 = vpack.c.b16 %v149, %v148
    %v159 = vsel %vm75, %v121, 0
    %161 = vmatpush.bf16.msra.mxu0 0
    %162 = vmatpush.bf16.msra.mxu0 0
    %163 = vmatpush.bf16.msra.mxu0 0
    %164 = vmatpush.bf16.msra.mxu0 0
    %165 = vmatpush.bf16.msra.mxu0 %v153
    %166 = vmatpush.bf16.msra.mxu0 %v152
    %167 = vmatpush.bf16.msra.mxu0 %v151
    %168 = vmatpush.bf16.msra.mxu0 %v150
    %169 = vmatmul.bf16.gmra.mxu0 %v159
    %v170 = vpop.f32.mrf.mxu0
    %v171 = vadd.f32 %v132, %v170
    %v172 = vpop.f32.mrf.mxu0
    %v173 = vadd.f32 %v132, %v172
    %174 = vdwg.mxu0
    %v175 = vld [vmem:[#allocation2] sm:$0xf]
    %v176 = vld [vmem:[#allocation2 + $0x4] sm:$0xf]
    %v177 = vld [vmem:[#allocation2 + $0x8] sm:$0xf]
    %v178 = vld [vmem:[#allocation2 + $0xc] sm:$0xf]
    %v179 = vld [vmem:[#allocation2 + $0x10] sm:$0xf]
    %v180 = vld [vmem:[#allocation2 + $0x14] sm:$0xf]
    %v181 = vld [vmem:[#allocation2 + $0x18] sm:$0xf]
    %v182 = vld [vmem:[#allocation2 + $0x1c] sm:$0xf]
    %v183 = vld [vmem:[%s6] sm:$0x1]
    %v185 = vperm.slane %v183, 0
    %v195 = vunpack.c.l.b16 %v175
    %v196 = vunpack.c.l.b16 %v176
    %v197 = vunpack.c.l.b16 %v177
    %v198 = vunpack.c.l.b16 %v178
    %v199 = vunpack.c.l.b16 %v179
    %v200 = vunpack.c.l.b16 %v180
    %v201 = vunpack.c.l.b16 %v181
    %v202 = vunpack.c.l.b16 %v182
    %v203 = vpack.c.b16 %v196, %v195
    %v204 = vpack.c.b16 %v198, %v197
    %v205 = vpack.c.b16 %v200, %v199
    %v206 = vpack.c.b16 %v202, %v201
    %211 = vmatpush.bf16.msra.mxu0 0
    %212 = vmatpush.bf16.msra.mxu0 0
    %213 = vmatpush.bf16.msra.mxu0 0
    %214 = vmatpush.bf16.msra.mxu0 0
    %215 = vmatpush.bf16.msra.mxu0 %v206
    %216 = vmatpush.bf16.msra.mxu0 %v205
    %217 = vmatpush.bf16.msra.mxu0 %v204
    %218 = vmatpush.bf16.msra.mxu0 %v203
    %219 = vmatmul.bf16.gmra.mxu0 %v159
    %v220 = vpop.f32.mrf.mxu0
    %v221 = vadd.f32 %v185, %v220
    %v222 = vpop.f32.mrf.mxu0
    %v223 = vadd.f32 %v185, %v222
    %224 = vdwg.mxu0
    %v225 = vld [vmem:[#allocation4] sm:$0xf]
    %v226 = vld [vmem:[#allocation4 + $0x4] sm:$0xf]
    %v227 = vld [vmem:[#allocation4 + $0x8] sm:$0xf]
    %v228 = vld [vmem:[#allocation4 + $0xc] sm:$0xf]
    %v229 = vld [vmem:[#allocation4 + $0x10] sm:$0xf]
    %v230 = vld [vmem:[#allocation4 + $0x14] sm:$0xf]
    %v231 = vld [vmem:[#allocation4 + $0x18] sm:$0xf]
    %v232 = vld [vmem:[#allocation4 + $0x1c] sm:$0xf]
    %v233 = vld [vmem:[%s7] sm:$0x1]
    %v235 = vperm.slane %v233, 0
    %v245 = vunpack.c.l.b16 %v225
    %v246 = vunpack.c.l.b16 %v226
    %v247 = vunpack.c.l.b16 %v227
    %v248 = vunpack.c.l.b16 %v228
    %v249 = vunpack.c.l.b16 %v229
    %v250 = vunpack.c.l.b16 %v230
    %v251 = vunpack.c.l.b16 %v231
    %v252 = vunpack.c.l.b16 %v232
    %v253 = vpack.c.b16 %v246, %v245
    %v254 = vpack.c.b16 %v248, %v247
    %v255 = vpack.c.b16 %v250, %v249
    %v256 = vpack.c.b16 %v252, %v251
    %261 = vmatpush.bf16.msra.mxu0 0
    %262 = vmatpush.bf16.msra.mxu0 0
    %263 = vmatpush.bf16.msra.mxu0 0
    %264 = vmatpush.bf16.msra.mxu0 0
    %265 = vmatpush.bf16.msra.mxu0 %v256
    %266 = vmatpush.bf16.msra.mxu0 %v255
    %267 = vmatpush.bf16.msra.mxu0 %v254
    %268 = vmatpush.bf16.msra.mxu0 %v253
    %269 = vmatmul.bf16.gmra.mxu0 %v159
    %v270 = vpop.f32.mrf.mxu0
    %v271 = vadd.f32 %v235, %v270
    %v272 = vpop.f32.mrf.mxu0
    %v273 = vadd.f32 %v235, %v272
    %274 = vdwg.mxu0
    %v275 = vld [vmem:[%s8] sm:$0xff]
    %v276 = vld [vmem:[%s8 + $0x8] sm:$0xff]
    %v277 = vld [vmem:[%s9] sm:$0xff]
    %v278 = vld [vmem:[%s9 + $0x8] sm:$0xff]
    %281 = vrot.lane.b32.xlu0 %v171, 120
    %v282 = vpop.permute.xlu0 %281
    %283 = vrot.lane.b32.xlu0 %v173, 120
    %v284 = vpop.permute.xlu0 %283
    %287 = vrot.lane.b32.xlu0 %v171, 8
    %v288 = vpop.permute.xlu0 %287
    %289 = vrot.lane.b32.xlu0 %v173, 8
    %v290 = vpop.permute.xlu0 %289
    %vm293 = vcmask 64512
    %v294 = vsel %vm293, %v282, %v288
    %v295 = vsel %vm293, %v284, %v290
    %298 = vrot.lane.b32.xlu0 %v221, 120
    %v299 = vpop.permute.xlu0 %298
    %300 = vrot.lane.b32.xlu0 %v223, 120
    %v301 = vpop.permute.xlu0 %300
    %304 = vrot.lane.b32.xlu0 %v221, 8
    %v305 = vpop.permute.xlu0 %304
    %306 = vrot.lane.b32.xlu0 %v223, 8
    %v307 = vpop.permute.xlu0 %306
    %v310 = vsel %vm293, %v299, %v305
    %v311 = vsel %vm293, %v301, %v307
    %v312 = vmul.f32 %v171, %v275
    %v313 = vmul.f32 %v173, %v276
    %v314 = vmul.f32 %v294, %v277
    %v315 = vmul.f32 %v295, %v278
    %v316 = vadd.f32 %v312, %v314
    %v317 = vadd.f32 %v313, %v315
    %v318 = vmul.f32 %v221, %v275
    %v319 = vmul.f32 %v223, %v276
    %v320 = vmul.f32 %v310, %v277
    %v321 = vmul.f32 %v311, %v278
    %v322 = vadd.f32 %v318, %v320
    %v323 = vadd.f32 %v319, %v321
    %324 = vrot.lane.b32.xlu0 %v171, 104
    %v325 = vpop.permute.xlu0 %324
    %326 = vrot.lane.b32.xlu0 %v173, 104
    %v327 = vpop.permute.xlu0 %326
    %v330 = vsel %vm293, %v325, %v282
    %v331 = vsel %vm293, %v327, %v284
    %332 = vrot.lane.b32.xlu0 %v221, 104
    %v333 = vpop.permute.xlu0 %332
    %334 = vrot.lane.b32.xlu0 %v223, 104
    %v335 = vpop.permute.xlu0 %334
    %v338 = vsel %vm293, %v333, %v299
    %v339 = vsel %vm293, %v335, %v301
    %342 = vrot.lane.b32.xlu0 %v275, 16
    %v343 = vpop.permute.xlu0 %342
    %344 = vrot.lane.b32.xlu0 %v276, 16
    %v345 = vpop.permute.xlu0 %344
    %v348 = vmul.f32 %v171, %v343
    %v349 = vmul.f32 %v173, %v345
    %v350 = vmul.f32 %v330, %v277
    %v351 = vmul.f32 %v331, %v278
    %354 = vrot.lane.b32.xlu0 %v350, 16
    %v355 = vpop.permute.xlu0 %354
    %356 = vrot.lane.b32.xlu0 %v351, 16
    %v357 = vpop.permute.xlu0 %356
    %v360 = vadd.f32 %v348, %v355
    %v361 = vadd.f32 %v349, %v357
    %v362 = vmul.f32 %v221, %v343
    %v363 = vmul.f32 %v223, %v345
    %v364 = vmul.f32 %v338, %v277
    %v365 = vmul.f32 %v339, %v278
    %368 = vrot.lane.b32.xlu0 %v364, 16
    %v369 = vpop.permute.xlu0 %368
    %370 = vrot.lane.b32.xlu0 %v365, 16
    %v371 = vpop.permute.xlu0 %370
    %v374 = vadd.f32 %v362, %v369
    %v375 = vadd.f32 %v363, %v371
    %376 = vrot.lane.b32.xlu0 %v171, 88
    %v377 = vpop.permute.xlu0 %376
    %378 = vrot.lane.b32.xlu0 %v173, 88
    %v379 = vpop.permute.xlu0 %378
    %v382 = vsel %vm293, %v377, %v325
    %v383 = vsel %vm293, %v379, %v327
    %384 = vrot.lane.b32.xlu0 %v221, 88
    %v385 = vpop.permute.xlu0 %384
    %386 = vrot.lane.b32.xlu0 %v223, 88
    %v387 = vpop.permute.xlu0 %386
    %v390 = vsel %vm293, %v385, %v333
    %v391 = vsel %vm293, %v387, %v335
    %392 = vrot.lane.b32.xlu0 %v275, 32
    %v393 = vpop.permute.xlu0 %392
    %394 = vrot.lane.b32.xlu0 %v276, 32
    %v395 = vpop.permute.xlu0 %394
    %v398 = vmul.f32 %v171, %v393
    %v399 = vmul.f32 %v173, %v395
    %v400 = vmul.f32 %v382, %v277
    %v401 = vmul.f32 %v383, %v278
    %404 = vrot.lane.b32.xlu0 %v400, 32
    %v405 = vpop.permute.xlu0 %404
    %406 = vrot.lane.b32.xlu0 %v401, 32
    %v407 = vpop.permute.xlu0 %406
    %v410 = vadd.f32 %v398, %v405
    %v411 = vadd.f32 %v399, %v407
    %v412 = vmul.f32 %v221, %v393
    %v413 = vmul.f32 %v223, %v395
    %v414 = vmul.f32 %v390, %v277
    %v415 = vmul.f32 %v391, %v278
    %418 = vrot.lane.b32.xlu0 %v414, 32
    %v419 = vpop.permute.xlu0 %418
    %420 = vrot.lane.b32.xlu0 %v415, 32
    %v421 = vpop.permute.xlu0 %420
    %v424 = vadd.f32 %v412, %v419
    %v425 = vadd.f32 %v413, %v421
    %426 = vrot.lane.b32.xlu0 %v171, 72
    %v427 = vpop.permute.xlu0 %426
    %428 = vrot.lane.b32.xlu0 %v173, 72
    %v429 = vpop.permute.xlu0 %428
    %v432 = vsel %vm293, %v427, %v377
    %v433 = vsel %vm293, %v429, %v379
    %434 = vrot.lane.b32.xlu0 %v221, 72
    %v435 = vpop.permute.xlu0 %434
    %436 = vrot.lane.b32.xlu0 %v223, 72
    %v437 = vpop.permute.xlu0 %436
    %v440 = vsel %vm293, %v435, %v385
    %v441 = vsel %vm293, %v437, %v387
    %442 = vrot.lane.b32.xlu0 %v275, 48
    %v443 = vpop.permute.xlu0 %442
    %444 = vrot.lane.b32.xlu0 %v276, 48
    %v445 = vpop.permute.xlu0 %444
    %v448 = vmul.f32 %v171, %v443
    %v449 = vmul.f32 %v173, %v445
    %v450 = vmul.f32 %v432, %v277
    %v451 = vmul.f32 %v433, %v278
    %454 = vrot.lane.b32.xlu0 %v450, 48
    %v455 = vpop.permute.xlu0 %454
    %456 = vrot.lane.b32.xlu0 %v451, 48
    %v457 = vpop.permute.xlu0 %456
    %v460 = vadd.f32 %v448, %v455
    %v461 = vadd.f32 %v449, %v457
    %v462 = vmul.f32 %v221, %v443
    %v463 = vmul.f32 %v223, %v445
    %v464 = vmul.f32 %v440, %v277
    %v465 = vmul.f32 %v441, %v278
    %468 = vrot.lane.b32.xlu0 %v464, 48
    %v469 = vpop.permute.xlu0 %468
    %470 = vrot.lane.b32.xlu0 %v465, 48
    %v471 = vpop.permute.xlu0 %470
    %v474 = vadd.f32 %v462, %v469
    %v475 = vadd.f32 %v463, %v471
    %vm476 = vcmask 130048
    %v477 = vsel %vm476, %v316, %v360
    %v478 = vsel %vm476, %v317, %v361
    %vm479 = vcmask 261120
    %v480 = vsel %vm479, %v477, %v410
    %v481 = vsel %vm479, %v478, %v411
    %vm482 = vcmask 392192
    %v483 = vsel %vm482, %v480, %v460
    %v484 = vsel %vm482, %v481, %v461
    %v485 = vmul.f32 %v483, 0.25
    %v486 = vmul.f32 %v484, 0.25
    %v487 = vpack.c.bf16 %v485, %v485
    %v488 = vpack.c.bf16 %v486, %v486
    %vm489 = vcmask 519168
    %490 = vst.msk [vmem:[%s10] sm:$0xf] %vm489, %v487
    %491 = vst.msk [vmem:[%s10 + $0x4] sm:$0xf] %vm489, %v488
    %v492 = vsel %vm476, %v322, %v374
    %v493 = vsel %vm476, %v323, %v375
    %v494 = vsel %vm479, %v492, %v424
    %v495 = vsel %vm479, %v493, %v425
    %v496 = vsel %vm482, %v494, %v474
    %v497 = vsel %vm482, %v495, %v475
    %v498 = vpack.c.bf16 %v496, %v496
    %v499 = vpack.c.bf16 %v497, %v497
    %500 = vst.msk [vmem:[%s11] sm:$0xf] %vm489, %v498
    %501 = vst.msk [vmem:[%s11 + $0x4] sm:$0xf] %vm489, %v499
    %v502 = vpack.c.bf16 %v271, %v271
    %v503 = vpack.c.bf16 %v273, %v273
    %504 = vst.msk [vmem:[%s12] sm:$0xf] %vm489, %v502
    %505 = vst.msk [vmem:[%s12 + $0x4] sm:$0xf] %vm489, %v503
    // Predicated region
    $region50: #{_lambda_.13} parent=1 // pred_check
      _
    $region51: #{_lambda_.13} parent=1 // pred_check_branch
      %507 = sbr.rel (0) target = $region53
    $region52: #{_lambda_.13} parent=1 // pred_region
      _
    $region53: #{_lambda_.13} parent=1 // pred_fallthru
      _
    // Predicated region
    $region54: #{_lambda_.13} parent=1 // pred_check
      _
    $region55: #{_lambda_.13} parent=1 // pred_check_branch
      %509 = sbr.rel (0) target = $region57
    $region56: #{_lambda_.13} parent=1 // pred_region
      _
    $region57: #{_lambda_.13} parent=1 // pred_fallthru
      _
    // Predicated region
    $region58: #{_lambda_.13} parent=1 // pred_check
      _
    $region59: #{_lambda_.13} parent=1 // pred_check_branch
      %511 = sbr.rel (0) target = $region61
    $region60: #{_lambda_.13} parent=1 // pred_region
      _
    $region61: #{_lambda_.13} parent=1 // pred_fallthru
      _
    // Predicated region
    $region62: #{_lambda_.13} parent=1 // pred_check
      _
    $region63: #{_lambda_.13} parent=1 // pred_check_branch
      %513 = sbr.rel (0) target = $region65
    $region64: #{_lambda_.13} parent=1 // pred_region
      _
    $region65: #{_lambda_.13} parent=1 // pred_fallthru
      _
    // Predicated region
    $region66: #{_lambda_.13} parent=1 // pred_check
      _
    $region67: #{_lambda_.13} parent=1 // pred_check_branch
      %515 = sbr.rel (0) target = $region69
    $region68: #{_lambda_.13} parent=1 // pred_region
      _
    $region69: #{_lambda_.13} parent=1 // pred_fallthru
      _
    // Predicated region
    $region70: #{_lambda_.13} parent=1 // pred_check
      _
    $region71: #{_lambda_.13} parent=1 // pred_check_branch
      %517 = sbr.rel (0) target = $region73
    $region72: #{_lambda_.13} parent=1 // pred_region
      _
    $region73: #{_lambda_.13} parent=1 // pred_fallthru
      _
    %518 = vsyncpa [#allocation3], 1
    %519 = vsyncpa [#allocation5], 1

// kernel: _lambda_.17
$region0: #{_lambda_.17}
  #allocation0 [shape = 'u32[]', space=smem, size = 0x4, offset = 0x4, fixed_abs, tag = 'smem constant byte address 0x4 - core index']
  #allocation1 [shape = 'u32[72,128]{1,0:T(1,128)}', space=vmem, size = 0x9000, scoped, tag = 'internal scratch']
  #allocation2 [shape = 'bf16[16,64]{1,0:T(8,128)(2,1)}', space=vmem, size = 0x1000, scoped, tag = 'scratch operand']
  %s0 = inlined_call_operand.vmem [shape: f32[16,64], index: 0, kind: input, shape index: {}]
  %s1 = inlined_call_operand.vmem [shape: f32[1,64], index: 1, kind: input, shape index: {}]
  %s2 = inlined_call_operand.vmem [shape: bf16[128,64], index: 2, kind: input, shape index: {}]
  %s3 = inlined_call_operand.hbm [shape: bf16[16,128], index: 3, kind: output, shape index: {}]
  %s4 = sld [smem:[#allocation0]]
  $region26: #{_lambda_.17} parent=0
    _
  %s6 = ssub.s32 1, %s4
  %s7 = scalar_select 0, %s6, %s4
  $region1: #{_lambda_.17} parent=0
    #allocation3 [shape = 'u8[4096]{0}', space=vmem, size = 0x1000, scoped, tag = 'output window, operand 0, single buffered']
    #allocation4 [shape = 's32[1]{0}', space=sflag, size = 0x4, scoped, tag = 'scoped memory for _lambda_.17']
    %8 = vsyncpa [#allocation4], 0
    // Predicated region
    $region2: #{_lambda_.17} parent=1 // pred_check
      _
    $region3: #{_lambda_.17} parent=1 // pred_check_branch
      %10 = sbr.rel (0) target = $region5
    $region4: #{_lambda_.17} parent=1 // pred_region
      _
    $region5: #{_lambda_.17} parent=1 // pred_fallthru
      _
    // Predicated region
    $region6: #{_lambda_.17} parent=1 // pred_check
      _
    $region7: #{_lambda_.17} parent=1 // pred_check_branch
      %12 = sbr.rel (0) target = $region9
    $region8: #{_lambda_.17} parent=1 // pred_region
      _
    $region9: #{_lambda_.17} parent=1 // pred_fallthru
      _
    // Predicated region
    $region10: #{_lambda_.17} parent=1 // pred_check
      _
    $region11: #{_lambda_.17} parent=1 // pred_check_branch
      %14 = sbr.rel (0) target = $region13
    $region12: #{_lambda_.17} parent=1 // pred_region
      _
    $region13: #{_lambda_.17} parent=1 // pred_fallthru
      _
    %p15 = scmp.eq.s32.totalorder 0, 0
    // Predicated region
    $region14: #{_lambda_.17} parent=1 // pred_check
      %p16 = pneg %p15
    $region15: #{_lambda_.17} parent=1 // pred_check_branch
      %18 = sbr.rel (%p16) target = $region17
    $region16: #{_lambda_.17} parent=1 // pred_region
      %v19 = vld [vmem:[%s0] sm:$0xff]
      %v20 = vld [vmem:[%s0 + $0x8] sm:$0xff]
      %v21 = vmul.f32 %v19, %v19
      %v22 = vmul.f32 %v20, %v20
      %vm23 = vcmask 523264
      %v24 = vsel %vm23, %v21, 0.0
      %25 = vadd.xlane.f32.xlu0 %v24
      %v26 = vpop.xlane.xlu0 %25
      %v27 = vsel %vm23, %v22, 0.0
      %28 = vadd.xlane.f32.xlu0 %v27
      %v29 = vpop.xlane.xlu0 %28
      %v30 = vrcp.pop 64.0
      %v31 = vmul.f32 64.0, %v30
      %v32 = vsub.f32 1.0, %v31
      %v33 = vmul.f32 %v30, %v32
      %v34 = vadd.f32 %v30, %v33
      %vm35 = vweird.f32 %v30
      %v36 = vsel %vm35, %v30, %v34
      %v37 = vmul.f32 %v26, %v36
      %v38 = vmul.f32 %v29, %v36
      %v39 = vadd.f32 %v37, 1e-08
      %v40 = vadd.f32 %v38, 1e-08
      %v41 = vrsqrt.pop %v39
      %v42 = vmul.f32 %v41, %v39
      %v43 = vmul.f32 %v42, %v41
      %v44 = vmul.f32 0.5, %v43
      %v45 = vsub.f32 1.5, %v44
      %v46 = vmul.f32 %v41, %v45
      %vm47 = vweird.f32 %v39
      %vm48 = vweird.f32 %v41
      %vm49 = vmor %vm47, %vm48
      %v50 = vsel %vm49, %v41, %v46
      %v51 = vrsqrt.pop %v40
      %v52 = vmul.f32 %v51, %v40
      %v53 = vmul.f32 %v52, %v51
      %v54 = vmul.f32 0.5, %v53
      %v55 = vsub.f32 1.5, %v54
      %v56 = vmul.f32 %v51, %v55
      %vm57 = vweird.f32 %v40
      %vm58 = vweird.f32 %v51
      %vm59 = vmor %vm57, %vm58
      %v60 = vsel %vm59, %v51, %v56
      %v61 = vmul.f32 %v19, %v50
      %v62 = vmul.f32 %v20, %v60
      %v63 = vld [vmem:[%s1] sm:$0x1]
      %v65 = vperm.slane %v63, 0
      %v67 = vmul.f32 %v61, %v65
      %v68 = vmul.f32 %v62, %v65
      %v69 = vpack.c.bf16 %v67, %v67
      %v70 = vpack.c.bf16 %v68, %v68
      %vm71 = vcmask 519168
      %72 = vst.msk [vmem:[#allocation2] sm:$0xf] %vm71, %v69
      %73 = vst.msk [vmem:[#allocation2 + $0x4] sm:$0xf] %vm71, %v70
    $region17: #{_lambda_.17} parent=1 // pred_fallthru
      _
    %v74 = vld [vmem:[#allocation2] sm:$0xf]
    %v75 = vld [vmem:[#allocation2 + $0x4] sm:$0xf]
    %v76 = vld [vmem:[%s2] sm:$0xf]
    %v77 = vld [vmem:[%s2 + $0x4] sm:$0xf]
    %v78 = vld [vmem:[%s2 + $0x8] sm:$0xf]
    %v79 = vld [vmem:[%s2 + $0xc] sm:$0xf]
    %v80 = vld [vmem:[%s2 + $0x10] sm:$0xf]
    %v81 = vld [vmem:[%s2 + $0x14] sm:$0xf]
    %v82 = vld [vmem:[%s2 + $0x18] sm:$0xf]
    %v83 = vld [vmem:[%s2 + $0x1c] sm:$0xf]
    %v84 = vld [vmem:[%s2 + $0x20] sm:$0xf]
    %v85 = vld [vmem:[%s2 + $0x24] sm:$0xf]
    %v86 = vld [vmem:[%s2 + $0x28] sm:$0xf]
    %v87 = vld [vmem:[%s2 + $0x2c] sm:$0xf]
    %v88 = vld [vmem:[%s2 + $0x30] sm:$0xf]
    %v89 = vld [vmem:[%s2 + $0x34] sm:$0xf]
    %v90 = vld [vmem:[%s2 + $0x38] sm:$0xf]
    %v91 = vld [vmem:[%s2 + $0x3c] sm:$0xf]
    %v94 = vunpack.c.l.b16 %v74
    %v95 = vunpack.c.l.b16 %v75
    %v96 = vpack.c.b16 %v95, %v94
    %v113 = vunpack.c.l.b16 %v76
    %v114 = vunpack.c.l.b16 %v77
    %v115 = vunpack.c.l.b16 %v78
    %v116 = vunpack.c.l.b16 %v79
    %v117 = vunpack.c.l.b16 %v80
    %v118 = vunpack.c.l.b16 %v81
    %v119 = vunpack.c.l.b16 %v82
    %v120 = vunpack.c.l.b16 %v83
    %v121 = vunpack.c.l.b16 %v84
    %v122 = vunpack.c.l.b16 %v85
    %v123 = vunpack.c.l.b16 %v86
    %v124 = vunpack.c.l.b16 %v87
    %v125 = vunpack.c.l.b16 %v88
    %v126 = vunpack.c.l.b16 %v89
    %v127 = vunpack.c.l.b16 %v90
    %v128 = vunpack.c.l.b16 %v91
    %v129 = vpack.c.b16 %v114, %v113
    %v130 = vpack.c.b16 %v116, %v115
    %v131 = vpack.c.b16 %v118, %v117
    %v132 = vpack.c.b16 %v120, %v119
    %v133 = vpack.c.b16 %v122, %v121
    %v134 = vpack.c.b16 %v124, %v123
    %v135 = vpack.c.b16 %v126, %v125
    %v136 = vpack.c.b16 %v128, %v127
    %vm137 = vcmask 523264
    %v139 = vsel %vm137, %v96, 0
    %v142 = vsel %vm137, %v129, 0
    %v145 = vsel %vm137, %v130, 0
    %v148 = vsel %vm137, %v131, 0
    %v151 = vsel %vm137, %v132, 0
    %v154 = vsel %vm137, %v133, 0
    %v157 = vsel %vm137, %v134, 0
    %v160 = vsel %vm137, %v135, 0
    %v163 = vsel %vm137, %v136, 0
    %165 = vmatpush.bf16.xpose.msra.mxu0 %v163
    %166 = vmatpush.bf16.xpose.msra.mxu0 %v160
    %167 = vmatpush.bf16.xpose.msra.mxu0 %v157
    %168 = vmatpush.bf16.xpose.msra.mxu0 %v154
    %169 = vmatpush.bf16.xpose.msra.mxu0 %v151
    %170 = vmatpush.bf16.xpose.msra.mxu0 %v148
    %171 = vmatpush.bf16.xpose.msra.mxu0 %v145
    %172 = vmatpush.bf16.xpose.msra.mxu0 %v142
    %173 = vmatmul.bf16.gmra.mxu0 %v139
    %v174 = vpop.f32.mrf.mxu0
    %v175 = vadd.f32 0.0, %v174
    %v176 = vpop.f32.mrf.mxu0
    %v177 = vadd.f32 0.0, %v176
    %178 = vdwg.mxu0
    %v179 = vpack.c.bf16 %v175, %v175
    %v180 = vpack.c.bf16 %v177, %v177
    %181 = vst [vmem:[#allocation3] sm:$0xf] %v179
    %182 = vst [vmem:[#allocation3 + $0x4] sm:$0xf] %v180
    // Predicated region
    $region18: #{_lambda_.17} parent=1 // pred_check
      _
    $region19: #{_lambda_.17} parent=1 // pred_check_branch
      %184 = sbr.rel (0) target = $region21
    $region20: #{_lambda_.17} parent=1 // pred_region
      %186 = vsyncadd [#allocation4], 0
      %s187 = sshll.u32 [#allocation3], 4
      %s188 = int_to_ptr.vmem [resolvable:$true] %s187
      %s189 = sshll.u32 %s3, 4
      %s190 = int_to_ptr.hbm [resolvable:$true] %s189
      %195 = dma.vmem_to_hbm [thread:$0]  %s188, 128, %s190, [#allocation4], 64, 64, 4
    $region21: #{_lambda_.17} parent=1 // pred_fallthru
      _
    // Predicated region
    $region22: #{_lambda_.17} parent=1 // pred_check
      _
    $region23: #{_lambda_.17} parent=1 // pred_check_branch
      %197 = sbr.rel (0) target = $region25
    $region24: #{_lambda_.17} parent=1 // pred_region
      %199 = dma.done [#allocation4], 128
    $region25: #{_lambda_.17} parent=1 // pred_fallthru
      _
    %200 = vsyncpa [#allocation4], 1

</llo_original>
